<compile_context>
chip_gen: v7x
topology: tpu7x:2x2x1
jax: 0.10.0
libtpu: 0.0.40
codegen_flags: <defaults>
</compile_context>

<pallas_src>
from functools import partial

import jax
import jax.numpy as jnp
from jax.experimental import pallas as pl
from jax.experimental.pallas import tpu as pltpu  # noqa: F401  (TPU backend)

# ----------------------------- configuration --------------------------------
IN_CHANNELS = 4
PATCH_SIZE = (4, 4)
IMG_SIZE = (16, 16)
DEPTH = 2
HIDDEN = 32
FFN_HIDDEN = 64
NUM_HEADS = 4
NUM_REGISTER_TOKENS = 0                                   # config default
SEQ_LEN = (IMG_SIZE[0] // PATCH_SIZE[0]) * (IMG_SIZE[1] // PATCH_SIZE[1])  # 16
EPS = float(jnp.finfo(jnp.float32).eps)                   # nn.RMSNorm default


# ------------------------------ kernel helpers -------------------------------
def _rmsnorm(x, w, eps):
    # x: (N, D) f32, w: (1, D)
    ms = jnp.mean(x * x, axis=-1, keepdims=True)
    return x * jax.lax.rsqrt(ms + eps) * w


# ------------------------------- fused kernel --------------------------------
def vit_fused_kernel(patches_ref, pw_ref, posb_ref, amask_ref,
                     wqkv_ref, bqkv_ref, wo_ref, bo_ref,
                     w1_ref, b1_ref, w2_ref, b2_ref,
                     n1_ref, n2_ref, onw_ref, o_ref,
                     *, depth, num_heads, eps):
    # ---- patch-embed stem: per-patch linear + (bias + positional encoding) ---
    x = jnp.dot(patches_ref[...].astype(jnp.float32), pw_ref[...],
                preferred_element_type=jnp.float32)
    x = x + posb_ref[...]                                  # (N, D)
    N, D = x.shape
    dh = D // num_heads
    amask = amask_ref[...]                                 # (N, N) block-diag

    for layer in range(depth):     # static unroll; weights resident in VMEM
        n1 = n1_ref[layer]
        n2 = n2_ref[layer]
        wqkv = wqkv_ref[layer]
        bqkv = bqkv_ref[layer]
        wo = wo_ref[layer]
        bo = bo_ref[layer]
        w1 = w1_ref[layer]
        b1 = b1_ref[layer]
        w2 = w2_ref[layer]
        b2 = b2_ref[layer]

        # ---- self-attention (pre-norm) ----
        h = _rmsnorm(x, n1, eps)
        qkv = jnp.dot(h, wqkv, preferred_element_type=jnp.float32) + bqkv
        q = qkv[:, 0 * D:1 * D]   # 1/sqrt(dh) already folded into wqkv/bqkv
        k = qkv[:, 1 * D:2 * D]
        v = qkv[:, 2 * D:3 * D]

        attn = jnp.zeros((N, D), jnp.float32)
        for hd in range(num_heads):   # accumulate output projection per head
            sl = slice(hd * dh, (hd + 1) * dh)
            s = jax.lax.dot_general(q[:, sl], k[:, sl],
                                    (((1,), (1,)), ((), ())),
                                    preferred_element_type=jnp.float32)
            s = s + amask             # no cross-batch attention
            s = s - jnp.max(s, axis=-1, keepdims=True)
            p = jnp.exp(s)
            p = p * pl.reciprocal(jnp.sum(p, axis=-1, keepdims=True),
                                  approx=True)
            o_h = jnp.dot(p, v[:, sl], preferred_element_type=jnp.float32)
            attn = attn + jnp.dot(o_h, wo[sl, :],
                                  preferred_element_type=jnp.float32)
        x = x + attn + bo

        # ---- MLP (pre-norm, squared-ReLU) ----
        h = _rmsnorm(x, n2, eps)
        h1 = jnp.dot(h, w1, preferred_element_type=jnp.float32) + b1
        h1 = jnp.maximum(h1, 0.0)
        h1 = h1 * h1                                      # srelu = relu(x)^2
        x = x + jnp.dot(h1, w2, preferred_element_type=jnp.float32) + b2

    # ---- output RMSNorm ----
    o_ref[...] = _rmsnorm(x, onw_ref[...], eps).astype(o_ref.dtype)


# ------------------------------ pallas wrapper --------------------------------
def vit_fused(patches_flat, pk):
    N, _ = patches_flat.shape
    D = pk["patch_w"].shape[1]
    kern = partial(vit_fused_kernel, depth=DEPTH, num_heads=NUM_HEADS, eps=EPS)
    # Single launch, no grid: every operand is a whole-array VMEM ref.
    return pl.pallas_call(
        kern,
        out_shape=jax.ShapeDtypeStruct((N, D), jnp.float32),
    )(patches_flat, pk["patch_w"], pk["pos_bias"], pk["attn_mask"],
      pk["w_qkv"], pk["b_qkv"], pk["w_o"], pk["b_o"],
      pk["w1"], pk["b1"], pk["w2"], pk["b2"],
      pk["norm1"], pk["norm2"], pk["out_norm"])


# ------------------------------- glue (plain JAX) -----------------------------
def extract_patches_nchw(x, patch_size):
    # x: (B, C, H, W) -> (B, L, C*ph*pw), flattened in (C, ph, pw) order
    # (matches Conv2d weight (D, C, ph, pw).reshape(D, -1)).
    B, C, H, W = x.shape
    ph, pw = patch_size
    Ht, Wt = H // ph, W // pw
    x = x.reshape(B, C, Ht, ph, Wt, pw)
    x = jnp.transpose(x, (0, 2, 4, 1, 3, 5))          # (B, Ht, Wt, C, ph, pw)
    return x.reshape(B, Ht * Wt, C * ph * pw)


def fourier_pos_encoding(key, tokenized_size, hidden, n_freq=16):
    # Deterministic Gaussian-Fourier features of normalized grid coords,
    # linearly projected to hidden_size (stand-in, see TODO in header).
    Ht, Wt = tokenized_size
    ys = jnp.linspace(-1.0, 1.0, Ht)
    xs = jnp.linspace(-1.0, 1.0, Wt)
    grid = jnp.stack(jnp.meshgrid(ys, xs, indexing="ij"), axis=-1).reshape(-1, 2)
    k1, k2, k3 = jax.random.split(key, 3)
    freqs = jax.random.normal(k1, (2, n_freq), jnp.float32)
    feat = jnp.concatenate([jnp.sin(grid @ freqs), jnp.cos(grid @ freqs)], axis=-1)
    w = jax.random.normal(k2, (2 * n_freq, hidden), jnp.float32) * 0.02
    b = jax.random.normal(k3, (1, hidden), jnp.float32) * 0.02
    return feat @ w + b                                # (L, D)


def init_params(key):
    P = IN_CHANNELS * PATCH_SIZE[0] * PATCH_SIZE[1]
    keys = jax.random.split(key, 3 + 4 * DEPTH)
    it = iter(keys)
    params = {
        # conv weight (D, C, ph, pw) -> matmul form (P, D)
        "patch_w": jax.random.normal(next(it), (P, HIDDEN), jnp.float32)
                   * (1.0 / jnp.sqrt(P)),
        "patch_b": jax.random.normal(next(it), (1, HIDDEN), jnp.float32) * 0.02,
        "pos": fourier_pos_encoding(
            next(it),
            (IMG_SIZE[0] // PATCH_SIZE[0], IMG_SIZE[1] // PATCH_SIZE[1]),
            HIDDEN),
        "out_norm": jnp.ones((1, HIDDEN), jnp.float32),
        "blocks": [],
    }
    for _ in range(DEPTH):
        blk = {
            "w_qkv": jax.random.normal(next(it), (HIDDEN, 3 * HIDDEN), jnp.float32)
                     * (1.0 / jnp.sqrt(HIDDEN)),
            "b_qkv": jnp.zeros((1, 3 * HIDDEN), jnp.float32),
            "w_o": jax.random.normal(next(it), (HIDDEN, HIDDEN), jnp.float32)
                   * (1.0 / jnp.sqrt(HIDDEN)),
            "b_o": jnp.zeros((1, HIDDEN), jnp.float32),
            "w1": jax.random.normal(next(it), (HIDDEN, FFN_HIDDEN), jnp.float32)
                  * (1.0 / jnp.sqrt(HIDDEN)),
            "b1": jnp.zeros((1, FFN_HIDDEN), jnp.float32),
            "w2": jax.random.normal(next(it), (FFN_HIDDEN, HIDDEN), jnp.float32)
                  * (1.0 / jnp.sqrt(FFN_HIDDEN)),
            "b2": jnp.zeros((1, HIDDEN), jnp.float32),
            "norm1": jnp.ones((1, HIDDEN), jnp.float32),
            "norm2": jnp.ones((1, HIDDEN), jnp.float32),
        }
        params["blocks"].append(blk)
    return params


def pack_params(params, batch_size):
    """Stack per-layer weights, fold the attention scale, precompute pos+bias
    and the block-diagonal attention mask. Pure re-layout; semantics unchanged."""
    D = HIDDEN
    dh = D // NUM_HEADS
    scale = 1.0 / (dh ** 0.5)
    L = SEQ_LEN
    N = batch_size * L

    def stack(name):
        return jnp.stack([blk[name] for blk in params["blocks"]], axis=0)

    w_qkv = stack("w_qkv")
    b_qkv = stack("b_qkv")
    # fold 1/sqrt(dh) into the q projection (columns 0:D of the qkv weight/bias)
    w_qkv = w_qkv.at[:, :, :D].multiply(scale)
    b_qkv = b_qkv.at[:, :, :D].multiply(scale)

    pos_bias = jnp.tile(params["pos"], (batch_size, 1)) + params["patch_b"]

    tok_batch = jnp.arange(N, dtype=jnp.int32) // L
    attn_mask = jnp.where(tok_batch[:, None] == tok_batch[None, :],
                          0.0, -1e30).astype(jnp.float32)

    return {
        "patch_w": params["patch_w"],
        "pos_bias": pos_bias,
        "attn_mask": attn_mask,
        "w_qkv": w_qkv, "b_qkv": b_qkv,
        "w_o": stack("w_o"), "b_o": stack("b_o"),
        "w1": stack("w1"), "b1": stack("b1"),
        "w2": stack("w2"), "b2": stack("b2"),
        "norm1": stack("norm1"), "norm2": stack("norm2"),
        "out_norm": params["out_norm"],
    }


@jax.jit
def vit_forward(x_nchw, packed):
    B = x_nchw.shape[0]
    patches = extract_patches_nchw(x_nchw, PATCH_SIZE)        # (B, L, P)
    L, P = patches.shape[1], patches.shape[2]
    out_flat = vit_fused(patches.reshape(B * L, P), packed)   # (B*L, D)
    out = out_flat.reshape(B, L, HIDDEN)
    # num_register_tokens == 0 -> register-token ops are identity
    return out[:, NUM_REGISTER_TOKENS:, :]


# ---------------------------------- main --------------------------------------
if __name__ == "__main__":
    key = jax.random.PRNGKey(0)
    kx, kp = jax.random.split(key)
    x = jax.random.normal(kx, (2, IN_CHANNELS, IMG_SIZE[0], IMG_SIZE[1]),
                          jnp.float32)
    params = init_params(kp)
    packed = pack_params(params, batch_size=x.shape[0])

    out = vit_forward(x, packed)
    out = jax.block_until_ready(out)

    assert out.shape == (2, SEQ_LEN, HIDDEN), out.shape
    assert bool(jnp.all(jnp.isfinite(out)))
    print("KERNEL_OK")
</pallas_src>

<mosaic_0001>
module attributes {stable_mosaic.version = 11 : i64} {
  func.func @vit_fused_kernel(%arg0: memref<32x64xf32, #tpu.memory_space<vmem>>, %arg1: memref<64x32xf32, #tpu.memory_space<vmem>>, %arg2: memref<32x32xf32, #tpu.memory_space<vmem>>, %arg3: memref<32x32xf32, #tpu.memory_space<vmem>>, %arg4: memref<2x32x96xf32, #tpu.memory_space<vmem>>, %arg5: memref<2x1x96xf32, #tpu.memory_space<vmem>>, %arg6: memref<2x32x32xf32, #tpu.memory_space<vmem>>, %arg7: memref<2x1x32xf32, #tpu.memory_space<vmem>>, %arg8: memref<2x32x64xf32, #tpu.memory_space<vmem>>, %arg9: memref<2x1x64xf32, #tpu.memory_space<vmem>>, %arg10: memref<2x64x32xf32, #tpu.memory_space<vmem>>, %arg11: memref<2x1x32xf32, #tpu.memory_space<vmem>>, %arg12: memref<2x1x32xf32, #tpu.memory_space<vmem>>, %arg13: memref<2x1x32xf32, #tpu.memory_space<vmem>>, %arg14: memref<1x32xf32, #tpu.memory_space<vmem>>, %arg15: memref<32x32xf32, #tpu.memory_space<vmem>>) attributes {dimension_semantics = [], scalar_prefetch = 0 : i64, scratch_operands = 0 : i64, tpu.core_type = #tpu.core_type<tc>} {
    %c0 = arith.constant 0 : index
    %c0_0 = arith.constant 0 : index
    %0 = vector.load %arg0[%c0, %c0_0] : memref<32x64xf32, #tpu.memory_space<vmem>>, vector<32x64xf32>
    %c0_1 = arith.constant 0 : index
    %c0_2 = arith.constant 0 : index
    %1 = vector.load %arg1[%c0_1, %c0_2] : memref<64x32xf32, #tpu.memory_space<vmem>>, vector<64x32xf32>
    %cst = arith.constant dense<0.000000e+00> : vector<32x32xf32>
    %2 = tpu.matmul %0, %1, %cst {dimension_numbers = #tpu.dot_dimension_numbers<[1], [0], [0], [1], [0, 0, 1, 1], [], []>} : vector<32x64xf32>, vector<64x32xf32>, vector<32x32xf32> -> vector<32x32xf32>
    %c0_3 = arith.constant 0 : index
    %c0_4 = arith.constant 0 : index
    %3 = vector.load %arg2[%c0_3, %c0_4] : memref<32x32xf32, #tpu.memory_space<vmem>>, vector<32x32xf32>
    %4 = arith.addf %2, %3 : vector<32x32xf32>
    %c0_5 = arith.constant 0 : index
    %c0_6 = arith.constant 0 : index
    %5 = vector.load %arg3[%c0_5, %c0_6] : memref<32x32xf32, #tpu.memory_space<vmem>>, vector<32x32xf32>
    %c0_7 = arith.constant 0 : index
    %c0_8 = arith.constant 0 : index
    %c0_9 = arith.constant 0 : index
    %6 = vector.load %arg12[%c0_7, %c0_8, %c0_9] : memref<2x1x32xf32, #tpu.memory_space<vmem>>, vector<1x1x32xf32>
    %7 = vector.shape_cast %6 : vector<1x1x32xf32> to vector<1x32xf32>
    %c0_10 = arith.constant 0 : index
    %c0_11 = arith.constant 0 : index
    %c0_12 = arith.constant 0 : index
    %8 = vector.load %arg13[%c0_10, %c0_11, %c0_12] : memref<2x1x32xf32, #tpu.memory_space<vmem>>, vector<1x1x32xf32>
    %9 = vector.shape_cast %8 : vector<1x1x32xf32> to vector<1x32xf32>
    %c0_13 = arith.constant 0 : index
    %c0_14 = arith.constant 0 : index
    %c0_15 = arith.constant 0 : index
    %10 = vector.load %arg4[%c0_13, %c0_14, %c0_15] : memref<2x32x96xf32, #tpu.memory_space<vmem>>, vector<1x32x96xf32>
    %11 = vector.shape_cast %10 : vector<1x32x96xf32> to vector<32x96xf32>
    %c0_16 = arith.constant 0 : index
    %c0_17 = arith.constant 0 : index
    %c0_18 = arith.constant 0 : index
    %12 = vector.load %arg5[%c0_16, %c0_17, %c0_18] : memref<2x1x96xf32, #tpu.memory_space<vmem>>, vector<1x1x96xf32>
    %13 = vector.shape_cast %12 : vector<1x1x96xf32> to vector<1x96xf32>
    %c0_19 = arith.constant 0 : index
    %c0_20 = arith.constant 0 : index
    %c0_21 = arith.constant 0 : index
    %14 = vector.load %arg6[%c0_19, %c0_20, %c0_21] : memref<2x32x32xf32, #tpu.memory_space<vmem>>, vector<1x32x32xf32>
    %15 = vector.shape_cast %14 : vector<1x32x32xf32> to vector<32x32xf32>
    %c0_22 = arith.constant 0 : index
    %c0_23 = arith.constant 0 : index
    %c0_24 = arith.constant 0 : index
    %16 = vector.load %arg7[%c0_22, %c0_23, %c0_24] : memref<2x1x32xf32, #tpu.memory_space<vmem>>, vector<1x1x32xf32>
    %17 = vector.shape_cast %16 : vector<1x1x32xf32> to vector<1x32xf32>
    %c0_25 = arith.constant 0 : index
    %c0_26 = arith.constant 0 : index
    %c0_27 = arith.constant 0 : index
    %18 = vector.load %arg8[%c0_25, %c0_26, %c0_27] : memref<2x32x64xf32, #tpu.memory_space<vmem>>, vector<1x32x64xf32>
    %19 = vector.shape_cast %18 : vector<1x32x64xf32> to vector<32x64xf32>
    %c0_28 = arith.constant 0 : index
    %c0_29 = arith.constant 0 : index
    %c0_30 = arith.constant 0 : index
    %20 = vector.load %arg9[%c0_28, %c0_29, %c0_30] : memref<2x1x64xf32, #tpu.memory_space<vmem>>, vector<1x1x64xf32>
    %21 = vector.shape_cast %20 : vector<1x1x64xf32> to vector<1x64xf32>
    %c0_31 = arith.constant 0 : index
    %c0_32 = arith.constant 0 : index
    %c0_33 = arith.constant 0 : index
    %22 = vector.load %arg10[%c0_31, %c0_32, %c0_33] : memref<2x64x32xf32, #tpu.memory_space<vmem>>, vector<1x64x32xf32>
    %23 = vector.shape_cast %22 : vector<1x64x32xf32> to vector<64x32xf32>
    %c0_34 = arith.constant 0 : index
    %c0_35 = arith.constant 0 : index
    %c0_36 = arith.constant 0 : index
    %24 = vector.load %arg11[%c0_34, %c0_35, %c0_36] : memref<2x1x32xf32, #tpu.memory_space<vmem>>, vector<1x1x32xf32>
    %25 = vector.shape_cast %24 : vector<1x1x32xf32> to vector<1x32xf32>
    %26 = arith.mulf %4, %4 : vector<32x32xf32>
    %cst_37 = arith.constant dense<0.000000e+00> : vector<32xf32>
    %27 = vector.multi_reduction <add>, %26, %cst_37 [1] : vector<32x32xf32> to vector<32xf32>
    %28 = vector.shape_cast %27 : vector<32xf32> to vector<32x1xf32>
    %cst_38 = arith.constant 3.200000e+01 : f32
    %29 = vector.broadcast %cst_38 : f32 to vector<32x1xf32>
    %30 = arith.divf %28, %29 : vector<32x1xf32>
    %cst_39 = arith.constant 1.1920929E-7 : f32
    %31 = vector.broadcast %cst_39 : f32 to vector<32x1xf32>
    %32 = arith.addf %30, %31 : vector<32x1xf32>
    %33 = math.rsqrt %32 : vector<32x1xf32>
    %34 = vector.broadcast %33 : vector<32x1xf32> to vector<32x32xf32>
    %35 = arith.mulf %4, %34 : vector<32x32xf32>
    %36 = vector.broadcast %7 : vector<1x32xf32> to vector<32x32xf32>
    %37 = arith.mulf %35, %36 : vector<32x32xf32>
    %cst_40 = arith.constant dense<0.000000e+00> : vector<32x96xf32>
    %38 = tpu.matmul %37, %11, %cst_40 {dimension_numbers = #tpu.dot_dimension_numbers<[1], [0], [0], [1], [0, 0, 1, 1], [], []>} : vector<32x32xf32>, vector<32x96xf32>, vector<32x96xf32> -> vector<32x96xf32>
    %39 = vector.broadcast %13 : vector<1x96xf32> to vector<32x96xf32>
    %40 = arith.addf %38, %39 : vector<32x96xf32>
    %41 = vector.extract_strided_slice %40 {offsets = [0, 0], sizes = [32, 32], strides = [1, 1]} : vector<32x96xf32> to vector<32x32xf32>
    %42 = vector.extract_strided_slice %40 {offsets = [0, 32], sizes = [32, 32], strides = [1, 1]} : vector<32x96xf32> to vector<32x32xf32>
    %43 = vector.extract_strided_slice %40 {offsets = [0, 64], sizes = [32, 32], strides = [1, 1]} : vector<32x96xf32> to vector<32x32xf32>
    %cst_41 = arith.constant 0.000000e+00 : f32
    %44 = vector.broadcast %cst_41 : f32 to vector<32x32xf32>
    %45 = vector.extract_strided_slice %41 {offsets = [0, 0], sizes = [32, 8], strides = [1, 1]} : vector<32x32xf32> to vector<32x8xf32>
    %46 = vector.extract_strided_slice %42 {offsets = [0, 0], sizes = [32, 8], strides = [1, 1]} : vector<32x32xf32> to vector<32x8xf32>
    %cst_42 = arith.constant dense<0.000000e+00> : vector<32x32xf32>
    %47 = tpu.matmul %45, %46, %cst_42 {dimension_numbers = #tpu.dot_dimension_numbers<[1], [1], [0], [0], [0, 0, 1, 0], [], []>} : vector<32x8xf32>, vector<32x8xf32>, vector<32x32xf32> -> vector<32x32xf32>
    %48 = arith.addf %47, %5 : vector<32x32xf32>
    %cst_43 = arith.constant dense<0xFF800000> : vector<32xf32>
    %49 = vector.multi_reduction <maximumf>, %48, %cst_43 [1] : vector<32x32xf32> to vector<32xf32>
    %50 = vector.shape_cast %49 : vector<32xf32> to vector<32x1xf32>
    %51 = vector.broadcast %50 : vector<32x1xf32> to vector<32x32xf32>
    %52 = arith.subf %48, %51 : vector<32x32xf32>
    %53 = math.exp %52 : vector<32x32xf32>
    %cst_44 = arith.constant dense<0.000000e+00> : vector<32xf32>
    %54 = vector.multi_reduction <add>, %53, %cst_44 [1] : vector<32x32xf32> to vector<32xf32>
    %55 = vector.shape_cast %54 : vector<32xf32> to vector<32x1xf32>
    %56 = tpu.reciprocal %55 {approx = true} : vector<32x1xf32> -> vector<32x1xf32>
    %57 = vector.broadcast %56 : vector<32x1xf32> to vector<32x32xf32>
    %58 = arith.mulf %53, %57 : vector<32x32xf32>
    %59 = vector.extract_strided_slice %43 {offsets = [0, 0], sizes = [32, 8], strides = [1, 1]} : vector<32x32xf32> to vector<32x8xf32>
    %cst_45 = arith.constant dense<0.000000e+00> : vector<32x8xf32>
    %60 = tpu.matmul %58, %59, %cst_45 {dimension_numbers = #tpu.dot_dimension_numbers<[1], [0], [0], [1], [0, 0, 1, 1], [], []>} : vector<32x32xf32>, vector<32x8xf32>, vector<32x8xf32> -> vector<32x8xf32>
    %61 = vector.extract_strided_slice %15 {offsets = [0, 0], sizes = [8, 32], strides = [1, 1]} : vector<32x32xf32> to vector<8x32xf32>
    %cst_46 = arith.constant dense<0.000000e+00> : vector<32x32xf32>
    %62 = tpu.matmul %60, %61, %cst_46 {dimension_numbers = #tpu.dot_dimension_numbers<[1], [0], [0], [1], [0, 0, 1, 1], [], []>} : vector<32x8xf32>, vector<8x32xf32>, vector<32x32xf32> -> vector<32x32xf32>
    %63 = arith.addf %44, %62 : vector<32x32xf32>
    %64 = vector.extract_strided_slice %41 {offsets = [0, 8], sizes = [32, 8], strides = [1, 1]} : vector<32x32xf32> to vector<32x8xf32>
    %65 = vector.extract_strided_slice %42 {offsets = [0, 8], sizes = [32, 8], strides = [1, 1]} : vector<32x32xf32> to vector<32x8xf32>
    %cst_47 = arith.constant dense<0.000000e+00> : vector<32x32xf32>
    %66 = tpu.matmul %64, %65, %cst_47 {dimension_numbers = #tpu.dot_dimension_numbers<[1], [1], [0], [0], [0, 0, 1, 0], [], []>} : vector<32x8xf32>, vector<32x8xf32>, vector<32x32xf32> -> vector<32x32xf32>
    %67 = arith.addf %66, %5 : vector<32x32xf32>
    %cst_48 = arith.constant dense<0xFF800000> : vector<32xf32>
    %68 = vector.multi_reduction <maximumf>, %67, %cst_48 [1] : vector<32x32xf32> to vector<32xf32>
    %69 = vector.shape_cast %68 : vector<32xf32> to vector<32x1xf32>
    %70 = vector.broadcast %69 : vector<32x1xf32> to vector<32x32xf32>
    %71 = arith.subf %67, %70 : vector<32x32xf32>
    %72 = math.exp %71 : vector<32x32xf32>
    %cst_49 = arith.constant dense<0.000000e+00> : vector<32xf32>
    %73 = vector.multi_reduction <add>, %72, %cst_49 [1] : vector<32x32xf32> to vector<32xf32>
    %74 = vector.shape_cast %73 : vector<32xf32> to vector<32x1xf32>
    %75 = tpu.reciprocal %74 {approx = true} : vector<32x1xf32> -> vector<32x1xf32>
    %76 = vector.broadcast %75 : vector<32x1xf32> to vector<32x32xf32>
    %77 = arith.mulf %72, %76 : vector<32x32xf32>
    %78 = vector.extract_strided_slice %43 {offsets = [0, 8], sizes = [32, 8], strides = [1, 1]} : vector<32x32xf32> to vector<32x8xf32>
    %cst_50 = arith.constant dense<0.000000e+00> : vector<32x8xf32>
    %79 = tpu.matmul %77, %78, %cst_50 {dimension_numbers = #tpu.dot_dimension_numbers<[1], [0], [0], [1], [0, 0, 1, 1], [], []>} : vector<32x32xf32>, vector<32x8xf32>, vector<32x8xf32> -> vector<32x8xf32>
    %80 = vector.extract_strided_slice %15 {offsets = [8, 0], sizes = [8, 32], strides = [1, 1]} : vector<32x32xf32> to vector<8x32xf32>
    %cst_51 = arith.constant dense<0.000000e+00> : vector<32x32xf32>
    %81 = tpu.matmul %79, %80, %cst_51 {dimension_numbers = #tpu.dot_dimension_numbers<[1], [0], [0], [1], [0, 0, 1, 1], [], []>} : vector<32x8xf32>, vector<8x32xf32>, vector<32x32xf32> -> vector<32x32xf32>
    %82 = arith.addf %63, %81 : vector<32x32xf32>
    %83 = vector.extract_strided_slice %41 {offsets = [0, 16], sizes = [32, 8], strides = [1, 1]} : vector<32x32xf32> to vector<32x8xf32>
    %84 = vector.extract_strided_slice %42 {offsets = [0, 16], sizes = [32, 8], strides = [1, 1]} : vector<32x32xf32> to vector<32x8xf32>
    %cst_52 = arith.constant dense<0.000000e+00> : vector<32x32xf32>
    %85 = tpu.matmul %83, %84, %cst_52 {dimension_numbers = #tpu.dot_dimension_numbers<[1], [1], [0], [0], [0, 0, 1, 0], [], []>} : vector<32x8xf32>, vector<32x8xf32>, vector<32x32xf32> -> vector<32x32xf32>
    %86 = arith.addf %85, %5 : vector<32x32xf32>
    %cst_53 = arith.constant dense<0xFF800000> : vector<32xf32>
    %87 = vector.multi_reduction <maximumf>, %86, %cst_53 [1] : vector<32x32xf32> to vector<32xf32>
    %88 = vector.shape_cast %87 : vector<32xf32> to vector<32x1xf32>
    %89 = vector.broadcast %88 : vector<32x1xf32> to vector<32x32xf32>
    %90 = arith.subf %86, %89 : vector<32x32xf32>
    %91 = math.exp %90 : vector<32x32xf32>
    %cst_54 = arith.constant dense<0.000000e+00> : vector<32xf32>
    %92 = vector.multi_reduction <add>, %91, %cst_54 [1] : vector<32x32xf32> to vector<32xf32>
    %93 = vector.shape_cast %92 : vector<32xf32> to vector<32x1xf32>
    %94 = tpu.reciprocal %93 {approx = true} : vector<32x1xf32> -> vector<32x1xf32>
    %95 = vector.broadcast %94 : vector<32x1xf32> to vector<32x32xf32>
    %96 = arith.mulf %91, %95 : vector<32x32xf32>
    %97 = vector.extract_strided_slice %43 {offsets = [0, 16], sizes = [32, 8], strides = [1, 1]} : vector<32x32xf32> to vector<32x8xf32>
    %cst_55 = arith.constant dense<0.000000e+00> : vector<32x8xf32>
    %98 = tpu.matmul %96, %97, %cst_55 {dimension_numbers = #tpu.dot_dimension_numbers<[1], [0], [0], [1], [0, 0, 1, 1], [], []>} : vector<32x32xf32>, vector<32x8xf32>, vector<32x8xf32> -> vector<32x8xf32>
    %99 = vector.extract_strided_slice %15 {offsets = [16, 0], sizes = [8, 32], strides = [1, 1]} : vector<32x32xf32> to vector<8x32xf32>
    %cst_56 = arith.constant dense<0.000000e+00> : vector<32x32xf32>
    %100 = tpu.matmul %98, %99, %cst_56 {dimension_numbers = #tpu.dot_dimension_numbers<[1], [0], [0], [1], [0, 0, 1, 1], [], []>} : vector<32x8xf32>, vector<8x32xf32>, vector<32x32xf32> -> vector<32x32xf32>
    %101 = arith.addf %82, %100 : vector<32x32xf32>
    %102 = vector.extract_strided_slice %41 {offsets = [0, 24], sizes = [32, 8], strides = [1, 1]} : vector<32x32xf32> to vector<32x8xf32>
    %103 = vector.extract_strided_slice %42 {offsets = [0, 24], sizes = [32, 8], strides = [1, 1]} : vector<32x32xf32> to vector<32x8xf32>
    %cst_57 = arith.constant dense<0.000000e+00> : vector<32x32xf32>
    %104 = tpu.matmul %102, %103, %cst_57 {dimension_numbers = #tpu.dot_dimension_numbers<[1], [1], [0], [0], [0, 0, 1, 0], [], []>} : vector<32x8xf32>, vector<32x8xf32>, vector<32x32xf32> -> vector<32x32xf32>
    %105 = arith.addf %104, %5 : vector<32x32xf32>
    %cst_58 = arith.constant dense<0xFF800000> : vector<32xf32>
    %106 = vector.multi_reduction <maximumf>, %105, %cst_58 [1] : vector<32x32xf32> to vector<32xf32>
    %107 = vector.shape_cast %106 : vector<32xf32> to vector<32x1xf32>
    %108 = vector.broadcast %107 : vector<32x1xf32> to vector<32x32xf32>
    %109 = arith.subf %105, %108 : vector<32x32xf32>
    %110 = math.exp %109 : vector<32x32xf32>
    %cst_59 = arith.constant dense<0.000000e+00> : vector<32xf32>
    %111 = vector.multi_reduction <add>, %110, %cst_59 [1] : vector<32x32xf32> to vector<32xf32>
    %112 = vector.shape_cast %111 : vector<32xf32> to vector<32x1xf32>
    %113 = tpu.reciprocal %112 {approx = true} : vector<32x1xf32> -> vector<32x1xf32>
    %114 = vector.broadcast %113 : vector<32x1xf32> to vector<32x32xf32>
    %115 = arith.mulf %110, %114 : vector<32x32xf32>
    %116 = vector.extract_strided_slice %43 {offsets = [0, 24], sizes = [32, 8], strides = [1, 1]} : vector<32x32xf32> to vector<32x8xf32>
    %cst_60 = arith.constant dense<0.000000e+00> : vector<32x8xf32>
    %117 = tpu.matmul %115, %116, %cst_60 {dimension_numbers = #tpu.dot_dimension_numbers<[1], [0], [0], [1], [0, 0, 1, 1], [], []>} : vector<32x32xf32>, vector<32x8xf32>, vector<32x8xf32> -> vector<32x8xf32>
    %118 = vector.extract_strided_slice %15 {offsets = [24, 0], sizes = [8, 32], strides = [1, 1]} : vector<32x32xf32> to vector<8x32xf32>
    %cst_61 = arith.constant dense<0.000000e+00> : vector<32x32xf32>
    %119 = tpu.matmul %117, %118, %cst_61 {dimension_numbers = #tpu.dot_dimension_numbers<[1], [0], [0], [1], [0, 0, 1, 1], [], []>} : vector<32x8xf32>, vector<8x32xf32>, vector<32x32xf32> -> vector<32x32xf32>
    %120 = arith.addf %101, %119 : vector<32x32xf32>
    %121 = arith.addf %4, %120 : vector<32x32xf32>
    %122 = vector.broadcast %17 : vector<1x32xf32> to vector<32x32xf32>
    %123 = arith.addf %121, %122 : vector<32x32xf32>
    %124 = arith.mulf %123, %123 : vector<32x32xf32>
    %cst_62 = arith.constant dense<0.000000e+00> : vector<32xf32>
    %125 = vector.multi_reduction <add>, %124, %cst_62 [1] : vector<32x32xf32> to vector<32xf32>
    %126 = vector.shape_cast %125 : vector<32xf32> to vector<32x1xf32>
    %cst_63 = arith.constant 3.200000e+01 : f32
    %127 = vector.broadcast %cst_63 : f32 to vector<32x1xf32>
    %128 = arith.divf %126, %127 : vector<32x1xf32>
    %cst_64 = arith.constant 1.1920929E-7 : f32
    %129 = vector.broadcast %cst_64 : f32 to vector<32x1xf32>
    %130 = arith.addf %128, %129 : vector<32x1xf32>
    %131 = math.rsqrt %130 : vector<32x1xf32>
    %132 = vector.broadcast %131 : vector<32x1xf32> to vector<32x32xf32>
    %133 = arith.mulf %123, %132 : vector<32x32xf32>
    %134 = vector.broadcast %9 : vector<1x32xf32> to vector<32x32xf32>
    %135 = arith.mulf %133, %134 : vector<32x32xf32>
    %cst_65 = arith.constant dense<0.000000e+00> : vector<32x64xf32>
    %136 = tpu.matmul %135, %19, %cst_65 {dimension_numbers = #tpu.dot_dimension_numbers<[1], [0], [0], [1], [0, 0, 1, 1], [], []>} : vector<32x32xf32>, vector<32x64xf32>, vector<32x64xf32> -> vector<32x64xf32>
    %137 = vector.broadcast %21 : vector<1x64xf32> to vector<32x64xf32>
    %138 = arith.addf %136, %137 : vector<32x64xf32>
    %cst_66 = arith.constant 0.000000e+00 : f32
    %139 = vector.broadcast %cst_66 : f32 to vector<32x64xf32>
    %140 = arith.maximumf %138, %139 : vector<32x64xf32>
    %141 = arith.mulf %140, %140 : vector<32x64xf32>
    %cst_67 = arith.constant dense<0.000000e+00> : vector<32x32xf32>
    %142 = tpu.matmul %141, %23, %cst_67 {dimension_numbers = #tpu.dot_dimension_numbers<[1], [0], [0], [1], [0, 0, 1, 1], [], []>} : vector<32x64xf32>, vector<64x32xf32>, vector<32x32xf32> -> vector<32x32xf32>
    %143 = arith.addf %123, %142 : vector<32x32xf32>
    %144 = vector.broadcast %25 : vector<1x32xf32> to vector<32x32xf32>
    %145 = arith.addf %143, %144 : vector<32x32xf32>
    %c1 = arith.constant 1 : index
    %c0_68 = arith.constant 0 : index
    %c0_69 = arith.constant 0 : index
    %146 = vector.load %arg12[%c1, %c0_68, %c0_69] : memref<2x1x32xf32, #tpu.memory_space<vmem>>, vector<1x1x32xf32>
    %147 = vector.shape_cast %146 : vector<1x1x32xf32> to vector<1x32xf32>
    %c1_70 = arith.constant 1 : index
    %c0_71 = arith.constant 0 : index
    %c0_72 = arith.constant 0 : index
    %148 = vector.load %arg13[%c1_70, %c0_71, %c0_72] : memref<2x1x32xf32, #tpu.memory_space<vmem>>, vector<1x1x32xf32>
    %149 = vector.shape_cast %148 : vector<1x1x32xf32> to vector<1x32xf32>
    %c1_73 = arith.constant 1 : index
    %c0_74 = arith.constant 0 : index
    %c0_75 = arith.constant 0 : index
    %150 = vector.load %arg4[%c1_73, %c0_74, %c0_75] : memref<2x32x96xf32, #tpu.memory_space<vmem>>, vector<1x32x96xf32>
    %151 = vector.shape_cast %150 : vector<1x32x96xf32> to vector<32x96xf32>
    %c1_76 = arith.constant 1 : index
    %c0_77 = arith.constant 0 : index
    %c0_78 = arith.constant 0 : index
    %152 = vector.load %arg5[%c1_76, %c0_77, %c0_78] : memref<2x1x96xf32, #tpu.memory_space<vmem>>, vector<1x1x96xf32>
    %153 = vector.shape_cast %152 : vector<1x1x96xf32> to vector<1x96xf32>
    %c1_79 = arith.constant 1 : index
    %c0_80 = arith.constant 0 : index
    %c0_81 = arith.constant 0 : index
    %154 = vector.load %arg6[%c1_79, %c0_80, %c0_81] : memref<2x32x32xf32, #tpu.memory_space<vmem>>, vector<1x32x32xf32>
    %155 = vector.shape_cast %154 : vector<1x32x32xf32> to vector<32x32xf32>
    %c1_82 = arith.constant 1 : index
    %c0_83 = arith.constant 0 : index
    %c0_84 = arith.constant 0 : index
    %156 = vector.load %arg7[%c1_82, %c0_83, %c0_84] : memref<2x1x32xf32, #tpu.memory_space<vmem>>, vector<1x1x32xf32>
    %157 = vector.shape_cast %156 : vector<1x1x32xf32> to vector<1x32xf32>
    %c1_85 = arith.constant 1 : index
    %c0_86 = arith.constant 0 : index
    %c0_87 = arith.constant 0 : index
    %158 = vector.load %arg8[%c1_85, %c0_86, %c0_87] : memref<2x32x64xf32, #tpu.memory_space<vmem>>, vector<1x32x64xf32>
    %159 = vector.shape_cast %158 : vector<1x32x64xf32> to vector<32x64xf32>
    %c1_88 = arith.constant 1 : index
    %c0_89 = arith.constant 0 : index
    %c0_90 = arith.constant 0 : index
    %160 = vector.load %arg9[%c1_88, %c0_89, %c0_90] : memref<2x1x64xf32, #tpu.memory_space<vmem>>, vector<1x1x64xf32>
    %161 = vector.shape_cast %160 : vector<1x1x64xf32> to vector<1x64xf32>
    %c1_91 = arith.constant 1 : index
    %c0_92 = arith.constant 0 : index
    %c0_93 = arith.constant 0 : index
    %162 = vector.load %arg10[%c1_91, %c0_92, %c0_93] : memref<2x64x32xf32, #tpu.memory_space<vmem>>, vector<1x64x32xf32>
    %163 = vector.shape_cast %162 : vector<1x64x32xf32> to vector<64x32xf32>
    %c1_94 = arith.constant 1 : index
    %c0_95 = arith.constant 0 : index
    %c0_96 = arith.constant 0 : index
    %164 = vector.load %arg11[%c1_94, %c0_95, %c0_96] : memref<2x1x32xf32, #tpu.memory_space<vmem>>, vector<1x1x32xf32>
    %165 = vector.shape_cast %164 : vector<1x1x32xf32> to vector<1x32xf32>
    %166 = arith.mulf %145, %145 : vector<32x32xf32>
    %cst_97 = arith.constant dense<0.000000e+00> : vector<32xf32>
    %167 = vector.multi_reduction <add>, %166, %cst_97 [1] : vector<32x32xf32> to vector<32xf32>
    %168 = vector.shape_cast %167 : vector<32xf32> to vector<32x1xf32>
    %cst_98 = arith.constant 3.200000e+01 : f32
    %169 = vector.broadcast %cst_98 : f32 to vector<32x1xf32>
    %170 = arith.divf %168, %169 : vector<32x1xf32>
    %cst_99 = arith.constant 1.1920929E-7 : f32
    %171 = vector.broadcast %cst_99 : f32 to vector<32x1xf32>
    %172 = arith.addf %170, %171 : vector<32x1xf32>
    %173 = math.rsqrt %172 : vector<32x1xf32>
    %174 = vector.broadcast %173 : vector<32x1xf32> to vector<32x32xf32>
    %175 = arith.mulf %145, %174 : vector<32x32xf32>
    %176 = vector.broadcast %147 : vector<1x32xf32> to vector<32x32xf32>
    %177 = arith.mulf %175, %176 : vector<32x32xf32>
    %cst_100 = arith.constant dense<0.000000e+00> : vector<32x96xf32>
    %178 = tpu.matmul %177, %151, %cst_100 {dimension_numbers = #tpu.dot_dimension_numbers<[1], [0], [0], [1], [0, 0, 1, 1], [], []>} : vector<32x32xf32>, vector<32x96xf32>, vector<32x96xf32> -> vector<32x96xf32>
    %179 = vector.broadcast %153 : vector<1x96xf32> to vector<32x96xf32>
    %180 = arith.addf %178, %179 : vector<32x96xf32>
    %181 = vector.extract_strided_slice %180 {offsets = [0, 0], sizes = [32, 32], strides = [1, 1]} : vector<32x96xf32> to vector<32x32xf32>
    %182 = vector.extract_strided_slice %180 {offsets = [0, 32], sizes = [32, 32], strides = [1, 1]} : vector<32x96xf32> to vector<32x32xf32>
    %183 = vector.extract_strided_slice %180 {offsets = [0, 64], sizes = [32, 32], strides = [1, 1]} : vector<32x96xf32> to vector<32x32xf32>
    %cst_101 = arith.constant 0.000000e+00 : f32
    %184 = vector.broadcast %cst_101 : f32 to vector<32x32xf32>
    %185 = vector.extract_strided_slice %181 {offsets = [0, 0], sizes = [32, 8], strides = [1, 1]} : vector<32x32xf32> to vector<32x8xf32>
    %186 = vector.extract_strided_slice %182 {offsets = [0, 0], sizes = [32, 8], strides = [1, 1]} : vector<32x32xf32> to vector<32x8xf32>
    %cst_102 = arith.constant dense<0.000000e+00> : vector<32x32xf32>
    %187 = tpu.matmul %185, %186, %cst_102 {dimension_numbers = #tpu.dot_dimension_numbers<[1], [1], [0], [0], [0, 0, 1, 0], [], []>} : vector<32x8xf32>, vector<32x8xf32>, vector<32x32xf32> -> vector<32x32xf32>
    %188 = arith.addf %187, %5 : vector<32x32xf32>
    %cst_103 = arith.constant dense<0xFF800000> : vector<32xf32>
    %189 = vector.multi_reduction <maximumf>, %188, %cst_103 [1] : vector<32x32xf32> to vector<32xf32>
    %190 = vector.shape_cast %189 : vector<32xf32> to vector<32x1xf32>
    %191 = vector.broadcast %190 : vector<32x1xf32> to vector<32x32xf32>
    %192 = arith.subf %188, %191 : vector<32x32xf32>
    %193 = math.exp %192 : vector<32x32xf32>
    %cst_104 = arith.constant dense<0.000000e+00> : vector<32xf32>
    %194 = vector.multi_reduction <add>, %193, %cst_104 [1] : vector<32x32xf32> to vector<32xf32>
    %195 = vector.shape_cast %194 : vector<32xf32> to vector<32x1xf32>
    %196 = tpu.reciprocal %195 {approx = true} : vector<32x1xf32> -> vector<32x1xf32>
    %197 = vector.broadcast %196 : vector<32x1xf32> to vector<32x32xf32>
    %198 = arith.mulf %193, %197 : vector<32x32xf32>
    %199 = vector.extract_strided_slice %183 {offsets = [0, 0], sizes = [32, 8], strides = [1, 1]} : vector<32x32xf32> to vector<32x8xf32>
    %cst_105 = arith.constant dense<0.000000e+00> : vector<32x8xf32>
    %200 = tpu.matmul %198, %199, %cst_105 {dimension_numbers = #tpu.dot_dimension_numbers<[1], [0], [0], [1], [0, 0, 1, 1], [], []>} : vector<32x32xf32>, vector<32x8xf32>, vector<32x8xf32> -> vector<32x8xf32>
    %201 = vector.extract_strided_slice %155 {offsets = [0, 0], sizes = [8, 32], strides = [1, 1]} : vector<32x32xf32> to vector<8x32xf32>
    %cst_106 = arith.constant dense<0.000000e+00> : vector<32x32xf32>
    %202 = tpu.matmul %200, %201, %cst_106 {dimension_numbers = #tpu.dot_dimension_numbers<[1], [0], [0], [1], [0, 0, 1, 1], [], []>} : vector<32x8xf32>, vector<8x32xf32>, vector<32x32xf32> -> vector<32x32xf32>
    %203 = arith.addf %184, %202 : vector<32x32xf32>
    %204 = vector.extract_strided_slice %181 {offsets = [0, 8], sizes = [32, 8], strides = [1, 1]} : vector<32x32xf32> to vector<32x8xf32>
    %205 = vector.extract_strided_slice %182 {offsets = [0, 8], sizes = [32, 8], strides = [1, 1]} : vector<32x32xf32> to vector<32x8xf32>
    %cst_107 = arith.constant dense<0.000000e+00> : vector<32x32xf32>
    %206 = tpu.matmul %204, %205, %cst_107 {dimension_numbers = #tpu.dot_dimension_numbers<[1], [1], [0], [0], [0, 0, 1, 0], [], []>} : vector<32x8xf32>, vector<32x8xf32>, vector<32x32xf32> -> vector<32x32xf32>
    %207 = arith.addf %206, %5 : vector<32x32xf32>
    %cst_108 = arith.constant dense<0xFF800000> : vector<32xf32>
    %208 = vector.multi_reduction <maximumf>, %207, %cst_108 [1] : vector<32x32xf32> to vector<32xf32>
    %209 = vector.shape_cast %208 : vector<32xf32> to vector<32x1xf32>
    %210 = vector.broadcast %209 : vector<32x1xf32> to vector<32x32xf32>
    %211 = arith.subf %207, %210 : vector<32x32xf32>
    %212 = math.exp %211 : vector<32x32xf32>
    %cst_109 = arith.constant dense<0.000000e+00> : vector<32xf32>
    %213 = vector.multi_reduction <add>, %212, %cst_109 [1] : vector<32x32xf32> to vector<32xf32>
    %214 = vector.shape_cast %213 : vector<32xf32> to vector<32x1xf32>
    %215 = tpu.reciprocal %214 {approx = true} : vector<32x1xf32> -> vector<32x1xf32>
    %216 = vector.broadcast %215 : vector<32x1xf32> to vector<32x32xf32>
    %217 = arith.mulf %212, %216 : vector<32x32xf32>
    %218 = vector.extract_strided_slice %183 {offsets = [0, 8], sizes = [32, 8], strides = [1, 1]} : vector<32x32xf32> to vector<32x8xf32>
    %cst_110 = arith.constant dense<0.000000e+00> : vector<32x8xf32>
    %219 = tpu.matmul %217, %218, %cst_110 {dimension_numbers = #tpu.dot_dimension_numbers<[1], [0], [0], [1], [0, 0, 1, 1], [], []>} : vector<32x32xf32>, vector<32x8xf32>, vector<32x8xf32> -> vector<32x8xf32>
    %220 = vector.extract_strided_slice %155 {offsets = [8, 0], sizes = [8, 32], strides = [1, 1]} : vector<32x32xf32> to vector<8x32xf32>
    %cst_111 = arith.constant dense<0.000000e+00> : vector<32x32xf32>
    %221 = tpu.matmul %219, %220, %cst_111 {dimension_numbers = #tpu.dot_dimension_numbers<[1], [0], [0], [1], [0, 0, 1, 1], [], []>} : vector<32x8xf32>, vector<8x32xf32>, vector<32x32xf32> -> vector<32x32xf32>
    %222 = arith.addf %203, %221 : vector<32x32xf32>
    %223 = vector.extract_strided_slice %181 {offsets = [0, 16], sizes = [32, 8], strides = [1, 1]} : vector<32x32xf32> to vector<32x8xf32>
    %224 = vector.extract_strided_slice %182 {offsets = [0, 16], sizes = [32, 8], strides = [1, 1]} : vector<32x32xf32> to vector<32x8xf32>
    %cst_112 = arith.constant dense<0.000000e+00> : vector<32x32xf32>
    %225 = tpu.matmul %223, %224, %cst_112 {dimension_numbers = #tpu.dot_dimension_numbers<[1], [1], [0], [0], [0, 0, 1, 0], [], []>} : vector<32x8xf32>, vector<32x8xf32>, vector<32x32xf32> -> vector<32x32xf32>
    %226 = arith.addf %225, %5 : vector<32x32xf32>
    %cst_113 = arith.constant dense<0xFF800000> : vector<32xf32>
    %227 = vector.multi_reduction <maximumf>, %226, %cst_113 [1] : vector<32x32xf32> to vector<32xf32>
    %228 = vector.shape_cast %227 : vector<32xf32> to vector<32x1xf32>
    %229 = vector.broadcast %228 : vector<32x1xf32> to vector<32x32xf32>
    %230 = arith.subf %226, %229 : vector<32x32xf32>
    %231 = math.exp %230 : vector<32x32xf32>
    %cst_114 = arith.constant dense<0.000000e+00> : vector<32xf32>
    %232 = vector.multi_reduction <add>, %231, %cst_114 [1] : vector<32x32xf32> to vector<32xf32>
    %233 = vector.shape_cast %232 : vector<32xf32> to vector<32x1xf32>
    %234 = tpu.reciprocal %233 {approx = true} : vector<32x1xf32> -> vector<32x1xf32>
    %235 = vector.broadcast %234 : vector<32x1xf32> to vector<32x32xf32>
    %236 = arith.mulf %231, %235 : vector<32x32xf32>
    %237 = vector.extract_strided_slice %183 {offsets = [0, 16], sizes = [32, 8], strides = [1, 1]} : vector<32x32xf32> to vector<32x8xf32>
    %cst_115 = arith.constant dense<0.000000e+00> : vector<32x8xf32>
    %238 = tpu.matmul %236, %237, %cst_115 {dimension_numbers = #tpu.dot_dimension_numbers<[1], [0], [0], [1], [0, 0, 1, 1], [], []>} : vector<32x32xf32>, vector<32x8xf32>, vector<32x8xf32> -> vector<32x8xf32>
    %239 = vector.extract_strided_slice %155 {offsets = [16, 0], sizes = [8, 32], strides = [1, 1]} : vector<32x32xf32> to vector<8x32xf32>
    %cst_116 = arith.constant dense<0.000000e+00> : vector<32x32xf32>
    %240 = tpu.matmul %238, %239, %cst_116 {dimension_numbers = #tpu.dot_dimension_numbers<[1], [0], [0], [1], [0, 0, 1, 1], [], []>} : vector<32x8xf32>, vector<8x32xf32>, vector<32x32xf32> -> vector<32x32xf32>
    %241 = arith.addf %222, %240 : vector<32x32xf32>
    %242 = vector.extract_strided_slice %181 {offsets = [0, 24], sizes = [32, 8], strides = [1, 1]} : vector<32x32xf32> to vector<32x8xf32>
    %243 = vector.extract_strided_slice %182 {offsets = [0, 24], sizes = [32, 8], strides = [1, 1]} : vector<32x32xf32> to vector<32x8xf32>
    %cst_117 = arith.constant dense<0.000000e+00> : vector<32x32xf32>
    %244 = tpu.matmul %242, %243, %cst_117 {dimension_numbers = #tpu.dot_dimension_numbers<[1], [1], [0], [0], [0, 0, 1, 0], [], []>} : vector<32x8xf32>, vector<32x8xf32>, vector<32x32xf32> -> vector<32x32xf32>
    %245 = arith.addf %244, %5 : vector<32x32xf32>
    %cst_118 = arith.constant dense<0xFF800000> : vector<32xf32>
    %246 = vector.multi_reduction <maximumf>, %245, %cst_118 [1] : vector<32x32xf32> to vector<32xf32>
    %247 = vector.shape_cast %246 : vector<32xf32> to vector<32x1xf32>
    %248 = vector.broadcast %247 : vector<32x1xf32> to vector<32x32xf32>
    %249 = arith.subf %245, %248 : vector<32x32xf32>
    %250 = math.exp %249 : vector<32x32xf32>
    %cst_119 = arith.constant dense<0.000000e+00> : vector<32xf32>
    %251 = vector.multi_reduction <add>, %250, %cst_119 [1] : vector<32x32xf32> to vector<32xf32>
    %252 = vector.shape_cast %251 : vector<32xf32> to vector<32x1xf32>
    %253 = tpu.reciprocal %252 {approx = true} : vector<32x1xf32> -> vector<32x1xf32>
    %254 = vector.broadcast %253 : vector<32x1xf32> to vector<32x32xf32>
    %255 = arith.mulf %250, %254 : vector<32x32xf32>
    %256 = vector.extract_strided_slice %183 {offsets = [0, 24], sizes = [32, 8], strides = [1, 1]} : vector<32x32xf32> to vector<32x8xf32>
    %cst_120 = arith.constant dense<0.000000e+00> : vector<32x8xf32>
    %257 = tpu.matmul %255, %256, %cst_120 {dimension_numbers = #tpu.dot_dimension_numbers<[1], [0], [0], [1], [0, 0, 1, 1], [], []>} : vector<32x32xf32>, vector<32x8xf32>, vector<32x8xf32> -> vector<32x8xf32>
    %258 = vector.extract_strided_slice %155 {offsets = [24, 0], sizes = [8, 32], strides = [1, 1]} : vector<32x32xf32> to vector<8x32xf32>
    %cst_121 = arith.constant dense<0.000000e+00> : vector<32x32xf32>
    %259 = tpu.matmul %257, %258, %cst_121 {dimension_numbers = #tpu.dot_dimension_numbers<[1], [0], [0], [1], [0, 0, 1, 1], [], []>} : vector<32x8xf32>, vector<8x32xf32>, vector<32x32xf32> -> vector<32x32xf32>
    %260 = arith.addf %241, %259 : vector<32x32xf32>
    %261 = arith.addf %145, %260 : vector<32x32xf32>
    %262 = vector.broadcast %157 : vector<1x32xf32> to vector<32x32xf32>
    %263 = arith.addf %261, %262 : vector<32x32xf32>
    %264 = arith.mulf %263, %263 : vector<32x32xf32>
    %cst_122 = arith.constant dense<0.000000e+00> : vector<32xf32>
    %265 = vector.multi_reduction <add>, %264, %cst_122 [1] : vector<32x32xf32> to vector<32xf32>
    %266 = vector.shape_cast %265 : vector<32xf32> to vector<32x1xf32>
    %cst_123 = arith.constant 3.200000e+01 : f32
    %267 = vector.broadcast %cst_123 : f32 to vector<32x1xf32>
    %268 = arith.divf %266, %267 : vector<32x1xf32>
    %cst_124 = arith.constant 1.1920929E-7 : f32
    %269 = vector.broadcast %cst_124 : f32 to vector<32x1xf32>
    %270 = arith.addf %268, %269 : vector<32x1xf32>
    %271 = math.rsqrt %270 : vector<32x1xf32>
    %272 = vector.broadcast %271 : vector<32x1xf32> to vector<32x32xf32>
    %273 = arith.mulf %263, %272 : vector<32x32xf32>
    %274 = vector.broadcast %149 : vector<1x32xf32> to vector<32x32xf32>
    %275 = arith.mulf %273, %274 : vector<32x32xf32>
    %cst_125 = arith.constant dense<0.000000e+00> : vector<32x64xf32>
    %276 = tpu.matmul %275, %159, %cst_125 {dimension_numbers = #tpu.dot_dimension_numbers<[1], [0], [0], [1], [0, 0, 1, 1], [], []>} : vector<32x32xf32>, vector<32x64xf32>, vector<32x64xf32> -> vector<32x64xf32>
    %277 = vector.broadcast %161 : vector<1x64xf32> to vector<32x64xf32>
    %278 = arith.addf %276, %277 : vector<32x64xf32>
    %cst_126 = arith.constant 0.000000e+00 : f32
    %279 = vector.broadcast %cst_126 : f32 to vector<32x64xf32>
    %280 = arith.maximumf %278, %279 : vector<32x64xf32>
    %281 = arith.mulf %280, %280 : vector<32x64xf32>
    %cst_127 = arith.constant dense<0.000000e+00> : vector<32x32xf32>
    %282 = tpu.matmul %281, %163, %cst_127 {dimension_numbers = #tpu.dot_dimension_numbers<[1], [0], [0], [1], [0, 0, 1, 1], [], []>} : vector<32x64xf32>, vector<64x32xf32>, vector<32x32xf32> -> vector<32x32xf32>
    %283 = arith.addf %263, %282 : vector<32x32xf32>
    %284 = vector.broadcast %165 : vector<1x32xf32> to vector<32x32xf32>
    %285 = arith.addf %283, %284 : vector<32x32xf32>
    %c0_128 = arith.constant 0 : index
    %c0_129 = arith.constant 0 : index
    %286 = vector.load %arg14[%c0_128, %c0_129] : memref<1x32xf32, #tpu.memory_space<vmem>>, vector<1x32xf32>
    %287 = arith.mulf %285, %285 : vector<32x32xf32>
    %cst_130 = arith.constant dense<0.000000e+00> : vector<32xf32>
    %288 = vector.multi_reduction <add>, %287, %cst_130 [1] : vector<32x32xf32> to vector<32xf32>
    %289 = vector.shape_cast %288 : vector<32xf32> to vector<32x1xf32>
    %cst_131 = arith.constant 3.200000e+01 : f32
    %290 = vector.broadcast %cst_131 : f32 to vector<32x1xf32>
    %291 = arith.divf %289, %290 : vector<32x1xf32>
    %cst_132 = arith.constant 1.1920929E-7 : f32
    %292 = vector.broadcast %cst_132 : f32 to vector<32x1xf32>
    %293 = arith.addf %291, %292 : vector<32x1xf32>
    %294 = math.rsqrt %293 : vector<32x1xf32>
    %295 = vector.broadcast %294 : vector<32x1xf32> to vector<32x32xf32>
    %296 = arith.mulf %285, %295 : vector<32x32xf32>
    %297 = vector.broadcast %286 : vector<1x32xf32> to vector<32x32xf32>
    %298 = arith.mulf %296, %297 : vector<32x32xf32>
    %c0_133 = arith.constant 0 : index
    %c0_134 = arith.constant 0 : index
    %299 = vector.load %arg15[%c0_133, %c0_134] : memref<32x32xf32, #tpu.memory_space<vmem>>, vector<32x32xf32>
    tpu.vector_store %arg15[%c0_133, %c0_134], %298 {strides = array<i32>} : memref<32x32xf32, #tpu.memory_space<vmem>>, vector<32x32xf32>,
    return
  }
}

</mosaic_0001>

<llo_original>
// kernel: vit_forward.1
$region0: #{vit_forward.1}
  #allocation0 [shape = 'u32[]', space=smem, size = 0x4, offset = 0x4, fixed_abs, tag = 'smem constant byte address 0x4 - core index']
  #allocation1 [shape = 'u32[144,128]{1,0:T(1,128)}', space=vmem, size = 0x12000, scoped, tag = 'internal scratch']
  %s0 = inlined_call_operand.vmem [shape: f32[32,64], index: 0, kind: input, shape index: {}]
  %s1 = inlined_call_operand.vmem [shape: f32[64,32], index: 1, kind: input, shape index: {}]
  %s2 = inlined_call_operand.vmem [shape: f32[32,32], index: 2, kind: input, shape index: {}]
  %s3 = inlined_call_operand.vmem [shape: f32[32,32], index: 3, kind: input, shape index: {}]
  %s4 = inlined_call_operand.vmem [shape: f32[2,32,96], index: 4, kind: input, shape index: {}]
  %s5 = inlined_call_operand.vmem [shape: f32[2,1,96], index: 5, kind: input, shape index: {}]
  %s6 = inlined_call_operand.vmem [shape: f32[2,32,32], index: 6, kind: input, shape index: {}]
  %s7 = inlined_call_operand.vmem [shape: f32[2,1,32], index: 7, kind: input, shape index: {}]
  %s8 = inlined_call_operand.vmem [shape: f32[2,32,64], index: 8, kind: input, shape index: {}]
  %s9 = inlined_call_operand.vmem [shape: f32[2,1,64], index: 9, kind: input, shape index: {}]
  %s10 = inlined_call_operand.vmem [shape: f32[2,64,32], index: 10, kind: input, shape index: {}]
  %s11 = inlined_call_operand.vmem [shape: f32[2,1,32], index: 11, kind: input, shape index: {}]
  %s12 = inlined_call_operand.vmem [shape: f32[2,1,32], index: 12, kind: input, shape index: {}]
  %s13 = inlined_call_operand.vmem [shape: f32[2,1,32], index: 13, kind: input, shape index: {}]
  %s14 = inlined_call_operand.vmem [shape: f32[1,32], index: 14, kind: input, shape index: {}]
  %s15 = inlined_call_operand.hbm [shape: f32[32,32], index: 15, kind: output, shape index: {}]
  %s16 = sld [smem:[#allocation0]]
  $region70: #{vit_forward.1} parent=0
    _
  %s18 = ssub.s32 1, %s16
  %s19 = scalar_select 0, %s18, %s16
  $region1: #{vit_forward.1} parent=0
    #allocation2 [shape = 'u8[16384]{0}', space=vmem, size = 0x4000, scoped, tag = 'output window, operand 0, single buffered']
    #allocation3 [shape = 's32[1]{0}', space=sflag, size = 0x4, scoped, tag = 'scoped memory for vit_forward.1']
    %20 = vsyncpa [#allocation3], 0
    // Predicated region
    $region2: #{vit_forward.1} parent=1 // pred_check
      _
    $region3: #{vit_forward.1} parent=1 // pred_check_branch
      %22 = sbr.rel (0) target = $region5
    $region4: #{vit_forward.1} parent=1 // pred_region
      _
    $region5: #{vit_forward.1} parent=1 // pred_fallthru
      _
    // Predicated region
    $region6: #{vit_forward.1} parent=1 // pred_check
      _
    $region7: #{vit_forward.1} parent=1 // pred_check_branch
      %24 = sbr.rel (0) target = $region9
    $region8: #{vit_forward.1} parent=1 // pred_region
      _
    $region9: #{vit_forward.1} parent=1 // pred_fallthru
      _
    // Predicated region
    $region10: #{vit_forward.1} parent=1 // pred_check
      _
    $region11: #{vit_forward.1} parent=1 // pred_check_branch
      %26 = sbr.rel (0) target = $region13
    $region12: #{vit_forward.1} parent=1 // pred_region
      _
    $region13: #{vit_forward.1} parent=1 // pred_fallthru
      _
    // Predicated region
    $region14: #{vit_forward.1} parent=1 // pred_check
      _
    $region15: #{vit_forward.1} parent=1 // pred_check_branch
      %28 = sbr.rel (0) target = $region17
    $region16: #{vit_forward.1} parent=1 // pred_region
      _
    $region17: #{vit_forward.1} parent=1 // pred_fallthru
      _
    // Predicated region
    $region18: #{vit_forward.1} parent=1 // pred_check
      _
    $region19: #{vit_forward.1} parent=1 // pred_check_branch
      %30 = sbr.rel (0) target = $region21
    $region20: #{vit_forward.1} parent=1 // pred_region
      _
    $region21: #{vit_forward.1} parent=1 // pred_fallthru
      _
    // Predicated region
    $region22: #{vit_forward.1} parent=1 // pred_check
      _
    $region23: #{vit_forward.1} parent=1 // pred_check_branch
      %32 = sbr.rel (0) target = $region25
    $region24: #{vit_forward.1} parent=1 // pred_region
      _
    $region25: #{vit_forward.1} parent=1 // pred_fallthru
      _
    // Predicated region
    $region26: #{vit_forward.1} parent=1 // pred_check
      _
    $region27: #{vit_forward.1} parent=1 // pred_check_branch
      %34 = sbr.rel (0) target = $region29
    $region28: #{vit_forward.1} parent=1 // pred_region
      _
    $region29: #{vit_forward.1} parent=1 // pred_fallthru
      _
    // Predicated region
    $region30: #{vit_forward.1} parent=1 // pred_check
      _
    $region31: #{vit_forward.1} parent=1 // pred_check_branch
      %36 = sbr.rel (0) target = $region33
    $region32: #{vit_forward.1} parent=1 // pred_region
      _
    $region33: #{vit_forward.1} parent=1 // pred_fallthru
      _
    // Predicated region
    $region34: #{vit_forward.1} parent=1 // pred_check
      _
    $region35: #{vit_forward.1} parent=1 // pred_check_branch
      %38 = sbr.rel (0) target = $region37
    $region36: #{vit_forward.1} parent=1 // pred_region
      _
    $region37: #{vit_forward.1} parent=1 // pred_fallthru
      _
    // Predicated region
    $region38: #{vit_forward.1} parent=1 // pred_check
      _
    $region39: #{vit_forward.1} parent=1 // pred_check_branch
      %40 = sbr.rel (0) target = $region41
    $region40: #{vit_forward.1} parent=1 // pred_region
      _
    $region41: #{vit_forward.1} parent=1 // pred_fallthru
      _
    // Predicated region
    $region42: #{vit_forward.1} parent=1 // pred_check
      _
    $region43: #{vit_forward.1} parent=1 // pred_check_branch
      %42 = sbr.rel (0) target = $region45
    $region44: #{vit_forward.1} parent=1 // pred_region
      _
    $region45: #{vit_forward.1} parent=1 // pred_fallthru
      _
    // Predicated region
    $region46: #{vit_forward.1} parent=1 // pred_check
      _
    $region47: #{vit_forward.1} parent=1 // pred_check_branch
      %44 = sbr.rel (0) target = $region49
    $region48: #{vit_forward.1} parent=1 // pred_region
      _
    $region49: #{vit_forward.1} parent=1 // pred_fallthru
      _
    // Predicated region
    $region50: #{vit_forward.1} parent=1 // pred_check
      _
    $region51: #{vit_forward.1} parent=1 // pred_check_branch
      %46 = sbr.rel (0) target = $region53
    $region52: #{vit_forward.1} parent=1 // pred_region
      _
    $region53: #{vit_forward.1} parent=1 // pred_fallthru
      _
    // Predicated region
    $region54: #{vit_forward.1} parent=1 // pred_check
      _
    $region55: #{vit_forward.1} parent=1 // pred_check_branch
      %48 = sbr.rel (0) target = $region57
    $region56: #{vit_forward.1} parent=1 // pred_region
      _
    $region57: #{vit_forward.1} parent=1 // pred_fallthru
      _
    // Predicated region
    $region58: #{vit_forward.1} parent=1 // pred_check
      _
    $region59: #{vit_forward.1} parent=1 // pred_check_branch
      %50 = sbr.rel (0) target = $region61
    $region60: #{vit_forward.1} parent=1 // pred_region
      _
    $region61: #{vit_forward.1} parent=1 // pred_fallthru
      _
    %v51 = vld [vmem:[%s0] sm:$0xff]
    %v52 = vld [vmem:[%s0 + $0x8] sm:$0xff]
    %v53 = vld [vmem:[%s0 + $0x10] sm:$0xff]
    %v54 = vld [vmem:[%s0 + $0x18] sm:$0xff]
    %v55 = vld [vmem:[%s1] sm:$0xff]
    %v56 = vld [vmem:[%s1 + $0x8] sm:$0xff]
    %v57 = vld [vmem:[%s1 + $0x10] sm:$0xff]
    %v58 = vld [vmem:[%s1 + $0x18] sm:$0xff]
    %v59 = vld [vmem:[%s1 + $0x20] sm:$0xff]
    %v60 = vld [vmem:[%s1 + $0x28] sm:$0xff]
    %v61 = vld [vmem:[%s1 + $0x30] sm:$0xff]
    %v62 = vld [vmem:[%s1 + $0x38] sm:$0xff]
    %v63 = vld [vmem:[%s2] sm:$0xff]
    %v64 = vld [vmem:[%s2 + $0x8] sm:$0xff]
    %v65 = vld [vmem:[%s2 + $0x10] sm:$0xff]
    %v66 = vld [vmem:[%s2 + $0x18] sm:$0xff]
    %vm67 = vcmask 523264
    %v69 = vsel %vm67, %v51, 0
    %v72 = vsel %vm67, %v52, 0
    %v75 = vsel %vm67, %v53, 0
    %v78 = vsel %vm67, %v54, 0
    %80 = vmatprep.subr.mxu0 0.0
    %81 = vmatpush1.msra.mxu0 %v55
    %82 = vmatprep.subr.mxu0 0.0
    %83 = vmatpush1.msra.mxu0 %v56
    %84 = vmatprep.subr.mxu0 0.0
    %85 = vmatpush1.msra.mxu0 %v57
    %86 = vmatprep.subr.mxu0 0.0
    %87 = vmatpush1.msra.mxu0 %v58
    %88 = vmatprep.subr.mxu0 0.0
    %89 = vmatpush1.msra.mxu0 %v59
    %90 = vmatprep.subr.mxu0 0.0
    %91 = vmatpush1.msra.mxu0 %v60
    %92 = vmatprep.subr.mxu0 0.0
    %93 = vmatpush1.msra.mxu0 %v61
    %94 = vmatprep.subr.mxu0 0.0
    %95 = vmatpush1.msra.mxu0 %v62
    %96 = vmatprep.subr.mxu0 0.0
    %97 = vmatpush1.msra.mxu0 0.0
    %98 = vmatprep.subr.mxu0 0.0
    %99 = vmatpush1.msra.mxu0 0.0
    %100 = vmatprep.subr.mxu0 0.0
    %101 = vmatpush1.msra.mxu0 0.0
    %102 = vmatprep.subr.mxu0 0.0
    %103 = vmatpush1.msra.mxu0 0.0
    %104 = vmatprep.subr.mxu0 0.0
    %105 = vmatpush1.msra.mxu0 0.0
    %106 = vmatprep.subr.mxu0 0.0
    %107 = vmatpush1.msra.mxu0 0.0
    %108 = vmatprep.subr.mxu0 0.0
    %109 = vmatpush1.msra.mxu0 0.0
    %110 = vmatprep.subr.mxu0 0.0
    %111 = vmatpush1.msra.mxu0 0.0
    %112 = vmatprep.subr.mxu0 0.0
    %113 = vmatpush1.msra.mxu0 0.0
    %114 = vmatprep.subr.mxu0 0.0
    %115 = vmatpush1.msra.mxu0 0.0
    %116 = vmatprep.subr.mxu0 0.0
    %117 = vmatpush1.msra.mxu0 0.0
    %118 = vmatprep.subr.mxu0 0.0
    %119 = vmatpush1.msra.mxu0 0.0
    %120 = vmatprep.subr.mxu0 0.0
    %121 = vmatpush1.msra.mxu0 0.0
    %122 = vmatprep.subr.mxu0 0.0
    %123 = vmatpush1.msra.mxu0 0.0
    %124 = vmatprep.subr.mxu0 0.0
    %125 = vmatpush1.msra.mxu0 0.0
    %126 = vmatprep.subr.mxu0 0.0
    %127 = vmatpush1.msra.mxu0 0.0
    %128 = vmatprep.subr.mxu0 0.0
    %129 = vmatpush1.msra.mxu0 0.0
    %130 = vmatprep.subr.mxu0 0.0
    %131 = vmatpush1.msra.mxu0 0.0
    %132 = vmatprep.subr.mxu0 0.0
    %133 = vmatpush1.msra.mxu0 0.0
    %134 = vmatprep.subr.mxu0 0.0
    %135 = vmatpush1.msra.mxu0 0.0
    %136 = vmatprep.subr.mxu0 0.0
    %137 = vmatpush1.msra.mxu0 0.0
    %138 = vmatprep.subr.mxu0 0.0
    %139 = vmatpush1.msra.mxu0 0.0
    %140 = vmatprep.subr.mxu0 0.0
    %141 = vmatpush1.msra.mxu0 0.0
    %142 = vmatprep.subr.mxu0 0.0
    %143 = vmatpush1.msra.mxu0 0.0
    %144 = vmatprep.mubr.f32.mxu0 0.0
    %145 = vmatmul.mubr.f32.gmra.mrb[0].mxu0 %v69
    %v146 = vpop.f32.mrb[0].mxu0
    %v147 = vadd.f32 %v63, %v146
    %v148 = vpop.f32.mrb[0].mxu0
    %149 = vmatprep.mubr.f32.mxu0 0.0
    %150 = vmatmul.mubr.f32.gmra.mrb[0].mxu0 %v72
    %v151 = vpop.f32.mrb[0].mxu0
    %v152 = vadd.f32 %v64, %v151
    %v153 = vpop.f32.mrb[0].mxu0
    %154 = vmatprep.mubr.f32.mxu0 0.0
    %155 = vmatmul.mubr.f32.gmra.mrb[0].mxu0 %v75
    %v156 = vpop.f32.mrb[0].mxu0
    %v157 = vadd.f32 %v65, %v156
    %v158 = vpop.f32.mrb[0].mxu0
    %159 = vmatprep.mubr.f32.mxu0 0.0
    %160 = vmatmul.mubr.f32.gmra.mrb[0].mxu0 %v78
    %v161 = vpop.f32.mrb[0].mxu0
    %v162 = vadd.f32 %v66, %v161
    %v163 = vpop.f32.mrb[0].mxu0
    %164 = vdwg.mxu0
    %v165 = vld [vmem:[%s3] sm:$0xff]
    %v166 = vld [vmem:[%s3 + $0x8] sm:$0xff]
    %v167 = vld [vmem:[%s3 + $0x10] sm:$0xff]
    %v168 = vld [vmem:[%s3 + $0x18] sm:$0xff]
    %v169 = vld [vmem:[%s12] sm:$0x1]
    %v170 = vld [vmem:[%s13] sm:$0x1]
    %v171 = vld [vmem:[%s4] sm:$0xff]
    %v172 = vld [vmem:[%s4 + $0x8] sm:$0xff]
    %v173 = vld [vmem:[%s4 + $0x10] sm:$0xff]
    %v174 = vld [vmem:[%s4 + $0x18] sm:$0xff]
    %v175 = vld [vmem:[%s5] sm:$0x1]
    %v176 = vld [vmem:[%s6] sm:$0xff]
    %v177 = vld [vmem:[%s6 + $0x8] sm:$0xff]
    %v178 = vld [vmem:[%s6 + $0x10] sm:$0xff]
    %v179 = vld [vmem:[%s6 + $0x18] sm:$0xff]
    %v180 = vld [vmem:[%s7] sm:$0x1]
    %v181 = vld [vmem:[%s8] sm:$0xff]
    %v182 = vld [vmem:[%s8 + $0x8] sm:$0xff]
    %v183 = vld [vmem:[%s8 + $0x10] sm:$0xff]
    %v184 = vld [vmem:[%s8 + $0x18] sm:$0xff]
    %v185 = vld [vmem:[%s9] sm:$0x1]
    %v186 = vld [vmem:[%s10] sm:$0xff]
    %v187 = vld [vmem:[%s10 + $0x8] sm:$0xff]
    %v188 = vld [vmem:[%s10 + $0x10] sm:$0xff]
    %v189 = vld [vmem:[%s10 + $0x18] sm:$0xff]
    %v190 = vld [vmem:[%s10 + $0x20] sm:$0xff]
    %v191 = vld [vmem:[%s10 + $0x28] sm:$0xff]
    %v192 = vld [vmem:[%s10 + $0x30] sm:$0xff]
    %v193 = vld [vmem:[%s10 + $0x38] sm:$0xff]
    %v194 = vld [vmem:[%s11] sm:$0x1]
    %v195 = vmul.f32 %v147, %v147
    %v196 = vmul.f32 %v152, %v152
    %v197 = vmul.f32 %v157, %v157
    %v198 = vmul.f32 %v162, %v162
    %vm199 = vcmask 261120
    %v200 = vsel %vm199, %v195, 0.0
    %201 = vadd.xlane.f32.xlu0 %v200
    %v202 = vpop.xlane.xlu0 %201
    %v203 = vsel %vm199, %v196, 0.0
    %204 = vadd.xlane.f32.xlu0 %v203
    %v205 = vpop.xlane.xlu0 %204
    %v206 = vsel %vm199, %v197, 0.0
    %207 = vadd.xlane.f32.xlu0 %v206
    %v208 = vpop.xlane.xlu0 %207
    %v209 = vsel %vm199, %v198, 0.0
    %210 = vadd.xlane.f32.xlu0 %v209
    %v211 = vpop.xlane.xlu0 %210
    %v212 = vrcp.pop 32.0
    %v213 = vmul.f32 %v202, %v212
    %v214 = vmul.f32 %v205, %v212
    %v215 = vmul.f32 %v208, %v212
    %v216 = vmul.f32 %v211, %v212
    %v217 = vadd.f32 %v213, 1.1920929e-07
    %v218 = vadd.f32 %v214, 1.1920929e-07
    %v219 = vadd.f32 %v215, 1.1920929e-07
    %v220 = vadd.f32 %v216, 1.1920929e-07
    %v221 = vrsqrt.pop %v217
    %v222 = vrsqrt.pop %v218
    %v223 = vrsqrt.pop %v219
    %v224 = vrsqrt.pop %v220
    %v225 = vmul.f32 %v147, %v221
    %v226 = vmul.f32 %v152, %v222
    %v227 = vmul.f32 %v157, %v223
    %v228 = vmul.f32 %v162, %v224
    %v230 = vlaneseq
    %v231 = vshrl.u32 %v230, 7
    %v232 = vsub.s32 0, %v231
    %v233 = vrot.slane %v169, %v232
    %v235 = vmul.f32 %v225, %v233
    %v236 = vmul.f32 %v226, %v233
    %v237 = vmul.f32 %v227, %v233
    %v238 = vmul.f32 %v228, %v233
    %v240 = vlaneseq
    %v241 = vshrl.u32 %v240, 7
    %v242 = vsub.s32 0, %v241
    %v243 = vrot.slane %v175, %v242
    %v246 = vsel %vm199, %v235, 0
    %v249 = vsel %vm199, %v236, 0
    %v252 = vsel %vm199, %v237, 0
    %v255 = vsel %vm199, %v238, 0
    %257 = vmatprep.subr.mxu0 0.0
    %258 = vmatpush1.msra.mxu0 %v171
    %259 = vmatprep.subr.mxu0 0.0
    %260 = vmatpush1.msra.mxu0 %v172
    %261 = vmatprep.subr.mxu0 0.0
    %262 = vmatpush1.msra.mxu0 %v173
    %263 = vmatprep.subr.mxu0 0.0
    %264 = vmatpush1.msra.mxu0 %v174
    %265 = vmatprep.subr.mxu0 0.0
    %266 = vmatpush1.msra.mxu0 0.0
    %267 = vmatprep.subr.mxu0 0.0
    %268 = vmatpush1.msra.mxu0 0.0
    %269 = vmatprep.subr.mxu0 0.0
    %270 = vmatpush1.msra.mxu0 0.0
    %271 = vmatprep.subr.mxu0 0.0
    %272 = vmatpush1.msra.mxu0 0.0
    %273 = vmatprep.subr.mxu0 0.0
    %274 = vmatpush1.msra.mxu0 0.0
    %275 = vmatprep.subr.mxu0 0.0
    %276 = vmatpush1.msra.mxu0 0.0
    %277 = vmatprep.subr.mxu0 0.0
    %278 = vmatpush1.msra.mxu0 0.0
    %279 = vmatprep.subr.mxu0 0.0
    %280 = vmatpush1.msra.mxu0 0.0
    %281 = vmatprep.subr.mxu0 0.0
    %282 = vmatpush1.msra.mxu0 0.0
    %283 = vmatprep.subr.mxu0 0.0
    %284 = vmatpush1.msra.mxu0 0.0
    %285 = vmatprep.subr.mxu0 0.0
    %286 = vmatpush1.msra.mxu0 0.0
    %287 = vmatprep.subr.mxu0 0.0
    %288 = vmatpush1.msra.mxu0 0.0
    %289 = vmatprep.subr.mxu0 0.0
    %290 = vmatpush1.msra.mxu0 0.0
    %291 = vmatprep.subr.mxu0 0.0
    %292 = vmatpush1.msra.mxu0 0.0
    %293 = vmatprep.subr.mxu0 0.0
    %294 = vmatpush1.msra.mxu0 0.0
    %295 = vmatprep.subr.mxu0 0.0
    %296 = vmatpush1.msra.mxu0 0.0
    %297 = vmatprep.subr.mxu0 0.0
    %298 = vmatpush1.msra.mxu0 0.0
    %299 = vmatprep.subr.mxu0 0.0
    %300 = vmatpush1.msra.mxu0 0.0
    %301 = vmatprep.subr.mxu0 0.0
    %302 = vmatpush1.msra.mxu0 0.0
    %303 = vmatprep.subr.mxu0 0.0
    %304 = vmatpush1.msra.mxu0 0.0
    %305 = vmatprep.subr.mxu0 0.0
    %306 = vmatpush1.msra.mxu0 0.0
    %307 = vmatprep.subr.mxu0 0.0
    %308 = vmatpush1.msra.mxu0 0.0
    %309 = vmatprep.subr.mxu0 0.0
    %310 = vmatpush1.msra.mxu0 0.0
    %311 = vmatprep.subr.mxu0 0.0
    %312 = vmatpush1.msra.mxu0 0.0
    %313 = vmatprep.subr.mxu0 0.0
    %314 = vmatpush1.msra.mxu0 0.0
    %315 = vmatprep.subr.mxu0 0.0
    %316 = vmatpush1.msra.mxu0 0.0
    %317 = vmatprep.subr.mxu0 0.0
    %318 = vmatpush1.msra.mxu0 0.0
    %319 = vmatprep.subr.mxu0 0.0
    %320 = vmatpush1.msra.mxu0 0.0
    %321 = vmatprep.mubr.f32.mxu0 0.0
    %322 = vmatmul.mubr.f32.gmra.mrb[0].mxu0 %v246
    %v323 = vpop.f32.mrb[0].mxu0
    %v324 = vadd.f32 %v243, %v323
    %v325 = vpop.f32.mrb[0].mxu0
    %326 = vmatprep.mubr.f32.mxu0 0.0
    %327 = vmatmul.mubr.f32.gmra.mrb[0].mxu0 %v249
    %v328 = vpop.f32.mrb[0].mxu0
    %v329 = vadd.f32 %v243, %v328
    %v330 = vpop.f32.mrb[0].mxu0
    %331 = vmatprep.mubr.f32.mxu0 0.0
    %332 = vmatmul.mubr.f32.gmra.mrb[0].mxu0 %v252
    %v333 = vpop.f32.mrb[0].mxu0
    %v334 = vadd.f32 %v243, %v333
    %v335 = vpop.f32.mrb[0].mxu0
    %336 = vmatprep.mubr.f32.mxu0 0.0
    %337 = vmatmul.mubr.f32.gmra.mrb[0].mxu0 %v255
    %v338 = vpop.f32.mrb[0].mxu0
    %v339 = vadd.f32 %v243, %v338
    %v340 = vpop.f32.mrb[0].mxu0
    %341 = vdwg.mxu0
    %346 = vrot.lane.b32.xlu0 %v324, 96
    %v347 = vpop.permute.xlu0 %346
    %348 = vrot.lane.b32.xlu0 %v329, 96
    %v349 = vpop.permute.xlu0 %348
    %350 = vrot.lane.b32.xlu0 %v334, 96
    %v351 = vpop.permute.xlu0 %350
    %352 = vrot.lane.b32.xlu0 %v339, 96
    %v353 = vpop.permute.xlu0 %352
    %vm354 = vcmask 64512
    %v355 = vsel %vm354, %v324, 0
    %v357 = vsel %vm354, %v329, 0
    %v359 = vsel %vm354, %v334, 0
    %v361 = vsel %vm354, %v339, 0
    %v363 = vsel %vm354, %v347, 0
    %v365 = vsel %vm354, %v349, 0
    %v367 = vsel %vm354, %v351, 0
    %v369 = vsel %vm354, %v353, 0
    %371 = vmatprep.subr.mxu0 0.0
    %372 = vmatpush1.xpose.msra.mxu0 %v363
    %373 = vmatprep.subr.mxu0 0.0
    %374 = vmatpush1.xpose.msra.mxu0 %v365
    %375 = vmatprep.subr.mxu0 0.0
    %376 = vmatpush1.xpose.msra.mxu0 %v367
    %377 = vmatprep.subr.mxu0 0.0
    %378 = vmatpush1.xpose.msra.mxu0 %v369
    %379 = vmatprep.subr.mxu0 0.0
    %380 = vmatpush1.xpose.msra.mxu0 0.0
    %381 = vmatprep.subr.mxu0 0.0
    %382 = vmatpush1.xpose.msra.mxu0 0.0
    %383 = vmatprep.subr.mxu0 0.0
    %384 = vmatpush1.xpose.msra.mxu0 0.0
    %385 = vmatprep.subr.mxu0 0.0
    %386 = vmatpush1.xpose.msra.mxu0 0.0
    %387 = vmatprep.subr.mxu0 0.0
    %388 = vmatpush1.xpose.msra.mxu0 0.0
    %389 = vmatprep.subr.mxu0 0.0
    %390 = vmatpush1.xpose.msra.mxu0 0.0
    %391 = vmatprep.subr.mxu0 0.0
    %392 = vmatpush1.xpose.msra.mxu0 0.0
    %393 = vmatprep.subr.mxu0 0.0
    %394 = vmatpush1.xpose.msra.mxu0 0.0
    %395 = vmatprep.subr.mxu0 0.0
    %396 = vmatpush1.xpose.msra.mxu0 0.0
    %397 = vmatprep.subr.mxu0 0.0
    %398 = vmatpush1.xpose.msra.mxu0 0.0
    %399 = vmatprep.subr.mxu0 0.0
    %400 = vmatpush1.xpose.msra.mxu0 0.0
    %401 = vmatprep.subr.mxu0 0.0
    %402 = vmatpush1.xpose.msra.mxu0 0.0
    %403 = vmatprep.subr.mxu0 0.0
    %404 = vmatpush1.xpose.msra.mxu0 0.0
    %405 = vmatprep.subr.mxu0 0.0
    %406 = vmatpush1.xpose.msra.mxu0 0.0
    %407 = vmatprep.subr.mxu0 0.0
    %408 = vmatpush1.xpose.msra.mxu0 0.0
    %409 = vmatprep.subr.mxu0 0.0
    %410 = vmatpush1.xpose.msra.mxu0 0.0
    %411 = vmatprep.subr.mxu0 0.0
    %412 = vmatpush1.xpose.msra.mxu0 0.0
    %413 = vmatprep.subr.mxu0 0.0
    %414 = vmatpush1.xpose.msra.mxu0 0.0
    %415 = vmatprep.subr.mxu0 0.0
    %416 = vmatpush1.xpose.msra.mxu0 0.0
    %417 = vmatprep.subr.mxu0 0.0
    %418 = vmatpush1.xpose.msra.mxu0 0.0
    %419 = vmatprep.subr.mxu0 0.0
    %420 = vmatpush1.xpose.msra.mxu0 0.0
    %421 = vmatprep.subr.mxu0 0.0
    %422 = vmatpush1.xpose.msra.mxu0 0.0
    %423 = vmatprep.subr.mxu0 0.0
    %424 = vmatpush1.xpose.msra.mxu0 0.0
    %425 = vmatprep.subr.mxu0 0.0
    %426 = vmatpush1.xpose.msra.mxu0 0.0
    %427 = vmatprep.subr.mxu0 0.0
    %428 = vmatpush1.xpose.msra.mxu0 0.0
    %429 = vmatprep.subr.mxu0 0.0
    %430 = vmatpush1.xpose.msra.mxu0 0.0
    %431 = vmatprep.subr.mxu0 0.0
    %432 = vmatpush1.xpose.msra.mxu0 0.0
    %433 = vmatprep.subr.mxu0 0.0
    %434 = vmatpush1.xpose.msra.mxu0 0.0
    %435 = vmatprep.mubr.f32.mxu0 0.0
    %436 = vmatmul.mubr.f32.gmra.mrb[0].mxu0 %v355
    %v437 = vpop.f32.mrb[0].mxu0
    %v438 = vadd.f32 %v165, %v437
    %v439 = vpop.f32.mrb[0].mxu0
    %440 = vmatprep.mubr.f32.mxu0 0.0
    %441 = vmatmul.mubr.f32.gmra.mrb[0].mxu0 %v357
    %v442 = vpop.f32.mrb[0].mxu0
    %v443 = vadd.f32 %v166, %v442
    %v444 = vpop.f32.mrb[0].mxu0
    %445 = vmatprep.mubr.f32.mxu0 0.0
    %446 = vmatmul.mubr.f32.gmra.mrb[0].mxu0 %v359
    %v447 = vpop.f32.mrb[0].mxu0
    %v448 = vadd.f32 %v167, %v447
    %v449 = vpop.f32.mrb[0].mxu0
    %450 = vmatprep.mubr.f32.mxu0 0.0
    %451 = vmatmul.mubr.f32.gmra.mrb[0].mxu0 %v361
    %v452 = vpop.f32.mrb[0].mxu0
    %v453 = vadd.f32 %v168, %v452
    %v454 = vpop.f32.mrb[0].mxu0
    %455 = vdwg.mxu0
    %v456 = vsel %vm199, %v438, -inf
    %457 = vmax.xlane.f32.xlu0 %v456
    %v458 = vpop.xlane.xlu0 %457
    %v459 = vsel %vm199, %v443, -inf
    %460 = vmax.xlane.f32.xlu0 %v459
    %v461 = vpop.xlane.xlu0 %460
    %v462 = vsel %vm199, %v448, -inf
    %463 = vmax.xlane.f32.xlu0 %v462
    %v464 = vpop.xlane.xlu0 %463
    %v465 = vsel %vm199, %v453, -inf
    %466 = vmax.xlane.f32.xlu0 %v465
    %v467 = vpop.xlane.xlu0 %466
    %v468 = vsub.f32 %v438, %v458
    %v469 = vsub.f32 %v443, %v461
    %v470 = vsub.f32 %v448, %v464
    %v471 = vsub.f32 %v453, %v467
    %v472 = vmul.f32 %v468, 1.442695
    %v473 = vpow.pop %v472
    %v474 = vmul.f32 %v469, 1.442695
    %v475 = vpow.pop %v474
    %v476 = vmul.f32 %v470, 1.442695
    %v477 = vpow.pop %v476
    %v478 = vmul.f32 %v471, 1.442695
    %v479 = vpow.pop %v478
    %v480 = vsel %vm199, %v473, 0.0
    %481 = vadd.xlane.f32.xlu0 %v480
    %v482 = vpop.xlane.xlu0 %481
    %v483 = vsel %vm199, %v475, 0.0
    %484 = vadd.xlane.f32.xlu0 %v483
    %v485 = vpop.xlane.xlu0 %484
    %v486 = vsel %vm199, %v477, 0.0
    %487 = vadd.xlane.f32.xlu0 %v486
    %v488 = vpop.xlane.xlu0 %487
    %v489 = vsel %vm199, %v479, 0.0
    %490 = vadd.xlane.f32.xlu0 %v489
    %v491 = vpop.xlane.xlu0 %490
    %v492 = vrcp.pop %v482
    %v493 = vrcp.pop %v485
    %v494 = vrcp.pop %v488
    %v495 = vrcp.pop %v491
    %v496 = vmul.f32 %v473, %v492
    %v497 = vmul.f32 %v475, %v493
    %v498 = vmul.f32 %v477, %v494
    %v499 = vmul.f32 %v479, %v495
    %500 = vrot.lane.b32.xlu0 %v324, 64
    %v501 = vpop.permute.xlu0 %500
    %502 = vrot.lane.b32.xlu0 %v329, 64
    %v503 = vpop.permute.xlu0 %502
    %504 = vrot.lane.b32.xlu0 %v334, 64
    %v505 = vpop.permute.xlu0 %504
    %506 = vrot.lane.b32.xlu0 %v339, 64
    %v507 = vpop.permute.xlu0 %506
    %v513 = vsel %vm199, %v496, 0
    %v516 = vsel %vm199, %v497, 0
    %v519 = vsel %vm199, %v498, 0
    %v522 = vsel %vm199, %v499, 0
    %524 = vmatprep.subr.mxu0 0.0
    %525 = vmatpush1.msra.mxu0 %v501
    %526 = vmatprep.subr.mxu0 0.0
    %527 = vmatpush1.msra.mxu0 %v503
    %528 = vmatprep.subr.mxu0 0.0
    %529 = vmatpush1.msra.mxu0 %v505
    %530 = vmatprep.subr.mxu0 0.0
    %531 = vmatpush1.msra.mxu0 %v507
    %532 = vmatprep.subr.mxu0 0.0
    %533 = vmatpush1.msra.mxu0 0.0
    %534 = vmatprep.subr.mxu0 0.0
    %535 = vmatpush1.msra.mxu0 0.0
    %536 = vmatprep.subr.mxu0 0.0
    %537 = vmatpush1.msra.mxu0 0.0
    %538 = vmatprep.subr.mxu0 0.0
    %539 = vmatpush1.msra.mxu0 0.0
    %540 = vmatprep.subr.mxu0 0.0
    %541 = vmatpush1.msra.mxu0 0.0
    %542 = vmatprep.subr.mxu0 0.0
    %543 = vmatpush1.msra.mxu0 0.0
    %544 = vmatprep.subr.mxu0 0.0
    %545 = vmatpush1.msra.mxu0 0.0
    %546 = vmatprep.subr.mxu0 0.0
    %547 = vmatpush1.msra.mxu0 0.0
    %548 = vmatprep.subr.mxu0 0.0
    %549 = vmatpush1.msra.mxu0 0.0
    %550 = vmatprep.subr.mxu0 0.0
    %551 = vmatpush1.msra.mxu0 0.0
    %552 = vmatprep.subr.mxu0 0.0
    %553 = vmatpush1.msra.mxu0 0.0
    %554 = vmatprep.subr.mxu0 0.0
    %555 = vmatpush1.msra.mxu0 0.0
    %556 = vmatprep.subr.mxu0 0.0
    %557 = vmatpush1.msra.mxu0 0.0
    %558 = vmatprep.subr.mxu0 0.0
    %559 = vmatpush1.msra.mxu0 0.0
    %560 = vmatprep.subr.mxu0 0.0
    %561 = vmatpush1.msra.mxu0 0.0
    %562 = vmatprep.subr.mxu0 0.0
    %563 = vmatpush1.msra.mxu0 0.0
    %564 = vmatprep.subr.mxu0 0.0
    %565 = vmatpush1.msra.mxu0 0.0
    %566 = vmatprep.subr.mxu0 0.0
    %567 = vmatpush1.msra.mxu0 0.0
    %568 = vmatprep.subr.mxu0 0.0
    %569 = vmatpush1.msra.mxu0 0.0
    %570 = vmatprep.subr.mxu0 0.0
    %571 = vmatpush1.msra.mxu0 0.0
    %572 = vmatprep.subr.mxu0 0.0
    %573 = vmatpush1.msra.mxu0 0.0
    %574 = vmatprep.subr.mxu0 0.0
    %575 = vmatpush1.msra.mxu0 0.0
    %576 = vmatprep.subr.mxu0 0.0
    %577 = vmatpush1.msra.mxu0 0.0
    %578 = vmatprep.subr.mxu0 0.0
    %579 = vmatpush1.msra.mxu0 0.0
    %580 = vmatprep.subr.mxu0 0.0
    %581 = vmatpush1.msra.mxu0 0.0
    %582 = vmatprep.subr.mxu0 0.0
    %583 = vmatpush1.msra.mxu0 0.0
    %584 = vmatprep.subr.mxu0 0.0
    %585 = vmatpush1.msra.mxu0 0.0
    %586 = vmatprep.subr.mxu0 0.0
    %587 = vmatpush1.msra.mxu0 0.0
    %588 = vmatprep.mubr.f32.mxu0 0.0
    %589 = vmatmul.mubr.f32.gmra.mrb[0].mxu0 %v513
    %v590 = vpop.f32.mrb[0].mxu0
    %v591 = vadd.f32 0.0, %v590
    %v592 = vpop.f32.mrb[0].mxu0
    %593 = vmatprep.mubr.f32.mxu0 0.0
    %594 = vmatmul.mubr.f32.gmra.mrb[0].mxu0 %v516
    %v595 = vpop.f32.mrb[0].mxu0
    %v596 = vadd.f32 0.0, %v595
    %v597 = vpop.f32.mrb[0].mxu0
    %598 = vmatprep.mubr.f32.mxu0 0.0
    %599 = vmatmul.mubr.f32.gmra.mrb[0].mxu0 %v519
    %v600 = vpop.f32.mrb[0].mxu0
    %v601 = vadd.f32 0.0, %v600
    %v602 = vpop.f32.mrb[0].mxu0
    %603 = vmatprep.mubr.f32.mxu0 0.0
    %604 = vmatmul.mubr.f32.gmra.mrb[0].mxu0 %v522
    %v605 = vpop.f32.mrb[0].mxu0
    %v606 = vadd.f32 0.0, %v605
    %v607 = vpop.f32.mrb[0].mxu0
    %608 = vdwg.mxu0
    %609 = vrot.lane.b32.xlu0 %v324, 120
    %v610 = vpop.permute.xlu0 %609
    %611 = vrot.lane.b32.xlu0 %v329, 120
    %v612 = vpop.permute.xlu0 %611
    %613 = vrot.lane.b32.xlu0 %v334, 120
    %v614 = vpop.permute.xlu0 %613
    %615 = vrot.lane.b32.xlu0 %v339, 120
    %v616 = vpop.permute.xlu0 %615
    %617 = vrot.lane.b32.xlu0 %v324, 88
    %v618 = vpop.permute.xlu0 %617
    %619 = vrot.lane.b32.xlu0 %v329, 88
    %v620 = vpop.permute.xlu0 %619
    %621 = vrot.lane.b32.xlu0 %v334, 88
    %v622 = vpop.permute.xlu0 %621
    %623 = vrot.lane.b32.xlu0 %v339, 88
    %v624 = vpop.permute.xlu0 %623
    %v625 = vsel %vm354, %v610, 0
    %v627 = vsel %vm354, %v612, 0
    %v629 = vsel %vm354, %v614, 0
    %v631 = vsel %vm354, %v616, 0
    %v633 = vsel %vm354, %v618, 0
    %v635 = vsel %vm354, %v620, 0
    %v637 = vsel %vm354, %v622, 0
    %v639 = vsel %vm354, %v624, 0
    %641 = vmatprep.subr.mxu0 0.0
    %642 = vmatpush1.xpose.msra.mxu0 %v633
    %643 = vmatprep.subr.mxu0 0.0
    %644 = vmatpush1.xpose.msra.mxu0 %v635
    %645 = vmatprep.subr.mxu0 0.0
    %646 = vmatpush1.xpose.msra.mxu0 %v637
    %647 = vmatprep.subr.mxu0 0.0
    %648 = vmatpush1.xpose.msra.mxu0 %v639
    %649 = vmatprep.subr.mxu0 0.0
    %650 = vmatpush1.xpose.msra.mxu0 0.0
    %651 = vmatprep.subr.mxu0 0.0
    %652 = vmatpush1.xpose.msra.mxu0 0.0
    %653 = vmatprep.subr.mxu0 0.0
    %654 = vmatpush1.xpose.msra.mxu0 0.0
    %655 = vmatprep.subr.mxu0 0.0
    %656 = vmatpush1.xpose.msra.mxu0 0.0
    %657 = vmatprep.subr.mxu0 0.0
    %658 = vmatpush1.xpose.msra.mxu0 0.0
    %659 = vmatprep.subr.mxu0 0.0
    %660 = vmatpush1.xpose.msra.mxu0 0.0
    %661 = vmatprep.subr.mxu0 0.0
    %662 = vmatpush1.xpose.msra.mxu0 0.0
    %663 = vmatprep.subr.mxu0 0.0
    %664 = vmatpush1.xpose.msra.mxu0 0.0
    %665 = vmatprep.subr.mxu0 0.0
    %666 = vmatpush1.xpose.msra.mxu0 0.0
    %667 = vmatprep.subr.mxu0 0.0
    %668 = vmatpush1.xpose.msra.mxu0 0.0
    %669 = vmatprep.subr.mxu0 0.0
    %670 = vmatpush1.xpose.msra.mxu0 0.0
    %671 = vmatprep.subr.mxu0 0.0
    %672 = vmatpush1.xpose.msra.mxu0 0.0
    %673 = vmatprep.subr.mxu0 0.0
    %674 = vmatpush1.xpose.msra.mxu0 0.0
    %675 = vmatprep.subr.mxu0 0.0
    %676 = vmatpush1.xpose.msra.mxu0 0.0
    %677 = vmatprep.subr.mxu0 0.0
    %678 = vmatpush1.xpose.msra.mxu0 0.0
    %679 = vmatprep.subr.mxu0 0.0
    %680 = vmatpush1.xpose.msra.mxu0 0.0
    %681 = vmatprep.subr.mxu0 0.0
    %682 = vmatpush1.xpose.msra.mxu0 0.0
    %683 = vmatprep.subr.mxu0 0.0
    %684 = vmatpush1.xpose.msra.mxu0 0.0
    %685 = vmatprep.subr.mxu0 0.0
    %686 = vmatpush1.xpose.msra.mxu0 0.0
    %687 = vmatprep.subr.mxu0 0.0
    %688 = vmatpush1.xpose.msra.mxu0 0.0
    %689 = vmatprep.subr.mxu0 0.0
    %690 = vmatpush1.xpose.msra.mxu0 0.0
    %691 = vmatprep.subr.mxu0 0.0
    %692 = vmatpush1.xpose.msra.mxu0 0.0
    %693 = vmatprep.subr.mxu0 0.0
    %694 = vmatpush1.xpose.msra.mxu0 0.0
    %695 = vmatprep.subr.mxu0 0.0
    %696 = vmatpush1.xpose.msra.mxu0 0.0
    %697 = vmatprep.subr.mxu0 0.0
    %698 = vmatpush1.xpose.msra.mxu0 0.0
    %699 = vmatprep.subr.mxu0 0.0
    %700 = vmatpush1.xpose.msra.mxu0 0.0
    %701 = vmatprep.subr.mxu0 0.0
    %702 = vmatpush1.xpose.msra.mxu0 0.0
    %703 = vmatprep.subr.mxu0 0.0
    %704 = vmatpush1.xpose.msra.mxu0 0.0
    %705 = vmatprep.mubr.f32.mxu0 0.0
    %706 = vmatmul.mubr.f32.gmra.mrb[0].mxu0 %v625
    %v707 = vpop.f32.mrb[0].mxu0
    %v708 = vadd.f32 %v165, %v707
    %v709 = vpop.f32.mrb[0].mxu0
    %710 = vmatprep.mubr.f32.mxu0 0.0
    %711 = vmatmul.mubr.f32.gmra.mrb[0].mxu0 %v627
    %v712 = vpop.f32.mrb[0].mxu0
    %v713 = vadd.f32 %v166, %v712
    %v714 = vpop.f32.mrb[0].mxu0
    %715 = vmatprep.mubr.f32.mxu0 0.0
    %716 = vmatmul.mubr.f32.gmra.mrb[0].mxu0 %v629
    %v717 = vpop.f32.mrb[0].mxu0
    %v718 = vadd.f32 %v167, %v717
    %v719 = vpop.f32.mrb[0].mxu0
    %720 = vmatprep.mubr.f32.mxu0 0.0
    %721 = vmatmul.mubr.f32.gmra.mrb[0].mxu0 %v631
    %v722 = vpop.f32.mrb[0].mxu0
    %v723 = vadd.f32 %v168, %v722
    %v724 = vpop.f32.mrb[0].mxu0
    %725 = vdwg.mxu0
    %v726 = vsel %vm199, %v708, -inf
    %727 = vmax.xlane.f32.xlu0 %v726
    %v728 = vpop.xlane.xlu0 %727
    %v729 = vsel %vm199, %v713, -inf
    %730 = vmax.xlane.f32.xlu0 %v729
    %v731 = vpop.xlane.xlu0 %730
    %v732 = vsel %vm199, %v718, -inf
    %733 = vmax.xlane.f32.xlu0 %v732
    %v734 = vpop.xlane.xlu0 %733
    %v735 = vsel %vm199, %v723, -inf
    %736 = vmax.xlane.f32.xlu0 %v735
    %v737 = vpop.xlane.xlu0 %736
    %v738 = vsub.f32 %v708, %v728
    %v739 = vsub.f32 %v713, %v731
    %v740 = vsub.f32 %v718, %v734
    %v741 = vsub.f32 %v723, %v737
    %v742 = vmul.f32 %v738, 1.442695
    %v743 = vpow.pop %v742
    %v744 = vmul.f32 %v739, 1.442695
    %v745 = vpow.pop %v744
    %v746 = vmul.f32 %v740, 1.442695
    %v747 = vpow.pop %v746
    %v748 = vmul.f32 %v741, 1.442695
    %v749 = vpow.pop %v748
    %v750 = vsel %vm199, %v743, 0.0
    %751 = vadd.xlane.f32.xlu0 %v750
    %v752 = vpop.xlane.xlu0 %751
    %v753 = vsel %vm199, %v745, 0.0
    %754 = vadd.xlane.f32.xlu0 %v753
    %v755 = vpop.xlane.xlu0 %754
    %v756 = vsel %vm199, %v747, 0.0
    %757 = vadd.xlane.f32.xlu0 %v756
    %v758 = vpop.xlane.xlu0 %757
    %v759 = vsel %vm199, %v749, 0.0
    %760 = vadd.xlane.f32.xlu0 %v759
    %v761 = vpop.xlane.xlu0 %760
    %v762 = vrcp.pop %v752
    %v763 = vrcp.pop %v755
    %v764 = vrcp.pop %v758
    %v765 = vrcp.pop %v761
    %v766 = vmul.f32 %v743, %v762
    %v767 = vmul.f32 %v745, %v763
    %v768 = vmul.f32 %v747, %v764
    %v769 = vmul.f32 %v749, %v765
    %770 = vrot.lane.b32.xlu0 %v324, 56
    %v771 = vpop.permute.xlu0 %770
    %772 = vrot.lane.b32.xlu0 %v329, 56
    %v773 = vpop.permute.xlu0 %772
    %774 = vrot.lane.b32.xlu0 %v334, 56
    %v775 = vpop.permute.xlu0 %774
    %776 = vrot.lane.b32.xlu0 %v339, 56
    %v777 = vpop.permute.xlu0 %776
    %v783 = vsel %vm199, %v766, 0
    %v786 = vsel %vm199, %v767, 0
    %v789 = vsel %vm199, %v768, 0
    %v792 = vsel %vm199, %v769, 0
    %794 = vmatprep.subr.mxu0 0.0
    %795 = vmatpush1.msra.mxu0 %v771
    %796 = vmatprep.subr.mxu0 0.0
    %797 = vmatpush1.msra.mxu0 %v773
    %798 = vmatprep.subr.mxu0 0.0
    %799 = vmatpush1.msra.mxu0 %v775
    %800 = vmatprep.subr.mxu0 0.0
    %801 = vmatpush1.msra.mxu0 %v777
    %802 = vmatprep.subr.mxu0 0.0
    %803 = vmatpush1.msra.mxu0 0.0
    %804 = vmatprep.subr.mxu0 0.0
    %805 = vmatpush1.msra.mxu0 0.0
    %806 = vmatprep.subr.mxu0 0.0
    %807 = vmatpush1.msra.mxu0 0.0
    %808 = vmatprep.subr.mxu0 0.0
    %809 = vmatpush1.msra.mxu0 0.0
    %810 = vmatprep.subr.mxu0 0.0
    %811 = vmatpush1.msra.mxu0 0.0
    %812 = vmatprep.subr.mxu0 0.0
    %813 = vmatpush1.msra.mxu0 0.0
    %814 = vmatprep.subr.mxu0 0.0
    %815 = vmatpush1.msra.mxu0 0.0
    %816 = vmatprep.subr.mxu0 0.0
    %817 = vmatpush1.msra.mxu0 0.0
    %818 = vmatprep.subr.mxu0 0.0
    %819 = vmatpush1.msra.mxu0 0.0
    %820 = vmatprep.subr.mxu0 0.0
    %821 = vmatpush1.msra.mxu0 0.0
    %822 = vmatprep.subr.mxu0 0.0
    %823 = vmatpush1.msra.mxu0 0.0
    %824 = vmatprep.subr.mxu0 0.0
    %825 = vmatpush1.msra.mxu0 0.0
    %826 = vmatprep.subr.mxu0 0.0
    %827 = vmatpush1.msra.mxu0 0.0
    %828 = vmatprep.subr.mxu0 0.0
    %829 = vmatpush1.msra.mxu0 0.0
    %830 = vmatprep.subr.mxu0 0.0
    %831 = vmatpush1.msra.mxu0 0.0
    %832 = vmatprep.subr.mxu0 0.0
    %833 = vmatpush1.msra.mxu0 0.0
    %834 = vmatprep.subr.mxu0 0.0
    %835 = vmatpush1.msra.mxu0 0.0
    %836 = vmatprep.subr.mxu0 0.0
    %837 = vmatpush1.msra.mxu0 0.0
    %838 = vmatprep.subr.mxu0 0.0
    %839 = vmatpush1.msra.mxu0 0.0
    %840 = vmatprep.subr.mxu0 0.0
    %841 = vmatpush1.msra.mxu0 0.0
    %842 = vmatprep.subr.mxu0 0.0
    %843 = vmatpush1.msra.mxu0 0.0
    %844 = vmatprep.subr.mxu0 0.0
    %845 = vmatpush1.msra.mxu0 0.0
    %846 = vmatprep.subr.mxu0 0.0
    %847 = vmatpush1.msra.mxu0 0.0
    %848 = vmatprep.subr.mxu0 0.0
    %849 = vmatpush1.msra.mxu0 0.0
    %850 = vmatprep.subr.mxu0 0.0
    %851 = vmatpush1.msra.mxu0 0.0
    %852 = vmatprep.subr.mxu0 0.0
    %853 = vmatpush1.msra.mxu0 0.0
    %854 = vmatprep.subr.mxu0 0.0
    %855 = vmatpush1.msra.mxu0 0.0
    %856 = vmatprep.subr.mxu0 0.0
    %857 = vmatpush1.msra.mxu0 0.0
    %858 = vmatprep.mubr.f32.mxu0 0.0
    %859 = vmatmul.mubr.f32.gmra.mrb[0].mxu0 %v783
    %v860 = vpop.f32.mrb[0].mxu0
    %v861 = vadd.f32 0.0, %v860
    %v862 = vpop.f32.mrb[0].mxu0
    %863 = vmatprep.mubr.f32.mxu0 0.0
    %864 = vmatmul.mubr.f32.gmra.mrb[0].mxu0 %v786
    %v865 = vpop.f32.mrb[0].mxu0
    %v866 = vadd.f32 0.0, %v865
    %v867 = vpop.f32.mrb[0].mxu0
    %868 = vmatprep.mubr.f32.mxu0 0.0
    %869 = vmatmul.mubr.f32.gmra.mrb[0].mxu0 %v789
    %v870 = vpop.f32.mrb[0].mxu0
    %v871 = vadd.f32 0.0, %v870
    %v872 = vpop.f32.mrb[0].mxu0
    %873 = vmatprep.mubr.f32.mxu0 0.0
    %874 = vmatmul.mubr.f32.gmra.mrb[0].mxu0 %v792
    %v875 = vpop.f32.mrb[0].mxu0
    %v876 = vadd.f32 0.0, %v875
    %v877 = vpop.f32.mrb[0].mxu0
    %878 = vdwg.mxu0
    %v880 = vsel %vm354, %v861, 0
    %v883 = vsel %vm354, %v866, 0
    %v886 = vsel %vm354, %v871, 0
    %v889 = vsel %vm354, %v876, 0
    %891 = vmatprep.subr.mxu0 0.0
    %892 = vmatpush1.msra.mxu0 %v177
    %893 = vmatprep.subr.mxu0 0.0
    %894 = vmatpush1.msra.mxu0 0.0
    %895 = vmatprep.subr.mxu0 0.0
    %896 = vmatpush1.msra.mxu0 0.0
    %897 = vmatprep.subr.mxu0 0.0
    %898 = vmatpush1.msra.mxu0 0.0
    %899 = vmatprep.subr.mxu0 0.0
    %900 = vmatpush1.msra.mxu0 0.0
    %901 = vmatprep.subr.mxu0 0.0
    %902 = vmatpush1.msra.mxu0 0.0
    %903 = vmatprep.subr.mxu0 0.0
    %904 = vmatpush1.msra.mxu0 0.0
    %905 = vmatprep.subr.mxu0 0.0
    %906 = vmatpush1.msra.mxu0 0.0
    %907 = vmatprep.subr.mxu0 0.0
    %908 = vmatpush1.msra.mxu0 0.0
    %909 = vmatprep.subr.mxu0 0.0
    %910 = vmatpush1.msra.mxu0 0.0
    %911 = vmatprep.subr.mxu0 0.0
    %912 = vmatpush1.msra.mxu0 0.0
    %913 = vmatprep.subr.mxu0 0.0
    %914 = vmatpush1.msra.mxu0 0.0
    %915 = vmatprep.subr.mxu0 0.0
    %916 = vmatpush1.msra.mxu0 0.0
    %917 = vmatprep.subr.mxu0 0.0
    %918 = vmatpush1.msra.mxu0 0.0
    %919 = vmatprep.subr.mxu0 0.0
    %920 = vmatpush1.msra.mxu0 0.0
    %921 = vmatprep.subr.mxu0 0.0
    %922 = vmatpush1.msra.mxu0 0.0
    %923 = vmatprep.subr.mxu0 0.0
    %924 = vmatpush1.msra.mxu0 0.0
    %925 = vmatprep.subr.mxu0 0.0
    %926 = vmatpush1.msra.mxu0 0.0
    %927 = vmatprep.subr.mxu0 0.0
    %928 = vmatpush1.msra.mxu0 0.0
    %929 = vmatprep.subr.mxu0 0.0
    %930 = vmatpush1.msra.mxu0 0.0
    %931 = vmatprep.subr.mxu0 0.0
    %932 = vmatpush1.msra.mxu0 0.0
    %933 = vmatprep.subr.mxu0 0.0
    %934 = vmatpush1.msra.mxu0 0.0
    %935 = vmatprep.subr.mxu0 0.0
    %936 = vmatpush1.msra.mxu0 0.0
    %937 = vmatprep.subr.mxu0 0.0
    %938 = vmatpush1.msra.mxu0 0.0
    %939 = vmatprep.subr.mxu0 0.0
    %940 = vmatpush1.msra.mxu0 0.0
    %941 = vmatprep.subr.mxu0 0.0
    %942 = vmatpush1.msra.mxu0 0.0
    %943 = vmatprep.subr.mxu0 0.0
    %944 = vmatpush1.msra.mxu0 0.0
    %945 = vmatprep.subr.mxu0 0.0
    %946 = vmatpush1.msra.mxu0 0.0
    %947 = vmatprep.subr.mxu0 0.0
    %948 = vmatpush1.msra.mxu0 0.0
    %949 = vmatprep.subr.mxu0 0.0
    %950 = vmatpush1.msra.mxu0 0.0
    %951 = vmatprep.subr.mxu0 0.0
    %952 = vmatpush1.msra.mxu0 0.0
    %953 = vmatprep.subr.mxu0 0.0
    %954 = vmatpush1.msra.mxu0 0.0
    %955 = vmatprep.mubr.f32.mxu0 0.0
    %956 = vmatmul.mubr.f32.gmra.mrb[0].mxu0 %v880
    %v957 = vpop.f32.mrb[0].mxu0
    %v958 = vadd.f32 0.0, %v957
    %v959 = vpop.f32.mrb[0].mxu0
    %960 = vmatprep.mubr.f32.mxu0 0.0
    %961 = vmatmul.mubr.f32.gmra.mrb[0].mxu0 %v883
    %v962 = vpop.f32.mrb[0].mxu0
    %v963 = vadd.f32 0.0, %v962
    %v964 = vpop.f32.mrb[0].mxu0
    %965 = vmatprep.mubr.f32.mxu0 0.0
    %966 = vmatmul.mubr.f32.gmra.mrb[0].mxu0 %v886
    %v967 = vpop.f32.mrb[0].mxu0
    %v968 = vadd.f32 0.0, %v967
    %v969 = vpop.f32.mrb[0].mxu0
    %970 = vmatprep.mubr.f32.mxu0 0.0
    %971 = vmatmul.mubr.f32.gmra.mrb[0].mxu0 %v889
    %v972 = vpop.f32.mrb[0].mxu0
    %v973 = vadd.f32 0.0, %v972
    %v974 = vpop.f32.mrb[0].mxu0
    %975 = vdwg.mxu0
    %v977 = vsel %vm354, %v591, 0
    %v980 = vsel %vm354, %v596, 0
    %v983 = vsel %vm354, %v601, 0
    %v986 = vsel %vm354, %v606, 0
    %988 = vmatprep.subr.mxu0 0.0
    %989 = vmatpush1.msra.mxu0 %v176
    %990 = vmatprep.subr.mxu0 0.0
    %991 = vmatpush1.msra.mxu0 0.0
    %992 = vmatprep.subr.mxu0 0.0
    %993 = vmatpush1.msra.mxu0 0.0
    %994 = vmatprep.subr.mxu0 0.0
    %995 = vmatpush1.msra.mxu0 0.0
    %996 = vmatprep.subr.mxu0 0.0
    %997 = vmatpush1.msra.mxu0 0.0
    %998 = vmatprep.subr.mxu0 0.0
    %999 = vmatpush1.msra.mxu0 0.0
    %1000 = vmatprep.subr.mxu0 0.0
    %1001 = vmatpush1.msra.mxu0 0.0
    %1002 = vmatprep.subr.mxu0 0.0
    %1003 = vmatpush1.msra.mxu0 0.0
    %1004 = vmatprep.subr.mxu0 0.0
    %1005 = vmatpush1.msra.mxu0 0.0
    %1006 = vmatprep.subr.mxu0 0.0
    %1007 = vmatpush1.msra.mxu0 0.0
    %1008 = vmatprep.subr.mxu0 0.0
    %1009 = vmatpush1.msra.mxu0 0.0
    %1010 = vmatprep.subr.mxu0 0.0
    %1011 = vmatpush1.msra.mxu0 0.0
    %1012 = vmatprep.subr.mxu0 0.0
    %1013 = vmatpush1.msra.mxu0 0.0
    %1014 = vmatprep.subr.mxu0 0.0
    %1015 = vmatpush1.msra.mxu0 0.0
    %1016 = vmatprep.subr.mxu0 0.0
    %1017 = vmatpush1.msra.mxu0 0.0
    %1018 = vmatprep.subr.mxu0 0.0
    %1019 = vmatpush1.msra.mxu0 0.0
    %1020 = vmatprep.subr.mxu0 0.0
    %1021 = vmatpush1.msra.mxu0 0.0
    %1022 = vmatprep.subr.mxu0 0.0
    %1023 = vmatpush1.msra.mxu0 0.0
    %1024 = vmatprep.subr.mxu0 0.0
    %1025 = vmatpush1.msra.mxu0 0.0
    %1026 = vmatprep.subr.mxu0 0.0
    %1027 = vmatpush1.msra.mxu0 0.0
    %1028 = vmatprep.subr.mxu0 0.0
    %1029 = vmatpush1.msra.mxu0 0.0
    %1030 = vmatprep.subr.mxu0 0.0
    %1031 = vmatpush1.msra.mxu0 0.0
    %1032 = vmatprep.subr.mxu0 0.0
    %1033 = vmatpush1.msra.mxu0 0.0
    %1034 = vmatprep.subr.mxu0 0.0
    %1035 = vmatpush1.msra.mxu0 0.0
    %1036 = vmatprep.subr.mxu0 0.0
    %1037 = vmatpush1.msra.mxu0 0.0
    %1038 = vmatprep.subr.mxu0 0.0
    %1039 = vmatpush1.msra.mxu0 0.0
    %1040 = vmatprep.subr.mxu0 0.0
    %1041 = vmatpush1.msra.mxu0 0.0
    %1042 = vmatprep.subr.mxu0 0.0
    %1043 = vmatpush1.msra.mxu0 0.0
    %1044 = vmatprep.subr.mxu0 0.0
    %1045 = vmatpush1.msra.mxu0 0.0
    %1046 = vmatprep.subr.mxu0 0.0
    %1047 = vmatpush1.msra.mxu0 0.0
    %1048 = vmatprep.subr.mxu0 0.0
    %1049 = vmatpush1.msra.mxu0 0.0
    %1050 = vmatprep.subr.mxu0 0.0
    %1051 = vmatpush1.msra.mxu0 0.0
    %1052 = vmatprep.mubr.f32.mxu0 0.0
    %1053 = vmatmul.mubr.f32.gmra.mrb[0].mxu0 %v977
    %v1054 = vpop.f32.mrb[0].mxu0
    %v1055 = vadd.f32 %v958, %v1054
    %v1056 = vpop.f32.mrb[0].mxu0
    %1057 = vmatprep.mubr.f32.mxu0 0.0
    %1058 = vmatmul.mubr.f32.gmra.mrb[0].mxu0 %v980
    %v1059 = vpop.f32.mrb[0].mxu0
    %v1060 = vadd.f32 %v963, %v1059
    %v1061 = vpop.f32.mrb[0].mxu0
    %1062 = vmatprep.mubr.f32.mxu0 0.0
    %1063 = vmatmul.mubr.f32.gmra.mrb[0].mxu0 %v983
    %v1064 = vpop.f32.mrb[0].mxu0
    %v1065 = vadd.f32 %v968, %v1064
    %v1066 = vpop.f32.mrb[0].mxu0
    %1067 = vmatprep.mubr.f32.mxu0 0.0
    %1068 = vmatmul.mubr.f32.gmra.mrb[0].mxu0 %v986
    %v1069 = vpop.f32.mrb[0].mxu0
    %v1070 = vadd.f32 %v973, %v1069
    %v1071 = vpop.f32.mrb[0].mxu0
    %1072 = vdwg.mxu0
    %1073 = vrot.lane.b32.xlu0 %v324, 112
    %v1074 = vpop.permute.xlu0 %1073
    %1075 = vrot.lane.b32.xlu0 %v329, 112
    %v1076 = vpop.permute.xlu0 %1075
    %1077 = vrot.lane.b32.xlu0 %v334, 112
    %v1078 = vpop.permute.xlu0 %1077
    %1079 = vrot.lane.b32.xlu0 %v339, 112
    %v1080 = vpop.permute.xlu0 %1079
    %1081 = vrot.lane.b32.xlu0 %v324, 80
    %v1082 = vpop.permute.xlu0 %1081
    %1083 = vrot.lane.b32.xlu0 %v329, 80
    %v1084 = vpop.permute.xlu0 %1083
    %1085 = vrot.lane.b32.xlu0 %v334, 80
    %v1086 = vpop.permute.xlu0 %1085
    %1087 = vrot.lane.b32.xlu0 %v339, 80
    %v1088 = vpop.permute.xlu0 %1087
    %v1089 = vsel %vm354, %v1074, 0
    %v1091 = vsel %vm354, %v1076, 0
    %v1093 = vsel %vm354, %v1078, 0
    %v1095 = vsel %vm354, %v1080, 0
    %v1097 = vsel %vm354, %v1082, 0
    %v1099 = vsel %vm354, %v1084, 0
    %v1101 = vsel %vm354, %v1086, 0
    %v1103 = vsel %vm354, %v1088, 0
    %1105 = vmatprep.subr.mxu0 0.0
    %1106 = vmatpush1.xpose.msra.mxu0 %v1097
    %1107 = vmatprep.subr.mxu0 0.0
    %1108 = vmatpush1.xpose.msra.mxu0 %v1099
    %1109 = vmatprep.subr.mxu0 0.0
    %1110 = vmatpush1.xpose.msra.mxu0 %v1101
    %1111 = vmatprep.subr.mxu0 0.0
    %1112 = vmatpush1.xpose.msra.mxu0 %v1103
    %1113 = vmatprep.subr.mxu0 0.0
    %1114 = vmatpush1.xpose.msra.mxu0 0.0
    %1115 = vmatprep.subr.mxu0 0.0
    %1116 = vmatpush1.xpose.msra.mxu0 0.0
    %1117 = vmatprep.subr.mxu0 0.0
    %1118 = vmatpush1.xpose.msra.mxu0 0.0
    %1119 = vmatprep.subr.mxu0 0.0
    %1120 = vmatpush1.xpose.msra.mxu0 0.0
    %1121 = vmatprep.subr.mxu0 0.0
    %1122 = vmatpush1.xpose.msra.mxu0 0.0
    %1123 = vmatprep.subr.mxu0 0.0
    %1124 = vmatpush1.xpose.msra.mxu0 0.0
    %1125 = vmatprep.subr.mxu0 0.0
    %1126 = vmatpush1.xpose.msra.mxu0 0.0
    %1127 = vmatprep.subr.mxu0 0.0
    %1128 = vmatpush1.xpose.msra.mxu0 0.0
    %1129 = vmatprep.subr.mxu0 0.0
    %1130 = vmatpush1.xpose.msra.mxu0 0.0
    %1131 = vmatprep.subr.mxu0 0.0
    %1132 = vmatpush1.xpose.msra.mxu0 0.0
    %1133 = vmatprep.subr.mxu0 0.0
    %1134 = vmatpush1.xpose.msra.mxu0 0.0
    %1135 = vmatprep.subr.mxu0 0.0
    %1136 = vmatpush1.xpose.msra.mxu0 0.0
    %1137 = vmatprep.subr.mxu0 0.0
    %1138 = vmatpush1.xpose.msra.mxu0 0.0
    %1139 = vmatprep.subr.mxu0 0.0
    %1140 = vmatpush1.xpose.msra.mxu0 0.0
    %1141 = vmatprep.subr.mxu0 0.0
    %1142 = vmatpush1.xpose.msra.mxu0 0.0
    %1143 = vmatprep.subr.mxu0 0.0
    %1144 = vmatpush1.xpose.msra.mxu0 0.0
    %1145 = vmatprep.subr.mxu0 0.0
    %1146 = vmatpush1.xpose.msra.mxu0 0.0
    %1147 = vmatprep.subr.mxu0 0.0
    %1148 = vmatpush1.xpose.msra.mxu0 0.0
    %1149 = vmatprep.subr.mxu0 0.0
    %1150 = vmatpush1.xpose.msra.mxu0 0.0
    %1151 = vmatprep.subr.mxu0 0.0
    %1152 = vmatpush1.xpose.msra.mxu0 0.0
    %1153 = vmatprep.subr.mxu0 0.0
    %1154 = vmatpush1.xpose.msra.mxu0 0.0
    %1155 = vmatprep.subr.mxu0 0.0
    %1156 = vmatpush1.xpose.msra.mxu0 0.0
    %1157 = vmatprep.subr.mxu0 0.0
    %1158 = vmatpush1.xpose.msra.mxu0 0.0
    %1159 = vmatprep.subr.mxu0 0.0
    %1160 = vmatpush1.xpose.msra.mxu0 0.0
    %1161 = vmatprep.subr.mxu0 0.0
    %1162 = vmatpush1.xpose.msra.mxu0 0.0
    %1163 = vmatprep.subr.mxu0 0.0
    %1164 = vmatpush1.xpose.msra.mxu0 0.0
    %1165 = vmatprep.subr.mxu0 0.0
    %1166 = vmatpush1.xpose.msra.mxu0 0.0
    %1167 = vmatprep.subr.mxu0 0.0
    %1168 = vmatpush1.xpose.msra.mxu0 0.0
    %1169 = vmatprep.mubr.f32.mxu0 0.0
    %1170 = vmatmul.mubr.f32.gmra.mrb[0].mxu0 %v1089
    %v1171 = vpop.f32.mrb[0].mxu0
    %v1172 = vadd.f32 %v165, %v1171
    %v1173 = vpop.f32.mrb[0].mxu0
    %1174 = vmatprep.mubr.f32.mxu0 0.0
    %1175 = vmatmul.mubr.f32.gmra.mrb[0].mxu0 %v1091
    %v1176 = vpop.f32.mrb[0].mxu0
    %v1177 = vadd.f32 %v166, %v1176
    %v1178 = vpop.f32.mrb[0].mxu0
    %1179 = vmatprep.mubr.f32.mxu0 0.0
    %1180 = vmatmul.mubr.f32.gmra.mrb[0].mxu0 %v1093
    %v1181 = vpop.f32.mrb[0].mxu0
    %v1182 = vadd.f32 %v167, %v1181
    %v1183 = vpop.f32.mrb[0].mxu0
    %1184 = vmatprep.mubr.f32.mxu0 0.0
    %1185 = vmatmul.mubr.f32.gmra.mrb[0].mxu0 %v1095
    %v1186 = vpop.f32.mrb[0].mxu0
    %v1187 = vadd.f32 %v168, %v1186
    %v1188 = vpop.f32.mrb[0].mxu0
    %1189 = vdwg.mxu0
    %v1190 = vsel %vm199, %v1172, -inf
    %1191 = vmax.xlane.f32.xlu0 %v1190
    %v1192 = vpop.xlane.xlu0 %1191
    %v1193 = vsel %vm199, %v1177, -inf
    %1194 = vmax.xlane.f32.xlu0 %v1193
    %v1195 = vpop.xlane.xlu0 %1194
    %v1196 = vsel %vm199, %v1182, -inf
    %1197 = vmax.xlane.f32.xlu0 %v1196
    %v1198 = vpop.xlane.xlu0 %1197
    %v1199 = vsel %vm199, %v1187, -inf
    %1200 = vmax.xlane.f32.xlu0 %v1199
    %v1201 = vpop.xlane.xlu0 %1200
    %v1202 = vsub.f32 %v1172, %v1192
    %v1203 = vsub.f32 %v1177, %v1195
    %v1204 = vsub.f32 %v1182, %v1198
    %v1205 = vsub.f32 %v1187, %v1201
    %v1206 = vmul.f32 %v1202, 1.442695
    %v1207 = vpow.pop %v1206
    %v1208 = vmul.f32 %v1203, 1.442695
    %v1209 = vpow.pop %v1208
    %v1210 = vmul.f32 %v1204, 1.442695
    %v1211 = vpow.pop %v1210
    %v1212 = vmul.f32 %v1205, 1.442695
    %v1213 = vpow.pop %v1212
    %v1214 = vsel %vm199, %v1207, 0.0
    %1215 = vadd.xlane.f32.xlu0 %v1214
    %v1216 = vpop.xlane.xlu0 %1215
    %v1217 = vsel %vm199, %v1209, 0.0
    %1218 = vadd.xlane.f32.xlu0 %v1217
    %v1219 = vpop.xlane.xlu0 %1218
    %v1220 = vsel %vm199, %v1211, 0.0
    %1221 = vadd.xlane.f32.xlu0 %v1220
    %v1222 = vpop.xlane.xlu0 %1221
    %v1223 = vsel %vm199, %v1213, 0.0
    %1224 = vadd.xlane.f32.xlu0 %v1223
    %v1225 = vpop.xlane.xlu0 %1224
    %v1226 = vrcp.pop %v1216
    %v1227 = vrcp.pop %v1219
    %v1228 = vrcp.pop %v1222
    %v1229 = vrcp.pop %v1225
    %v1230 = vmul.f32 %v1207, %v1226
    %v1231 = vmul.f32 %v1209, %v1227
    %v1232 = vmul.f32 %v1211, %v1228
    %v1233 = vmul.f32 %v1213, %v1229
    %1234 = vrot.lane.b32.xlu0 %v324, 48
    %v1235 = vpop.permute.xlu0 %1234
    %1236 = vrot.lane.b32.xlu0 %v329, 48
    %v1237 = vpop.permute.xlu0 %1236
    %1238 = vrot.lane.b32.xlu0 %v334, 48
    %v1239 = vpop.permute.xlu0 %1238
    %1240 = vrot.lane.b32.xlu0 %v339, 48
    %v1241 = vpop.permute.xlu0 %1240
    %v1247 = vsel %vm199, %v1230, 0
    %v1250 = vsel %vm199, %v1231, 0
    %v1253 = vsel %vm199, %v1232, 0
    %v1256 = vsel %vm199, %v1233, 0
    %1258 = vmatprep.subr.mxu0 0.0
    %1259 = vmatpush1.msra.mxu0 %v1235
    %1260 = vmatprep.subr.mxu0 0.0
    %1261 = vmatpush1.msra.mxu0 %v1237
    %1262 = vmatprep.subr.mxu0 0.0
    %1263 = vmatpush1.msra.mxu0 %v1239
    %1264 = vmatprep.subr.mxu0 0.0
    %1265 = vmatpush1.msra.mxu0 %v1241
    %1266 = vmatprep.subr.mxu0 0.0
    %1267 = vmatpush1.msra.mxu0 0.0
    %1268 = vmatprep.subr.mxu0 0.0
    %1269 = vmatpush1.msra.mxu0 0.0
    %1270 = vmatprep.subr.mxu0 0.0
    %1271 = vmatpush1.msra.mxu0 0.0
    %1272 = vmatprep.subr.mxu0 0.0
    %1273 = vmatpush1.msra.mxu0 0.0
    %1274 = vmatprep.subr.mxu0 0.0
    %1275 = vmatpush1.msra.mxu0 0.0
    %1276 = vmatprep.subr.mxu0 0.0
    %1277 = vmatpush1.msra.mxu0 0.0
    %1278 = vmatprep.subr.mxu0 0.0
    %1279 = vmatpush1.msra.mxu0 0.0
    %1280 = vmatprep.subr.mxu0 0.0
    %1281 = vmatpush1.msra.mxu0 0.0
    %1282 = vmatprep.subr.mxu0 0.0
    %1283 = vmatpush1.msra.mxu0 0.0
    %1284 = vmatprep.subr.mxu0 0.0
    %1285 = vmatpush1.msra.mxu0 0.0
    %1286 = vmatprep.subr.mxu0 0.0
    %1287 = vmatpush1.msra.mxu0 0.0
    %1288 = vmatprep.subr.mxu0 0.0
    %1289 = vmatpush1.msra.mxu0 0.0
    %1290 = vmatprep.subr.mxu0 0.0
    %1291 = vmatpush1.msra.mxu0 0.0
    %1292 = vmatprep.subr.mxu0 0.0
    %1293 = vmatpush1.msra.mxu0 0.0
    %1294 = vmatprep.subr.mxu0 0.0
    %1295 = vmatpush1.msra.mxu0 0.0
    %1296 = vmatprep.subr.mxu0 0.0
    %1297 = vmatpush1.msra.mxu0 0.0
    %1298 = vmatprep.subr.mxu0 0.0
    %1299 = vmatpush1.msra.mxu0 0.0
    %1300 = vmatprep.subr.mxu0 0.0
    %1301 = vmatpush1.msra.mxu0 0.0
    %1302 = vmatprep.subr.mxu0 0.0
    %1303 = vmatpush1.msra.mxu0 0.0
    %1304 = vmatprep.subr.mxu0 0.0
    %1305 = vmatpush1.msra.mxu0 0.0
    %1306 = vmatprep.subr.mxu0 0.0
    %1307 = vmatpush1.msra.mxu0 0.0
    %1308 = vmatprep.subr.mxu0 0.0
    %1309 = vmatpush1.msra.mxu0 0.0
    %1310 = vmatprep.subr.mxu0 0.0
    %1311 = vmatpush1.msra.mxu0 0.0
    %1312 = vmatprep.subr.mxu0 0.0
    %1313 = vmatpush1.msra.mxu0 0.0
    %1314 = vmatprep.subr.mxu0 0.0
    %1315 = vmatpush1.msra.mxu0 0.0
    %1316 = vmatprep.subr.mxu0 0.0
    %1317 = vmatpush1.msra.mxu0 0.0
    %1318 = vmatprep.subr.mxu0 0.0
    %1319 = vmatpush1.msra.mxu0 0.0
    %1320 = vmatprep.subr.mxu0 0.0
    %1321 = vmatpush1.msra.mxu0 0.0
    %1322 = vmatprep.mubr.f32.mxu0 0.0
    %1323 = vmatmul.mubr.f32.gmra.mrb[0].mxu0 %v1247
    %v1324 = vpop.f32.mrb[0].mxu0
    %v1325 = vadd.f32 0.0, %v1324
    %v1326 = vpop.f32.mrb[0].mxu0
    %1327 = vmatprep.mubr.f32.mxu0 0.0
    %1328 = vmatmul.mubr.f32.gmra.mrb[0].mxu0 %v1250
    %v1329 = vpop.f32.mrb[0].mxu0
    %v1330 = vadd.f32 0.0, %v1329
    %v1331 = vpop.f32.mrb[0].mxu0
    %1332 = vmatprep.mubr.f32.mxu0 0.0
    %1333 = vmatmul.mubr.f32.gmra.mrb[0].mxu0 %v1253
    %v1334 = vpop.f32.mrb[0].mxu0
    %v1335 = vadd.f32 0.0, %v1334
    %v1336 = vpop.f32.mrb[0].mxu0
    %1337 = vmatprep.mubr.f32.mxu0 0.0
    %1338 = vmatmul.mubr.f32.gmra.mrb[0].mxu0 %v1256
    %v1339 = vpop.f32.mrb[0].mxu0
    %v1340 = vadd.f32 0.0, %v1339
    %v1341 = vpop.f32.mrb[0].mxu0
    %1342 = vdwg.mxu0
    %v1344 = vsel %vm354, %v1325, 0
    %v1347 = vsel %vm354, %v1330, 0
    %v1350 = vsel %vm354, %v1335, 0
    %v1353 = vsel %vm354, %v1340, 0
    %1355 = vmatprep.subr.mxu0 0.0
    %1356 = vmatpush1.msra.mxu0 %v178
    %1357 = vmatprep.subr.mxu0 0.0
    %1358 = vmatpush1.msra.mxu0 0.0
    %1359 = vmatprep.subr.mxu0 0.0
    %1360 = vmatpush1.msra.mxu0 0.0
    %1361 = vmatprep.subr.mxu0 0.0
    %1362 = vmatpush1.msra.mxu0 0.0
    %1363 = vmatprep.subr.mxu0 0.0
    %1364 = vmatpush1.msra.mxu0 0.0
    %1365 = vmatprep.subr.mxu0 0.0
    %1366 = vmatpush1.msra.mxu0 0.0
    %1367 = vmatprep.subr.mxu0 0.0
    %1368 = vmatpush1.msra.mxu0 0.0
    %1369 = vmatprep.subr.mxu0 0.0
    %1370 = vmatpush1.msra.mxu0 0.0
    %1371 = vmatprep.subr.mxu0 0.0
    %1372 = vmatpush1.msra.mxu0 0.0
    %1373 = vmatprep.subr.mxu0 0.0
    %1374 = vmatpush1.msra.mxu0 0.0
    %1375 = vmatprep.subr.mxu0 0.0
    %1376 = vmatpush1.msra.mxu0 0.0
    %1377 = vmatprep.subr.mxu0 0.0
    %1378 = vmatpush1.msra.mxu0 0.0
    %1379 = vmatprep.subr.mxu0 0.0
    %1380 = vmatpush1.msra.mxu0 0.0
    %1381 = vmatprep.subr.mxu0 0.0
    %1382 = vmatpush1.msra.mxu0 0.0
    %1383 = vmatprep.subr.mxu0 0.0
    %1384 = vmatpush1.msra.mxu0 0.0
    %1385 = vmatprep.subr.mxu0 0.0
    %1386 = vmatpush1.msra.mxu0 0.0
    %1387 = vmatprep.subr.mxu0 0.0
    %1388 = vmatpush1.msra.mxu0 0.0
    %1389 = vmatprep.subr.mxu0 0.0
    %1390 = vmatpush1.msra.mxu0 0.0
    %1391 = vmatprep.subr.mxu0 0.0
    %1392 = vmatpush1.msra.mxu0 0.0
    %1393 = vmatprep.subr.mxu0 0.0
    %1394 = vmatpush1.msra.mxu0 0.0
    %1395 = vmatprep.subr.mxu0 0.0
    %1396 = vmatpush1.msra.mxu0 0.0
    %1397 = vmatprep.subr.mxu0 0.0
    %1398 = vmatpush1.msra.mxu0 0.0
    %1399 = vmatprep.subr.mxu0 0.0
    %1400 = vmatpush1.msra.mxu0 0.0
    %1401 = vmatprep.subr.mxu0 0.0
    %1402 = vmatpush1.msra.mxu0 0.0
    %1403 = vmatprep.subr.mxu0 0.0
    %1404 = vmatpush1.msra.mxu0 0.0
    %1405 = vmatprep.subr.mxu0 0.0
    %1406 = vmatpush1.msra.mxu0 0.0
    %1407 = vmatprep.subr.mxu0 0.0
    %1408 = vmatpush1.msra.mxu0 0.0
    %1409 = vmatprep.subr.mxu0 0.0
    %1410 = vmatpush1.msra.mxu0 0.0
    %1411 = vmatprep.subr.mxu0 0.0
    %1412 = vmatpush1.msra.mxu0 0.0
    %1413 = vmatprep.subr.mxu0 0.0
    %1414 = vmatpush1.msra.mxu0 0.0
    %1415 = vmatprep.subr.mxu0 0.0
    %1416 = vmatpush1.msra.mxu0 0.0
    %1417 = vmatprep.subr.mxu0 0.0
    %1418 = vmatpush1.msra.mxu0 0.0
    %1419 = vmatprep.mubr.f32.mxu0 0.0
    %1420 = vmatmul.mubr.f32.gmra.mrb[0].mxu0 %v1344
    %v1421 = vpop.f32.mrb[0].mxu0
    %v1422 = vadd.f32 0.0, %v1421
    %v1423 = vpop.f32.mrb[0].mxu0
    %1424 = vmatprep.mubr.f32.mxu0 0.0
    %1425 = vmatmul.mubr.f32.gmra.mrb[0].mxu0 %v1347
    %v1426 = vpop.f32.mrb[0].mxu0
    %v1427 = vadd.f32 0.0, %v1426
    %v1428 = vpop.f32.mrb[0].mxu0
    %1429 = vmatprep.mubr.f32.mxu0 0.0
    %1430 = vmatmul.mubr.f32.gmra.mrb[0].mxu0 %v1350
    %v1431 = vpop.f32.mrb[0].mxu0
    %v1432 = vadd.f32 0.0, %v1431
    %v1433 = vpop.f32.mrb[0].mxu0
    %1434 = vmatprep.mubr.f32.mxu0 0.0
    %1435 = vmatmul.mubr.f32.gmra.mrb[0].mxu0 %v1353
    %v1436 = vpop.f32.mrb[0].mxu0
    %v1437 = vadd.f32 0.0, %v1436
    %v1438 = vpop.f32.mrb[0].mxu0
    %1439 = vdwg.mxu0
    %v1440 = vadd.f32 %v1055, %v1422
    %v1441 = vadd.f32 %v1060, %v1427
    %v1442 = vadd.f32 %v1065, %v1432
    %v1443 = vadd.f32 %v1070, %v1437
    %1444 = vrot.lane.b32.xlu0 %v324, 104
    %v1445 = vpop.permute.xlu0 %1444
    %1446 = vrot.lane.b32.xlu0 %v329, 104
    %v1447 = vpop.permute.xlu0 %1446
    %1448 = vrot.lane.b32.xlu0 %v334, 104
    %v1449 = vpop.permute.xlu0 %1448
    %1450 = vrot.lane.b32.xlu0 %v339, 104
    %v1451 = vpop.permute.xlu0 %1450
    %1452 = vrot.lane.b32.xlu0 %v324, 72
    %v1453 = vpop.permute.xlu0 %1452
    %1454 = vrot.lane.b32.xlu0 %v329, 72
    %v1455 = vpop.permute.xlu0 %1454
    %1456 = vrot.lane.b32.xlu0 %v334, 72
    %v1457 = vpop.permute.xlu0 %1456
    %1458 = vrot.lane.b32.xlu0 %v339, 72
    %v1459 = vpop.permute.xlu0 %1458
    %v1460 = vsel %vm354, %v1445, 0
    %v1462 = vsel %vm354, %v1447, 0
    %v1464 = vsel %vm354, %v1449, 0
    %v1466 = vsel %vm354, %v1451, 0
    %v1468 = vsel %vm354, %v1453, 0
    %v1470 = vsel %vm354, %v1455, 0
    %v1472 = vsel %vm354, %v1457, 0
    %v1474 = vsel %vm354, %v1459, 0
    %1476 = vmatprep.subr.mxu0 0.0
    %1477 = vmatpush1.xpose.msra.mxu0 %v1468
    %1478 = vmatprep.subr.mxu0 0.0
    %1479 = vmatpush1.xpose.msra.mxu0 %v1470
    %1480 = vmatprep.subr.mxu0 0.0
    %1481 = vmatpush1.xpose.msra.mxu0 %v1472
    %1482 = vmatprep.subr.mxu0 0.0
    %1483 = vmatpush1.xpose.msra.mxu0 %v1474
    %1484 = vmatprep.subr.mxu0 0.0
    %1485 = vmatpush1.xpose.msra.mxu0 0.0
    %1486 = vmatprep.subr.mxu0 0.0
    %1487 = vmatpush1.xpose.msra.mxu0 0.0
    %1488 = vmatprep.subr.mxu0 0.0
    %1489 = vmatpush1.xpose.msra.mxu0 0.0
    %1490 = vmatprep.subr.mxu0 0.0
    %1491 = vmatpush1.xpose.msra.mxu0 0.0
    %1492 = vmatprep.subr.mxu0 0.0
    %1493 = vmatpush1.xpose.msra.mxu0 0.0
    %1494 = vmatprep.subr.mxu0 0.0
    %1495 = vmatpush1.xpose.msra.mxu0 0.0
    %1496 = vmatprep.subr.mxu0 0.0
    %1497 = vmatpush1.xpose.msra.mxu0 0.0
    %1498 = vmatprep.subr.mxu0 0.0
    %1499 = vmatpush1.xpose.msra.mxu0 0.0
    %1500 = vmatprep.subr.mxu0 0.0
    %1501 = vmatpush1.xpose.msra.mxu0 0.0
    %1502 = vmatprep.subr.mxu0 0.0
    %1503 = vmatpush1.xpose.msra.mxu0 0.0
    %1504 = vmatprep.subr.mxu0 0.0
    %1505 = vmatpush1.xpose.msra.mxu0 0.0
    %1506 = vmatprep.subr.mxu0 0.0
    %1507 = vmatpush1.xpose.msra.mxu0 0.0
    %1508 = vmatprep.subr.mxu0 0.0
    %1509 = vmatpush1.xpose.msra.mxu0 0.0
    %1510 = vmatprep.subr.mxu0 0.0
    %1511 = vmatpush1.xpose.msra.mxu0 0.0
    %1512 = vmatprep.subr.mxu0 0.0
    %1513 = vmatpush1.xpose.msra.mxu0 0.0
    %1514 = vmatprep.subr.mxu0 0.0
    %1515 = vmatpush1.xpose.msra.mxu0 0.0
    %1516 = vmatprep.subr.mxu0 0.0
    %1517 = vmatpush1.xpose.msra.mxu0 0.0
    %1518 = vmatprep.subr.mxu0 0.0
    %1519 = vmatpush1.xpose.msra.mxu0 0.0
    %1520 = vmatprep.subr.mxu0 0.0
    %1521 = vmatpush1.xpose.msra.mxu0 0.0
    %1522 = vmatprep.subr.mxu0 0.0
    %1523 = vmatpush1.xpose.msra.mxu0 0.0
    %1524 = vmatprep.subr.mxu0 0.0
    %1525 = vmatpush1.xpose.msra.mxu0 0.0
    %1526 = vmatprep.subr.mxu0 0.0
    %1527 = vmatpush1.xpose.msra.mxu0 0.0
    %1528 = vmatprep.subr.mxu0 0.0
    %1529 = vmatpush1.xpose.msra.mxu0 0.0
    %1530 = vmatprep.subr.mxu0 0.0
    %1531 = vmatpush1.xpose.msra.mxu0 0.0
    %1532 = vmatprep.subr.mxu0 0.0
    %1533 = vmatpush1.xpose.msra.mxu0 0.0
    %1534 = vmatprep.subr.mxu0 0.0
    %1535 = vmatpush1.xpose.msra.mxu0 0.0
    %1536 = vmatprep.subr.mxu0 0.0
    %1537 = vmatpush1.xpose.msra.mxu0 0.0
    %1538 = vmatprep.subr.mxu0 0.0
    %1539 = vmatpush1.xpose.msra.mxu0 0.0
    %1540 = vmatprep.mubr.f32.mxu0 0.0
    %1541 = vmatmul.mubr.f32.gmra.mrb[0].mxu0 %v1460
    %v1542 = vpop.f32.mrb[0].mxu0
    %v1543 = vadd.f32 %v165, %v1542
    %v1544 = vpop.f32.mrb[0].mxu0
    %1545 = vmatprep.mubr.f32.mxu0 0.0
    %1546 = vmatmul.mubr.f32.gmra.mrb[0].mxu0 %v1462
    %v1547 = vpop.f32.mrb[0].mxu0
    %v1548 = vadd.f32 %v166, %v1547
    %v1549 = vpop.f32.mrb[0].mxu0
    %1550 = vmatprep.mubr.f32.mxu0 0.0
    %1551 = vmatmul.mubr.f32.gmra.mrb[0].mxu0 %v1464
    %v1552 = vpop.f32.mrb[0].mxu0
    %v1553 = vadd.f32 %v167, %v1552
    %v1554 = vpop.f32.mrb[0].mxu0
    %1555 = vmatprep.mubr.f32.mxu0 0.0
    %1556 = vmatmul.mubr.f32.gmra.mrb[0].mxu0 %v1466
    %v1557 = vpop.f32.mrb[0].mxu0
    %v1558 = vadd.f32 %v168, %v1557
    %v1559 = vpop.f32.mrb[0].mxu0
    %1560 = vdwg.mxu0
    %v1561 = vsel %vm199, %v1543, -inf
    %1562 = vmax.xlane.f32.xlu0 %v1561
    %v1563 = vpop.xlane.xlu0 %1562
    %v1564 = vsel %vm199, %v1548, -inf
    %1565 = vmax.xlane.f32.xlu0 %v1564
    %v1566 = vpop.xlane.xlu0 %1565
    %v1567 = vsel %vm199, %v1553, -inf
    %1568 = vmax.xlane.f32.xlu0 %v1567
    %v1569 = vpop.xlane.xlu0 %1568
    %v1570 = vsel %vm199, %v1558, -inf
    %1571 = vmax.xlane.f32.xlu0 %v1570
    %v1572 = vpop.xlane.xlu0 %1571
    %v1573 = vsub.f32 %v1543, %v1563
    %v1574 = vsub.f32 %v1548, %v1566
    %v1575 = vsub.f32 %v1553, %v1569
    %v1576 = vsub.f32 %v1558, %v1572
    %v1577 = vmul.f32 %v1573, 1.442695
    %v1578 = vpow.pop %v1577
    %v1579 = vmul.f32 %v1574, 1.442695
    %v1580 = vpow.pop %v1579
    %v1581 = vmul.f32 %v1575, 1.442695
    %v1582 = vpow.pop %v1581
    %v1583 = vmul.f32 %v1576, 1.442695
    %v1584 = vpow.pop %v1583
    %v1585 = vsel %vm199, %v1578, 0.0
    %1586 = vadd.xlane.f32.xlu0 %v1585
    %v1587 = vpop.xlane.xlu0 %1586
    %v1588 = vsel %vm199, %v1580, 0.0
    %1589 = vadd.xlane.f32.xlu0 %v1588
    %v1590 = vpop.xlane.xlu0 %1589
    %v1591 = vsel %vm199, %v1582, 0.0
    %1592 = vadd.xlane.f32.xlu0 %v1591
    %v1593 = vpop.xlane.xlu0 %1592
    %v1594 = vsel %vm199, %v1584, 0.0
    %1595 = vadd.xlane.f32.xlu0 %v1594
    %v1596 = vpop.xlane.xlu0 %1595
    %v1597 = vrcp.pop %v1587
    %v1598 = vrcp.pop %v1590
    %v1599 = vrcp.pop %v1593
    %v1600 = vrcp.pop %v1596
    %v1601 = vmul.f32 %v1578, %v1597
    %v1602 = vmul.f32 %v1580, %v1598
    %v1603 = vmul.f32 %v1582, %v1599
    %v1604 = vmul.f32 %v1584, %v1600
    %1605 = vrot.lane.b32.xlu0 %v324, 40
    %v1606 = vpop.permute.xlu0 %1605
    %1607 = vrot.lane.b32.xlu0 %v329, 40
    %v1608 = vpop.permute.xlu0 %1607
    %1609 = vrot.lane.b32.xlu0 %v334, 40
    %v1610 = vpop.permute.xlu0 %1609
    %1611 = vrot.lane.b32.xlu0 %v339, 40
    %v1612 = vpop.permute.xlu0 %1611
    %v1618 = vsel %vm199, %v1601, 0
    %v1621 = vsel %vm199, %v1602, 0
    %v1624 = vsel %vm199, %v1603, 0
    %v1627 = vsel %vm199, %v1604, 0
    %1629 = vmatprep.subr.mxu0 0.0
    %1630 = vmatpush1.msra.mxu0 %v1606
    %1631 = vmatprep.subr.mxu0 0.0
    %1632 = vmatpush1.msra.mxu0 %v1608
    %1633 = vmatprep.subr.mxu0 0.0
    %1634 = vmatpush1.msra.mxu0 %v1610
    %1635 = vmatprep.subr.mxu0 0.0
    %1636 = vmatpush1.msra.mxu0 %v1612
    %1637 = vmatprep.subr.mxu0 0.0
    %1638 = vmatpush1.msra.mxu0 0.0
    %1639 = vmatprep.subr.mxu0 0.0
    %1640 = vmatpush1.msra.mxu0 0.0
    %1641 = vmatprep.subr.mxu0 0.0
    %1642 = vmatpush1.msra.mxu0 0.0
    %1643 = vmatprep.subr.mxu0 0.0
    %1644 = vmatpush1.msra.mxu0 0.0
    %1645 = vmatprep.subr.mxu0 0.0
    %1646 = vmatpush1.msra.mxu0 0.0
    %1647 = vmatprep.subr.mxu0 0.0
    %1648 = vmatpush1.msra.mxu0 0.0
    %1649 = vmatprep.subr.mxu0 0.0
    %1650 = vmatpush1.msra.mxu0 0.0
    %1651 = vmatprep.subr.mxu0 0.0
    %1652 = vmatpush1.msra.mxu0 0.0
    %1653 = vmatprep.subr.mxu0 0.0
    %1654 = vmatpush1.msra.mxu0 0.0
    %1655 = vmatprep.subr.mxu0 0.0
    %1656 = vmatpush1.msra.mxu0 0.0
    %1657 = vmatprep.subr.mxu0 0.0
    %1658 = vmatpush1.msra.mxu0 0.0
    %1659 = vmatprep.subr.mxu0 0.0
    %1660 = vmatpush1.msra.mxu0 0.0
    %1661 = vmatprep.subr.mxu0 0.0
    %1662 = vmatpush1.msra.mxu0 0.0
    %1663 = vmatprep.subr.mxu0 0.0
    %1664 = vmatpush1.msra.mxu0 0.0
    %1665 = vmatprep.subr.mxu0 0.0
    %1666 = vmatpush1.msra.mxu0 0.0
    %1667 = vmatprep.subr.mxu0 0.0
    %1668 = vmatpush1.msra.mxu0 0.0
    %1669 = vmatprep.subr.mxu0 0.0
    %1670 = vmatpush1.msra.mxu0 0.0
    %1671 = vmatprep.subr.mxu0 0.0
    %1672 = vmatpush1.msra.mxu0 0.0
    %1673 = vmatprep.subr.mxu0 0.0
    %1674 = vmatpush1.msra.mxu0 0.0
    %1675 = vmatprep.subr.mxu0 0.0
    %1676 = vmatpush1.msra.mxu0 0.0
    %1677 = vmatprep.subr.mxu0 0.0
    %1678 = vmatpush1.msra.mxu0 0.0
    %1679 = vmatprep.subr.mxu0 0.0
    %1680 = vmatpush1.msra.mxu0 0.0
    %1681 = vmatprep.subr.mxu0 0.0
    %1682 = vmatpush1.msra.mxu0 0.0
    %1683 = vmatprep.subr.mxu0 0.0
    %1684 = vmatpush1.msra.mxu0 0.0
    %1685 = vmatprep.subr.mxu0 0.0
    %1686 = vmatpush1.msra.mxu0 0.0
    %1687 = vmatprep.subr.mxu0 0.0
    %1688 = vmatpush1.msra.mxu0 0.0
    %1689 = vmatprep.subr.mxu0 0.0
    %1690 = vmatpush1.msra.mxu0 0.0
    %1691 = vmatprep.subr.mxu0 0.0
    %1692 = vmatpush1.msra.mxu0 0.0
    %1693 = vmatprep.mubr.f32.mxu0 0.0
    %1694 = vmatmul.mubr.f32.gmra.mrb[0].mxu0 %v1618
    %v1695 = vpop.f32.mrb[0].mxu0
    %v1696 = vadd.f32 0.0, %v1695
    %v1697 = vpop.f32.mrb[0].mxu0
    %1698 = vmatprep.mubr.f32.mxu0 0.0
    %1699 = vmatmul.mubr.f32.gmra.mrb[0].mxu0 %v1621
    %v1700 = vpop.f32.mrb[0].mxu0
    %v1701 = vadd.f32 0.0, %v1700
    %v1702 = vpop.f32.mrb[0].mxu0
    %1703 = vmatprep.mubr.f32.mxu0 0.0
    %1704 = vmatmul.mubr.f32.gmra.mrb[0].mxu0 %v1624
    %v1705 = vpop.f32.mrb[0].mxu0
    %v1706 = vadd.f32 0.0, %v1705
    %v1707 = vpop.f32.mrb[0].mxu0
    %1708 = vmatprep.mubr.f32.mxu0 0.0
    %1709 = vmatmul.mubr.f32.gmra.mrb[0].mxu0 %v1627
    %v1710 = vpop.f32.mrb[0].mxu0
    %v1711 = vadd.f32 0.0, %v1710
    %v1712 = vpop.f32.mrb[0].mxu0
    %1713 = vdwg.mxu0
    %v1715 = vsel %vm354, %v1696, 0
    %v1718 = vsel %vm354, %v1701, 0
    %v1721 = vsel %vm354, %v1706, 0
    %v1724 = vsel %vm354, %v1711, 0
    %1726 = vmatprep.subr.mxu0 0.0
    %1727 = vmatpush1.msra.mxu0 %v179
    %1728 = vmatprep.subr.mxu0 0.0
    %1729 = vmatpush1.msra.mxu0 0.0
    %1730 = vmatprep.subr.mxu0 0.0
    %1731 = vmatpush1.msra.mxu0 0.0
    %1732 = vmatprep.subr.mxu0 0.0
    %1733 = vmatpush1.msra.mxu0 0.0
    %1734 = vmatprep.subr.mxu0 0.0
    %1735 = vmatpush1.msra.mxu0 0.0
    %1736 = vmatprep.subr.mxu0 0.0
    %1737 = vmatpush1.msra.mxu0 0.0
    %1738 = vmatprep.subr.mxu0 0.0
    %1739 = vmatpush1.msra.mxu0 0.0
    %1740 = vmatprep.subr.mxu0 0.0
    %1741 = vmatpush1.msra.mxu0 0.0
    %1742 = vmatprep.subr.mxu0 0.0
    %1743 = vmatpush1.msra.mxu0 0.0
    %1744 = vmatprep.subr.mxu0 0.0
    %1745 = vmatpush1.msra.mxu0 0.0
    %1746 = vmatprep.subr.mxu0 0.0
    %1747 = vmatpush1.msra.mxu0 0.0
    %1748 = vmatprep.subr.mxu0 0.0
    %1749 = vmatpush1.msra.mxu0 0.0
    %1750 = vmatprep.subr.mxu0 0.0
    %1751 = vmatpush1.msra.mxu0 0.0
    %1752 = vmatprep.subr.mxu0 0.0
    %1753 = vmatpush1.msra.mxu0 0.0
    %1754 = vmatprep.subr.mxu0 0.0
    %1755 = vmatpush1.msra.mxu0 0.0
    %1756 = vmatprep.subr.mxu0 0.0
    %1757 = vmatpush1.msra.mxu0 0.0
    %1758 = vmatprep.subr.mxu0 0.0
    %1759 = vmatpush1.msra.mxu0 0.0
    %1760 = vmatprep.subr.mxu0 0.0
    %1761 = vmatpush1.msra.mxu0 0.0
    %1762 = vmatprep.subr.mxu0 0.0
    %1763 = vmatpush1.msra.mxu0 0.0
    %1764 = vmatprep.subr.mxu0 0.0
    %1765 = vmatpush1.msra.mxu0 0.0
    %1766 = vmatprep.subr.mxu0 0.0
    %1767 = vmatpush1.msra.mxu0 0.0
    %1768 = vmatprep.subr.mxu0 0.0
    %1769 = vmatpush1.msra.mxu0 0.0
    %1770 = vmatprep.subr.mxu0 0.0
    %1771 = vmatpush1.msra.mxu0 0.0
    %1772 = vmatprep.subr.mxu0 0.0
    %1773 = vmatpush1.msra.mxu0 0.0
    %1774 = vmatprep.subr.mxu0 0.0
    %1775 = vmatpush1.msra.mxu0 0.0
    %1776 = vmatprep.subr.mxu0 0.0
    %1777 = vmatpush1.msra.mxu0 0.0
    %1778 = vmatprep.subr.mxu0 0.0
    %1779 = vmatpush1.msra.mxu0 0.0
    %1780 = vmatprep.subr.mxu0 0.0
    %1781 = vmatpush1.msra.mxu0 0.0
    %1782 = vmatprep.subr.mxu0 0.0
    %1783 = vmatpush1.msra.mxu0 0.0
    %1784 = vmatprep.subr.mxu0 0.0
    %1785 = vmatpush1.msra.mxu0 0.0
    %1786 = vmatprep.subr.mxu0 0.0
    %1787 = vmatpush1.msra.mxu0 0.0
    %1788 = vmatprep.subr.mxu0 0.0
    %1789 = vmatpush1.msra.mxu0 0.0
    %1790 = vmatprep.mubr.f32.mxu0 0.0
    %1791 = vmatmul.mubr.f32.gmra.mrb[0].mxu0 %v1715
    %v1792 = vpop.f32.mrb[0].mxu0
    %v1793 = vadd.f32 0.0, %v1792
    %v1794 = vpop.f32.mrb[0].mxu0
    %1795 = vmatprep.mubr.f32.mxu0 0.0
    %1796 = vmatmul.mubr.f32.gmra.mrb[0].mxu0 %v1718
    %v1797 = vpop.f32.mrb[0].mxu0
    %v1798 = vadd.f32 0.0, %v1797
    %v1799 = vpop.f32.mrb[0].mxu0
    %1800 = vmatprep.mubr.f32.mxu0 0.0
    %1801 = vmatmul.mubr.f32.gmra.mrb[0].mxu0 %v1721
    %v1802 = vpop.f32.mrb[0].mxu0
    %v1803 = vadd.f32 0.0, %v1802
    %v1804 = vpop.f32.mrb[0].mxu0
    %1805 = vmatprep.mubr.f32.mxu0 0.0
    %1806 = vmatmul.mubr.f32.gmra.mrb[0].mxu0 %v1724
    %v1807 = vpop.f32.mrb[0].mxu0
    %v1808 = vadd.f32 0.0, %v1807
    %v1809 = vpop.f32.mrb[0].mxu0
    %1810 = vdwg.mxu0
    %v1811 = vadd.f32 %v1440, %v1793
    %v1812 = vadd.f32 %v1441, %v1798
    %v1813 = vadd.f32 %v1442, %v1803
    %v1814 = vadd.f32 %v1443, %v1808
    %v1815 = vadd.f32 %v147, %v1811
    %v1816 = vadd.f32 %v152, %v1812
    %v1817 = vadd.f32 %v157, %v1813
    %v1818 = vadd.f32 %v162, %v1814
    %v1820 = vlaneseq
    %v1821 = vshrl.u32 %v1820, 7
    %v1822 = vsub.s32 0, %v1821
    %v1823 = vrot.slane %v180, %v1822
    %v1825 = vadd.f32 %v1815, %v1823
    %v1826 = vadd.f32 %v1816, %v1823
    %v1827 = vadd.f32 %v1817, %v1823
    %v1828 = vadd.f32 %v1818, %v1823
    %v1829 = vmul.f32 %v1825, %v1825
    %v1830 = vmul.f32 %v1826, %v1826
    %v1831 = vmul.f32 %v1827, %v1827
    %v1832 = vmul.f32 %v1828, %v1828
    %v1833 = vsel %vm199, %v1829, 0.0
    %1834 = vadd.xlane.f32.xlu0 %v1833
    %v1835 = vpop.xlane.xlu0 %1834
    %v1836 = vsel %vm199, %v1830, 0.0
    %1837 = vadd.xlane.f32.xlu0 %v1836
    %v1838 = vpop.xlane.xlu0 %1837
    %v1839 = vsel %vm199, %v1831, 0.0
    %1840 = vadd.xlane.f32.xlu0 %v1839
    %v1841 = vpop.xlane.xlu0 %1840
    %v1842 = vsel %vm199, %v1832, 0.0
    %1843 = vadd.xlane.f32.xlu0 %v1842
    %v1844 = vpop.xlane.xlu0 %1843
    %v1845 = vmul.f32 %v1835, %v212
    %v1846 = vmul.f32 %v1838, %v212
    %v1847 = vmul.f32 %v1841, %v212
    %v1848 = vmul.f32 %v1844, %v212
    %v1849 = vadd.f32 %v1845, 1.1920929e-07
    %v1850 = vadd.f32 %v1846, 1.1920929e-07
    %v1851 = vadd.f32 %v1847, 1.1920929e-07
    %v1852 = vadd.f32 %v1848, 1.1920929e-07
    %v1853 = vrsqrt.pop %v1849
    %v1854 = vrsqrt.pop %v1850
    %v1855 = vrsqrt.pop %v1851
    %v1856 = vrsqrt.pop %v1852
    %v1857 = vmul.f32 %v1825, %v1853
    %v1858 = vmul.f32 %v1826, %v1854
    %v1859 = vmul.f32 %v1827, %v1855
    %v1860 = vmul.f32 %v1828, %v1856
    %v1862 = vlaneseq
    %v1863 = vshrl.u32 %v1862, 7
    %v1864 = vsub.s32 0, %v1863
    %v1865 = vrot.slane %v170, %v1864
    %v1867 = vmul.f32 %v1857, %v1865
    %v1868 = vmul.f32 %v1858, %v1865
    %v1869 = vmul.f32 %v1859, %v1865
    %v1870 = vmul.f32 %v1860, %v1865
    %v1872 = vlaneseq
    %v1873 = vshrl.u32 %v1872, 7
    %v1874 = vsub.s32 0, %v1873
    %v1875 = vrot.slane %v185, %v1874
    %v1878 = vsel %vm199, %v1867, 0
    %v1881 = vsel %vm199, %v1868, 0
    %v1884 = vsel %vm199, %v1869, 0
    %v1887 = vsel %vm199, %v1870, 0
    %1889 = vmatprep.subr.mxu0 0.0
    %1890 = vmatpush1.msra.mxu0 %v181
    %1891 = vmatprep.subr.mxu0 0.0
    %1892 = vmatpush1.msra.mxu0 %v182
    %1893 = vmatprep.subr.mxu0 0.0
    %1894 = vmatpush1.msra.mxu0 %v183
    %1895 = vmatprep.subr.mxu0 0.0
    %1896 = vmatpush1.msra.mxu0 %v184
    %1897 = vmatprep.subr.mxu0 0.0
    %1898 = vmatpush1.msra.mxu0 0.0
    %1899 = vmatprep.subr.mxu0 0.0
    %1900 = vmatpush1.msra.mxu0 0.0
    %1901 = vmatprep.subr.mxu0 0.0
    %1902 = vmatpush1.msra.mxu0 0.0
    %1903 = vmatprep.subr.mxu0 0.0
    %1904 = vmatpush1.msra.mxu0 0.0
    %1905 = vmatprep.subr.mxu0 0.0
    %1906 = vmatpush1.msra.mxu0 0.0
    %1907 = vmatprep.subr.mxu0 0.0
    %1908 = vmatpush1.msra.mxu0 0.0
    %1909 = vmatprep.subr.mxu0 0.0
    %1910 = vmatpush1.msra.mxu0 0.0
    %1911 = vmatprep.subr.mxu0 0.0
    %1912 = vmatpush1.msra.mxu0 0.0
    %1913 = vmatprep.subr.mxu0 0.0
    %1914 = vmatpush1.msra.mxu0 0.0
    %1915 = vmatprep.subr.mxu0 0.0
    %1916 = vmatpush1.msra.mxu0 0.0
    %1917 = vmatprep.subr.mxu0 0.0
    %1918 = vmatpush1.msra.mxu0 0.0
    %1919 = vmatprep.subr.mxu0 0.0
    %1920 = vmatpush1.msra.mxu0 0.0
    %1921 = vmatprep.subr.mxu0 0.0
    %1922 = vmatpush1.msra.mxu0 0.0
    %1923 = vmatprep.subr.mxu0 0.0
    %1924 = vmatpush1.msra.mxu0 0.0
    %1925 = vmatprep.subr.mxu0 0.0
    %1926 = vmatpush1.msra.mxu0 0.0
    %1927 = vmatprep.subr.mxu0 0.0
    %1928 = vmatpush1.msra.mxu0 0.0
    %1929 = vmatprep.subr.mxu0 0.0
    %1930 = vmatpush1.msra.mxu0 0.0
    %1931 = vmatprep.subr.mxu0 0.0
    %1932 = vmatpush1.msra.mxu0 0.0
    %1933 = vmatprep.subr.mxu0 0.0
    %1934 = vmatpush1.msra.mxu0 0.0
    %1935 = vmatprep.subr.mxu0 0.0
    %1936 = vmatpush1.msra.mxu0 0.0
    %1937 = vmatprep.subr.mxu0 0.0
    %1938 = vmatpush1.msra.mxu0 0.0
    %1939 = vmatprep.subr.mxu0 0.0
    %1940 = vmatpush1.msra.mxu0 0.0
    %1941 = vmatprep.subr.mxu0 0.0
    %1942 = vmatpush1.msra.mxu0 0.0
    %1943 = vmatprep.subr.mxu0 0.0
    %1944 = vmatpush1.msra.mxu0 0.0
    %1945 = vmatprep.subr.mxu0 0.0
    %1946 = vmatpush1.msra.mxu0 0.0
    %1947 = vmatprep.subr.mxu0 0.0
    %1948 = vmatpush1.msra.mxu0 0.0
    %1949 = vmatprep.subr.mxu0 0.0
    %1950 = vmatpush1.msra.mxu0 0.0
    %1951 = vmatprep.subr.mxu0 0.0
    %1952 = vmatpush1.msra.mxu0 0.0
    %1953 = vmatprep.mubr.f32.mxu0 0.0
    %1954 = vmatmul.mubr.f32.gmra.mrb[0].mxu0 %v1878
    %v1955 = vpop.f32.mrb[0].mxu0
    %v1956 = vadd.f32 %v1875, %v1955
    %v1957 = vpop.f32.mrb[0].mxu0
    %1958 = vmatprep.mubr.f32.mxu0 0.0
    %1959 = vmatmul.mubr.f32.gmra.mrb[0].mxu0 %v1881
    %v1960 = vpop.f32.mrb[0].mxu0
    %v1961 = vadd.f32 %v1875, %v1960
    %v1962 = vpop.f32.mrb[0].mxu0
    %1963 = vmatprep.mubr.f32.mxu0 0.0
    %1964 = vmatmul.mubr.f32.gmra.mrb[0].mxu0 %v1884
    %v1965 = vpop.f32.mrb[0].mxu0
    %v1966 = vadd.f32 %v1875, %v1965
    %v1967 = vpop.f32.mrb[0].mxu0
    %1968 = vmatprep.mubr.f32.mxu0 0.0
    %1969 = vmatmul.mubr.f32.gmra.mrb[0].mxu0 %v1887
    %v1970 = vpop.f32.mrb[0].mxu0
    %v1971 = vadd.f32 %v1875, %v1970
    %v1972 = vpop.f32.mrb[0].mxu0
    %1973 = vdwg.mxu0
    %v1974 = vmax.f32 %v1956, 0.0
    %v1975 = vmax.f32 %v1961, 0.0
    %v1976 = vmax.f32 %v1966, 0.0
    %v1977 = vmax.f32 %v1971, 0.0
    %v1978 = vmul.f32 %v1974, %v1974
    %v1979 = vmul.f32 %v1975, %v1975
    %v1980 = vmul.f32 %v1976, %v1976
    %v1981 = vmul.f32 %v1977, %v1977
    %v1983 = vsel %vm67, %v1978, 0
    %v1986 = vsel %vm67, %v1979, 0
    %v1989 = vsel %vm67, %v1980, 0
    %v1992 = vsel %vm67, %v1981, 0
    %1994 = vmatprep.subr.mxu0 0.0
    %1995 = vmatpush1.msra.mxu0 %v186
    %1996 = vmatprep.subr.mxu0 0.0
    %1997 = vmatpush1.msra.mxu0 %v187
    %1998 = vmatprep.subr.mxu0 0.0
    %1999 = vmatpush1.msra.mxu0 %v188
    %2000 = vmatprep.subr.mxu0 0.0
    %2001 = vmatpush1.msra.mxu0 %v189
    %2002 = vmatprep.subr.mxu0 0.0
    %2003 = vmatpush1.msra.mxu0 %v190
    %2004 = vmatprep.subr.mxu0 0.0
    %2005 = vmatpush1.msra.mxu0 %v191
    %2006 = vmatprep.subr.mxu0 0.0
    %2007 = vmatpush1.msra.mxu0 %v192
    %2008 = vmatprep.subr.mxu0 0.0
    %2009 = vmatpush1.msra.mxu0 %v193
    %2010 = vmatprep.subr.mxu0 0.0
    %2011 = vmatpush1.msra.mxu0 0.0
    %2012 = vmatprep.subr.mxu0 0.0
    %2013 = vmatpush1.msra.mxu0 0.0
    %2014 = vmatprep.subr.mxu0 0.0
    %2015 = vmatpush1.msra.mxu0 0.0
    %2016 = vmatprep.subr.mxu0 0.0
    %2017 = vmatpush1.msra.mxu0 0.0
    %2018 = vmatprep.subr.mxu0 0.0
    %2019 = vmatpush1.msra.mxu0 0.0
    %2020 = vmatprep.subr.mxu0 0.0
    %2021 = vmatpush1.msra.mxu0 0.0
    %2022 = vmatprep.subr.mxu0 0.0
    %2023 = vmatpush1.msra.mxu0 0.0
    %2024 = vmatprep.subr.mxu0 0.0
    %2025 = vmatpush1.msra.mxu0 0.0
    %2026 = vmatprep.subr.mxu0 0.0
    %2027 = vmatpush1.msra.mxu0 0.0
    %2028 = vmatprep.subr.mxu0 0.0
    %2029 = vmatpush1.msra.mxu0 0.0
    %2030 = vmatprep.subr.mxu0 0.0
    %2031 = vmatpush1.msra.mxu0 0.0
    %2032 = vmatprep.subr.mxu0 0.0
    %2033 = vmatpush1.msra.mxu0 0.0
    %2034 = vmatprep.subr.mxu0 0.0
    %2035 = vmatpush1.msra.mxu0 0.0
    %2036 = vmatprep.subr.mxu0 0.0
    %2037 = vmatpush1.msra.mxu0 0.0
    %2038 = vmatprep.subr.mxu0 0.0
    %2039 = vmatpush1.msra.mxu0 0.0
    %2040 = vmatprep.subr.mxu0 0.0
    %2041 = vmatpush1.msra.mxu0 0.0
    %2042 = vmatprep.subr.mxu0 0.0
    %2043 = vmatpush1.msra.mxu0 0.0
    %2044 = vmatprep.subr.mxu0 0.0
    %2045 = vmatpush1.msra.mxu0 0.0
    %2046 = vmatprep.subr.mxu0 0.0
    %2047 = vmatpush1.msra.mxu0 0.0
    %2048 = vmatprep.subr.mxu0 0.0
    %2049 = vmatpush1.msra.mxu0 0.0
    %2050 = vmatprep.subr.mxu0 0.0
    %2051 = vmatpush1.msra.mxu0 0.0
    %2052 = vmatprep.subr.mxu0 0.0
    %2053 = vmatpush1.msra.mxu0 0.0
    %2054 = vmatprep.subr.mxu0 0.0
    %2055 = vmatpush1.msra.mxu0 0.0
    %2056 = vmatprep.subr.mxu0 0.0
    %2057 = vmatpush1.msra.mxu0 0.0
    %2058 = vmatprep.mubr.f32.mxu0 0.0
    %2059 = vmatmul.mubr.f32.gmra.mrb[0].mxu0 %v1983
    %v2060 = vpop.f32.mrb[0].mxu0
    %v2061 = vadd.f32 0.0, %v2060
    %v2062 = vpop.f32.mrb[0].mxu0
    %2063 = vmatprep.mubr.f32.mxu0 0.0
    %2064 = vmatmul.mubr.f32.gmra.mrb[0].mxu0 %v1986
    %v2065 = vpop.f32.mrb[0].mxu0
    %v2066 = vadd.f32 0.0, %v2065
    %v2067 = vpop.f32.mrb[0].mxu0
    %2068 = vmatprep.mubr.f32.mxu0 0.0
    %2069 = vmatmul.mubr.f32.gmra.mrb[0].mxu0 %v1989
    %v2070 = vpop.f32.mrb[0].mxu0
    %v2071 = vadd.f32 0.0, %v2070
    %v2072 = vpop.f32.mrb[0].mxu0
    %2073 = vmatprep.mubr.f32.mxu0 0.0
    %2074 = vmatmul.mubr.f32.gmra.mrb[0].mxu0 %v1992
    %v2075 = vpop.f32.mrb[0].mxu0
    %v2076 = vadd.f32 0.0, %v2075
    %v2077 = vpop.f32.mrb[0].mxu0
    %2078 = vdwg.mxu0
    %v2079 = vadd.f32 %v1825, %v2061
    %v2080 = vadd.f32 %v1826, %v2066
    %v2081 = vadd.f32 %v1827, %v2071
    %v2082 = vadd.f32 %v1828, %v2076
    %v2084 = vlaneseq
    %v2085 = vshrl.u32 %v2084, 7
    %v2086 = vsub.s32 0, %v2085
    %v2087 = vrot.slane %v194, %v2086
    %v2089 = vadd.f32 %v2079, %v2087
    %v2090 = vadd.f32 %v2080, %v2087
    %v2091 = vadd.f32 %v2081, %v2087
    %v2092 = vadd.f32 %v2082, %v2087
    %s2093 = scalar_lea.vmem %s12, 1
    %v2094 = vld [vmem:[%s2093] sm:$0x1]
    %s2095 = scalar_lea.vmem %s13, 1
    %v2096 = vld [vmem:[%s2095] sm:$0x1]
    %s2097 = scalar_lea.vmem %s4, 32
    %v2098 = vld [vmem:[%s2097] sm:$0xff]
    %v2099 = vld [vmem:[%s2097 + $0x8] sm:$0xff]
    %v2100 = vld [vmem:[%s2097 + $0x10] sm:$0xff]
    %v2101 = vld [vmem:[%s2097 + $0x18] sm:$0xff]
    %s2102 = scalar_lea.vmem %s5, 1
    %v2103 = vld [vmem:[%s2102] sm:$0x1]
    %s2104 = scalar_lea.vmem %s6, 32
    %v2105 = vld [vmem:[%s2104] sm:$0xff]
    %v2106 = vld [vmem:[%s2104 + $0x8] sm:$0xff]
    %v2107 = vld [vmem:[%s2104 + $0x10] sm:$0xff]
    %v2108 = vld [vmem:[%s2104 + $0x18] sm:$0xff]
    %s2109 = scalar_lea.vmem %s7, 1
    %v2110 = vld [vmem:[%s2109] sm:$0x1]
    %s2111 = scalar_lea.vmem %s8, 32
    %v2112 = vld [vmem:[%s2111] sm:$0xff]
    %v2113 = vld [vmem:[%s2111 + $0x8] sm:$0xff]
    %v2114 = vld [vmem:[%s2111 + $0x10] sm:$0xff]
    %v2115 = vld [vmem:[%s2111 + $0x18] sm:$0xff]
    %s2116 = scalar_lea.vmem %s9, 1
    %v2117 = vld [vmem:[%s2116] sm:$0x1]
    %s2118 = scalar_lea.vmem %s10, 64
    %v2119 = vld [vmem:[%s2118] sm:$0xff]
    %v2120 = vld [vmem:[%s2118 + $0x8] sm:$0xff]
    %v2121 = vld [vmem:[%s2118 + $0x10] sm:$0xff]
    %v2122 = vld [vmem:[%s2118 + $0x18] sm:$0xff]
    %v2123 = vld [vmem:[%s2118 + $0x20] sm:$0xff]
    %v2124 = vld [vmem:[%s2118 + $0x28] sm:$0xff]
    %v2125 = vld [vmem:[%s2118 + $0x30] sm:$0xff]
    %v2126 = vld [vmem:[%s2118 + $0x38] sm:$0xff]
    %s2127 = scalar_lea.vmem %s11, 1
    %v2128 = vld [vmem:[%s2127] sm:$0x1]
    %v2129 = vmul.f32 %v2089, %v2089
    %v2130 = vmul.f32 %v2090, %v2090
    %v2131 = vmul.f32 %v2091, %v2091
    %v2132 = vmul.f32 %v2092, %v2092
    %v2133 = vsel %vm199, %v2129, 0.0
    %2134 = vadd.xlane.f32.xlu0 %v2133
    %v2135 = vpop.xlane.xlu0 %2134
    %v2136 = vsel %vm199, %v2130, 0.0
    %2137 = vadd.xlane.f32.xlu0 %v2136
    %v2138 = vpop.xlane.xlu0 %2137
    %v2139 = vsel %vm199, %v2131, 0.0
    %2140 = vadd.xlane.f32.xlu0 %v2139
    %v2141 = vpop.xlane.xlu0 %2140
    %v2142 = vsel %vm199, %v2132, 0.0
    %2143 = vadd.xlane.f32.xlu0 %v2142
    %v2144 = vpop.xlane.xlu0 %2143
    %v2145 = vmul.f32 %v2135, %v212
    %v2146 = vmul.f32 %v2138, %v212
    %v2147 = vmul.f32 %v2141, %v212
    %v2148 = vmul.f32 %v2144, %v212
    %v2149 = vadd.f32 %v2145, 1.1920929e-07
    %v2150 = vadd.f32 %v2146, 1.1920929e-07
    %v2151 = vadd.f32 %v2147, 1.1920929e-07
    %v2152 = vadd.f32 %v2148, 1.1920929e-07
    %v2153 = vrsqrt.pop %v2149
    %v2154 = vrsqrt.pop %v2150
    %v2155 = vrsqrt.pop %v2151
    %v2156 = vrsqrt.pop %v2152
    %v2157 = vmul.f32 %v2089, %v2153
    %v2158 = vmul.f32 %v2090, %v2154
    %v2159 = vmul.f32 %v2091, %v2155
    %v2160 = vmul.f32 %v2092, %v2156
    %v2162 = vlaneseq
    %v2163 = vshrl.u32 %v2162, 7
    %v2164 = vsub.s32 0, %v2163
    %v2165 = vrot.slane %v2094, %v2164
    %v2167 = vmul.f32 %v2157, %v2165
    %v2168 = vmul.f32 %v2158, %v2165
    %v2169 = vmul.f32 %v2159, %v2165
    %v2170 = vmul.f32 %v2160, %v2165
    %v2172 = vlaneseq
    %v2173 = vshrl.u32 %v2172, 7
    %v2174 = vsub.s32 0, %v2173
    %v2175 = vrot.slane %v2103, %v2174
    %v2178 = vsel %vm199, %v2167, 0
    %v2181 = vsel %vm199, %v2168, 0
    %v2184 = vsel %vm199, %v2169, 0
    %v2187 = vsel %vm199, %v2170, 0
    %2189 = vmatprep.subr.mxu0 0.0
    %2190 = vmatpush1.msra.mxu0 %v2098
    %2191 = vmatprep.subr.mxu0 0.0
    %2192 = vmatpush1.msra.mxu0 %v2099
    %2193 = vmatprep.subr.mxu0 0.0
    %2194 = vmatpush1.msra.mxu0 %v2100
    %2195 = vmatprep.subr.mxu0 0.0
    %2196 = vmatpush1.msra.mxu0 %v2101
    %2197 = vmatprep.subr.mxu0 0.0
    %2198 = vmatpush1.msra.mxu0 0.0
    %2199 = vmatprep.subr.mxu0 0.0
    %2200 = vmatpush1.msra.mxu0 0.0
    %2201 = vmatprep.subr.mxu0 0.0
    %2202 = vmatpush1.msra.mxu0 0.0
    %2203 = vmatprep.subr.mxu0 0.0
    %2204 = vmatpush1.msra.mxu0 0.0
    %2205 = vmatprep.subr.mxu0 0.0
    %2206 = vmatpush1.msra.mxu0 0.0
    %2207 = vmatprep.subr.mxu0 0.0
    %2208 = vmatpush1.msra.mxu0 0.0
    %2209 = vmatprep.subr.mxu0 0.0
    %2210 = vmatpush1.msra.mxu0 0.0
    %2211 = vmatprep.subr.mxu0 0.0
    %2212 = vmatpush1.msra.mxu0 0.0
    %2213 = vmatprep.subr.mxu0 0.0
    %2214 = vmatpush1.msra.mxu0 0.0
    %2215 = vmatprep.subr.mxu0 0.0
    %2216 = vmatpush1.msra.mxu0 0.0
    %2217 = vmatprep.subr.mxu0 0.0
    %2218 = vmatpush1.msra.mxu0 0.0
    %2219 = vmatprep.subr.mxu0 0.0
    %2220 = vmatpush1.msra.mxu0 0.0
    %2221 = vmatprep.subr.mxu0 0.0
    %2222 = vmatpush1.msra.mxu0 0.0
    %2223 = vmatprep.subr.mxu0 0.0
    %2224 = vmatpush1.msra.mxu0 0.0
    %2225 = vmatprep.subr.mxu0 0.0
    %2226 = vmatpush1.msra.mxu0 0.0
    %2227 = vmatprep.subr.mxu0 0.0
    %2228 = vmatpush1.msra.mxu0 0.0
    %2229 = vmatprep.subr.mxu0 0.0
    %2230 = vmatpush1.msra.mxu0 0.0
    %2231 = vmatprep.subr.mxu0 0.0
    %2232 = vmatpush1.msra.mxu0 0.0
    %2233 = vmatprep.subr.mxu0 0.0
    %2234 = vmatpush1.msra.mxu0 0.0
    %2235 = vmatprep.subr.mxu0 0.0
    %2236 = vmatpush1.msra.mxu0 0.0
    %2237 = vmatprep.subr.mxu0 0.0
    %2238 = vmatpush1.msra.mxu0 0.0
    %2239 = vmatprep.subr.mxu0 0.0
    %2240 = vmatpush1.msra.mxu0 0.0
    %2241 = vmatprep.subr.mxu0 0.0
    %2242 = vmatpush1.msra.mxu0 0.0
    %2243 = vmatprep.subr.mxu0 0.0
    %2244 = vmatpush1.msra.mxu0 0.0
    %2245 = vmatprep.subr.mxu0 0.0
    %2246 = vmatpush1.msra.mxu0 0.0
    %2247 = vmatprep.subr.mxu0 0.0
    %2248 = vmatpush1.msra.mxu0 0.0
    %2249 = vmatprep.subr.mxu0 0.0
    %2250 = vmatpush1.msra.mxu0 0.0
    %2251 = vmatprep.subr.mxu0 0.0
    %2252 = vmatpush1.msra.mxu0 0.0
    %2253 = vmatprep.mubr.f32.mxu0 0.0
    %2254 = vmatmul.mubr.f32.gmra.mrb[0].mxu0 %v2178
    %v2255 = vpop.f32.mrb[0].mxu0
    %v2256 = vadd.f32 %v2175, %v2255
    %v2257 = vpop.f32.mrb[0].mxu0
    %2258 = vmatprep.mubr.f32.mxu0 0.0
    %2259 = vmatmul.mubr.f32.gmra.mrb[0].mxu0 %v2181
    %v2260 = vpop.f32.mrb[0].mxu0
    %v2261 = vadd.f32 %v2175, %v2260
    %v2262 = vpop.f32.mrb[0].mxu0
    %2263 = vmatprep.mubr.f32.mxu0 0.0
    %2264 = vmatmul.mubr.f32.gmra.mrb[0].mxu0 %v2184
    %v2265 = vpop.f32.mrb[0].mxu0
    %v2266 = vadd.f32 %v2175, %v2265
    %v2267 = vpop.f32.mrb[0].mxu0
    %2268 = vmatprep.mubr.f32.mxu0 0.0
    %2269 = vmatmul.mubr.f32.gmra.mrb[0].mxu0 %v2187
    %v2270 = vpop.f32.mrb[0].mxu0
    %v2271 = vadd.f32 %v2175, %v2270
    %v2272 = vpop.f32.mrb[0].mxu0
    %2273 = vdwg.mxu0
    %2278 = vrot.lane.b32.xlu0 %v2256, 96
    %v2279 = vpop.permute.xlu0 %2278
    %2280 = vrot.lane.b32.xlu0 %v2261, 96
    %v2281 = vpop.permute.xlu0 %2280
    %2282 = vrot.lane.b32.xlu0 %v2266, 96
    %v2283 = vpop.permute.xlu0 %2282
    %2284 = vrot.lane.b32.xlu0 %v2271, 96
    %v2285 = vpop.permute.xlu0 %2284
    %v2286 = vsel %vm354, %v2256, 0
    %v2288 = vsel %vm354, %v2261, 0
    %v2290 = vsel %vm354, %v2266, 0
    %v2292 = vsel %vm354, %v2271, 0
    %v2294 = vsel %vm354, %v2279, 0
    %v2296 = vsel %vm354, %v2281, 0
    %v2298 = vsel %vm354, %v2283, 0
    %v2300 = vsel %vm354, %v2285, 0
    %2302 = vmatprep.subr.mxu0 0.0
    %2303 = vmatpush1.xpose.msra.mxu0 %v2294
    %2304 = vmatprep.subr.mxu0 0.0
    %2305 = vmatpush1.xpose.msra.mxu0 %v2296
    %2306 = vmatprep.subr.mxu0 0.0
    %2307 = vmatpush1.xpose.msra.mxu0 %v2298
    %2308 = vmatprep.subr.mxu0 0.0
    %2309 = vmatpush1.xpose.msra.mxu0 %v2300
    %2310 = vmatprep.subr.mxu0 0.0
    %2311 = vmatpush1.xpose.msra.mxu0 0.0
    %2312 = vmatprep.subr.mxu0 0.0
    %2313 = vmatpush1.xpose.msra.mxu0 0.0
    %2314 = vmatprep.subr.mxu0 0.0
    %2315 = vmatpush1.xpose.msra.mxu0 0.0
    %2316 = vmatprep.subr.mxu0 0.0
    %2317 = vmatpush1.xpose.msra.mxu0 0.0
    %2318 = vmatprep.subr.mxu0 0.0
    %2319 = vmatpush1.xpose.msra.mxu0 0.0
    %2320 = vmatprep.subr.mxu0 0.0
    %2321 = vmatpush1.xpose.msra.mxu0 0.0
    %2322 = vmatprep.subr.mxu0 0.0
    %2323 = vmatpush1.xpose.msra.mxu0 0.0
    %2324 = vmatprep.subr.mxu0 0.0
    %2325 = vmatpush1.xpose.msra.mxu0 0.0
    %2326 = vmatprep.subr.mxu0 0.0
    %2327 = vmatpush1.xpose.msra.mxu0 0.0
    %2328 = vmatprep.subr.mxu0 0.0
    %2329 = vmatpush1.xpose.msra.mxu0 0.0
    %2330 = vmatprep.subr.mxu0 0.0
    %2331 = vmatpush1.xpose.msra.mxu0 0.0
    %2332 = vmatprep.subr.mxu0 0.0
    %2333 = vmatpush1.xpose.msra.mxu0 0.0
    %2334 = vmatprep.subr.mxu0 0.0
    %2335 = vmatpush1.xpose.msra.mxu0 0.0
    %2336 = vmatprep.subr.mxu0 0.0
    %2337 = vmatpush1.xpose.msra.mxu0 0.0
    %2338 = vmatprep.subr.mxu0 0.0
    %2339 = vmatpush1.xpose.msra.mxu0 0.0
    %2340 = vmatprep.subr.mxu0 0.0
    %2341 = vmatpush1.xpose.msra.mxu0 0.0
    %2342 = vmatprep.subr.mxu0 0.0
    %2343 = vmatpush1.xpose.msra.mxu0 0.0
    %2344 = vmatprep.subr.mxu0 0.0
    %2345 = vmatpush1.xpose.msra.mxu0 0.0
    %2346 = vmatprep.subr.mxu0 0.0
    %2347 = vmatpush1.xpose.msra.mxu0 0.0
    %2348 = vmatprep.subr.mxu0 0.0
    %2349 = vmatpush1.xpose.msra.mxu0 0.0
    %2350 = vmatprep.subr.mxu0 0.0
    %2351 = vmatpush1.xpose.msra.mxu0 0.0
    %2352 = vmatprep.subr.mxu0 0.0
    %2353 = vmatpush1.xpose.msra.mxu0 0.0
    %2354 = vmatprep.subr.mxu0 0.0
    %2355 = vmatpush1.xpose.msra.mxu0 0.0
    %2356 = vmatprep.subr.mxu0 0.0
    %2357 = vmatpush1.xpose.msra.mxu0 0.0
    %2358 = vmatprep.subr.mxu0 0.0
    %2359 = vmatpush1.xpose.msra.mxu0 0.0
    %2360 = vmatprep.subr.mxu0 0.0
    %2361 = vmatpush1.xpose.msra.mxu0 0.0
    %2362 = vmatprep.subr.mxu0 0.0
    %2363 = vmatpush1.xpose.msra.mxu0 0.0
    %2364 = vmatprep.subr.mxu0 0.0
    %2365 = vmatpush1.xpose.msra.mxu0 0.0
    %2366 = vmatprep.mubr.f32.mxu0 0.0
    %2367 = vmatmul.mubr.f32.gmra.mrb[0].mxu0 %v2286
    %v2368 = vpop.f32.mrb[0].mxu0
    %v2369 = vadd.f32 %v165, %v2368
    %v2370 = vpop.f32.mrb[0].mxu0
    %2371 = vmatprep.mubr.f32.mxu0 0.0
    %2372 = vmatmul.mubr.f32.gmra.mrb[0].mxu0 %v2288
    %v2373 = vpop.f32.mrb[0].mxu0
    %v2374 = vadd.f32 %v166, %v2373
    %v2375 = vpop.f32.mrb[0].mxu0
    %2376 = vmatprep.mubr.f32.mxu0 0.0
    %2377 = vmatmul.mubr.f32.gmra.mrb[0].mxu0 %v2290
    %v2378 = vpop.f32.mrb[0].mxu0
    %v2379 = vadd.f32 %v167, %v2378
    %v2380 = vpop.f32.mrb[0].mxu0
    %2381 = vmatprep.mubr.f32.mxu0 0.0
    %2382 = vmatmul.mubr.f32.gmra.mrb[0].mxu0 %v2292
    %v2383 = vpop.f32.mrb[0].mxu0
    %v2384 = vadd.f32 %v168, %v2383
    %v2385 = vpop.f32.mrb[0].mxu0
    %2386 = vdwg.mxu0
    %v2387 = vsel %vm199, %v2369, -inf
    %2388 = vmax.xlane.f32.xlu0 %v2387
    %v2389 = vpop.xlane.xlu0 %2388
    %v2390 = vsel %vm199, %v2374, -inf
    %2391 = vmax.xlane.f32.xlu0 %v2390
    %v2392 = vpop.xlane.xlu0 %2391
    %v2393 = vsel %vm199, %v2379, -inf
    %2394 = vmax.xlane.f32.xlu0 %v2393
    %v2395 = vpop.xlane.xlu0 %2394
    %v2396 = vsel %vm199, %v2384, -inf
    %2397 = vmax.xlane.f32.xlu0 %v2396
    %v2398 = vpop.xlane.xlu0 %2397
    %v2399 = vsub.f32 %v2369, %v2389
    %v2400 = vsub.f32 %v2374, %v2392
    %v2401 = vsub.f32 %v2379, %v2395
    %v2402 = vsub.f32 %v2384, %v2398
    %v2403 = vmul.f32 %v2399, 1.442695
    %v2404 = vpow.pop %v2403
    %v2405 = vmul.f32 %v2400, 1.442695
    %v2406 = vpow.pop %v2405
    %v2407 = vmul.f32 %v2401, 1.442695
    %v2408 = vpow.pop %v2407
    %v2409 = vmul.f32 %v2402, 1.442695
    %v2410 = vpow.pop %v2409
    %v2411 = vsel %vm199, %v2404, 0.0
    %2412 = vadd.xlane.f32.xlu0 %v2411
    %v2413 = vpop.xlane.xlu0 %2412
    %v2414 = vsel %vm199, %v2406, 0.0
    %2415 = vadd.xlane.f32.xlu0 %v2414
    %v2416 = vpop.xlane.xlu0 %2415
    %v2417 = vsel %vm199, %v2408, 0.0
    %2418 = vadd.xlane.f32.xlu0 %v2417
    %v2419 = vpop.xlane.xlu0 %2418
    %v2420 = vsel %vm199, %v2410, 0.0
    %2421 = vadd.xlane.f32.xlu0 %v2420
    %v2422 = vpop.xlane.xlu0 %2421
    %v2423 = vrcp.pop %v2413
    %v2424 = vrcp.pop %v2416
    %v2425 = vrcp.pop %v2419
    %v2426 = vrcp.pop %v2422
    %v2427 = vmul.f32 %v2404, %v2423
    %v2428 = vmul.f32 %v2406, %v2424
    %v2429 = vmul.f32 %v2408, %v2425
    %v2430 = vmul.f32 %v2410, %v2426
    %2431 = vrot.lane.b32.xlu0 %v2256, 64
    %v2432 = vpop.permute.xlu0 %2431
    %2433 = vrot.lane.b32.xlu0 %v2261, 64
    %v2434 = vpop.permute.xlu0 %2433
    %2435 = vrot.lane.b32.xlu0 %v2266, 64
    %v2436 = vpop.permute.xlu0 %2435
    %2437 = vrot.lane.b32.xlu0 %v2271, 64
    %v2438 = vpop.permute.xlu0 %2437
    %v2444 = vsel %vm199, %v2427, 0
    %v2447 = vsel %vm199, %v2428, 0
    %v2450 = vsel %vm199, %v2429, 0
    %v2453 = vsel %vm199, %v2430, 0
    %2455 = vmatprep.subr.mxu0 0.0
    %2456 = vmatpush1.msra.mxu0 %v2432
    %2457 = vmatprep.subr.mxu0 0.0
    %2458 = vmatpush1.msra.mxu0 %v2434
    %2459 = vmatprep.subr.mxu0 0.0
    %2460 = vmatpush1.msra.mxu0 %v2436
    %2461 = vmatprep.subr.mxu0 0.0
    %2462 = vmatpush1.msra.mxu0 %v2438
    %2463 = vmatprep.subr.mxu0 0.0
    %2464 = vmatpush1.msra.mxu0 0.0
    %2465 = vmatprep.subr.mxu0 0.0
    %2466 = vmatpush1.msra.mxu0 0.0
    %2467 = vmatprep.subr.mxu0 0.0
    %2468 = vmatpush1.msra.mxu0 0.0
    %2469 = vmatprep.subr.mxu0 0.0
    %2470 = vmatpush1.msra.mxu0 0.0
    %2471 = vmatprep.subr.mxu0 0.0
    %2472 = vmatpush1.msra.mxu0 0.0
    %2473 = vmatprep.subr.mxu0 0.0
    %2474 = vmatpush1.msra.mxu0 0.0
    %2475 = vmatprep.subr.mxu0 0.0
    %2476 = vmatpush1.msra.mxu0 0.0
    %2477 = vmatprep.subr.mxu0 0.0
    %2478 = vmatpush1.msra.mxu0 0.0
    %2479 = vmatprep.subr.mxu0 0.0
    %2480 = vmatpush1.msra.mxu0 0.0
    %2481 = vmatprep.subr.mxu0 0.0
    %2482 = vmatpush1.msra.mxu0 0.0
    %2483 = vmatprep.subr.mxu0 0.0
    %2484 = vmatpush1.msra.mxu0 0.0
    %2485 = vmatprep.subr.mxu0 0.0
    %2486 = vmatpush1.msra.mxu0 0.0
    %2487 = vmatprep.subr.mxu0 0.0
    %2488 = vmatpush1.msra.mxu0 0.0
    %2489 = vmatprep.subr.mxu0 0.0
    %2490 = vmatpush1.msra.mxu0 0.0
    %2491 = vmatprep.subr.mxu0 0.0
    %2492 = vmatpush1.msra.mxu0 0.0
    %2493 = vmatprep.subr.mxu0 0.0
    %2494 = vmatpush1.msra.mxu0 0.0
    %2495 = vmatprep.subr.mxu0 0.0
    %2496 = vmatpush1.msra.mxu0 0.0
    %2497 = vmatprep.subr.mxu0 0.0
    %2498 = vmatpush1.msra.mxu0 0.0
    %2499 = vmatprep.subr.mxu0 0.0
    %2500 = vmatpush1.msra.mxu0 0.0
    %2501 = vmatprep.subr.mxu0 0.0
    %2502 = vmatpush1.msra.mxu0 0.0
    %2503 = vmatprep.subr.mxu0 0.0
    %2504 = vmatpush1.msra.mxu0 0.0
    %2505 = vmatprep.subr.mxu0 0.0
    %2506 = vmatpush1.msra.mxu0 0.0
    %2507 = vmatprep.subr.mxu0 0.0
    %2508 = vmatpush1.msra.mxu0 0.0
    %2509 = vmatprep.subr.mxu0 0.0
    %2510 = vmatpush1.msra.mxu0 0.0
    %2511 = vmatprep.subr.mxu0 0.0
    %2512 = vmatpush1.msra.mxu0 0.0
    %2513 = vmatprep.subr.mxu0 0.0
    %2514 = vmatpush1.msra.mxu0 0.0
    %2515 = vmatprep.subr.mxu0 0.0
    %2516 = vmatpush1.msra.mxu0 0.0
    %2517 = vmatprep.subr.mxu0 0.0
    %2518 = vmatpush1.msra.mxu0 0.0
    %2519 = vmatprep.mubr.f32.mxu0 0.0
    %2520 = vmatmul.mubr.f32.gmra.mrb[0].mxu0 %v2444
    %v2521 = vpop.f32.mrb[0].mxu0
    %v2522 = vadd.f32 0.0, %v2521
    %v2523 = vpop.f32.mrb[0].mxu0
    %2524 = vmatprep.mubr.f32.mxu0 0.0
    %2525 = vmatmul.mubr.f32.gmra.mrb[0].mxu0 %v2447
    %v2526 = vpop.f32.mrb[0].mxu0
    %v2527 = vadd.f32 0.0, %v2526
    %v2528 = vpop.f32.mrb[0].mxu0
    %2529 = vmatprep.mubr.f32.mxu0 0.0
    %2530 = vmatmul.mubr.f32.gmra.mrb[0].mxu0 %v2450
    %v2531 = vpop.f32.mrb[0].mxu0
    %v2532 = vadd.f32 0.0, %v2531
    %v2533 = vpop.f32.mrb[0].mxu0
    %2534 = vmatprep.mubr.f32.mxu0 0.0
    %2535 = vmatmul.mubr.f32.gmra.mrb[0].mxu0 %v2453
    %v2536 = vpop.f32.mrb[0].mxu0
    %v2537 = vadd.f32 0.0, %v2536
    %v2538 = vpop.f32.mrb[0].mxu0
    %2539 = vdwg.mxu0
    %2540 = vrot.lane.b32.xlu0 %v2256, 120
    %v2541 = vpop.permute.xlu0 %2540
    %2542 = vrot.lane.b32.xlu0 %v2261, 120
    %v2543 = vpop.permute.xlu0 %2542
    %2544 = vrot.lane.b32.xlu0 %v2266, 120
    %v2545 = vpop.permute.xlu0 %2544
    %2546 = vrot.lane.b32.xlu0 %v2271, 120
    %v2547 = vpop.permute.xlu0 %2546
    %2548 = vrot.lane.b32.xlu0 %v2256, 88
    %v2549 = vpop.permute.xlu0 %2548
    %2550 = vrot.lane.b32.xlu0 %v2261, 88
    %v2551 = vpop.permute.xlu0 %2550
    %2552 = vrot.lane.b32.xlu0 %v2266, 88
    %v2553 = vpop.permute.xlu0 %2552
    %2554 = vrot.lane.b32.xlu0 %v2271, 88
    %v2555 = vpop.permute.xlu0 %2554
    %v2556 = vsel %vm354, %v2541, 0
    %v2558 = vsel %vm354, %v2543, 0
    %v2560 = vsel %vm354, %v2545, 0
    %v2562 = vsel %vm354, %v2547, 0
    %v2564 = vsel %vm354, %v2549, 0
    %v2566 = vsel %vm354, %v2551, 0
    %v2568 = vsel %vm354, %v2553, 0
    %v2570 = vsel %vm354, %v2555, 0
    %2572 = vmatprep.subr.mxu0 0.0
    %2573 = vmatpush1.xpose.msra.mxu0 %v2564
    %2574 = vmatprep.subr.mxu0 0.0
    %2575 = vmatpush1.xpose.msra.mxu0 %v2566
    %2576 = vmatprep.subr.mxu0 0.0
    %2577 = vmatpush1.xpose.msra.mxu0 %v2568
    %2578 = vmatprep.subr.mxu0 0.0
    %2579 = vmatpush1.xpose.msra.mxu0 %v2570
    %2580 = vmatprep.subr.mxu0 0.0
    %2581 = vmatpush1.xpose.msra.mxu0 0.0
    %2582 = vmatprep.subr.mxu0 0.0
    %2583 = vmatpush1.xpose.msra.mxu0 0.0
    %2584 = vmatprep.subr.mxu0 0.0
    %2585 = vmatpush1.xpose.msra.mxu0 0.0
    %2586 = vmatprep.subr.mxu0 0.0
    %2587 = vmatpush1.xpose.msra.mxu0 0.0
    %2588 = vmatprep.subr.mxu0 0.0
    %2589 = vmatpush1.xpose.msra.mxu0 0.0
    %2590 = vmatprep.subr.mxu0 0.0
    %2591 = vmatpush1.xpose.msra.mxu0 0.0
    %2592 = vmatprep.subr.mxu0 0.0
    %2593 = vmatpush1.xpose.msra.mxu0 0.0
    %2594 = vmatprep.subr.mxu0 0.0
    %2595 = vmatpush1.xpose.msra.mxu0 0.0
    %2596 = vmatprep.subr.mxu0 0.0
    %2597 = vmatpush1.xpose.msra.mxu0 0.0
    %2598 = vmatprep.subr.mxu0 0.0
    %2599 = vmatpush1.xpose.msra.mxu0 0.0
    %2600 = vmatprep.subr.mxu0 0.0
    %2601 = vmatpush1.xpose.msra.mxu0 0.0
    %2602 = vmatprep.subr.mxu0 0.0
    %2603 = vmatpush1.xpose.msra.mxu0 0.0
    %2604 = vmatprep.subr.mxu0 0.0
    %2605 = vmatpush1.xpose.msra.mxu0 0.0
    %2606 = vmatprep.subr.mxu0 0.0
    %2607 = vmatpush1.xpose.msra.mxu0 0.0
    %2608 = vmatprep.subr.mxu0 0.0
    %2609 = vmatpush1.xpose.msra.mxu0 0.0
    %2610 = vmatprep.subr.mxu0 0.0
    %2611 = vmatpush1.xpose.msra.mxu0 0.0
    %2612 = vmatprep.subr.mxu0 0.0
    %2613 = vmatpush1.xpose.msra.mxu0 0.0
    %2614 = vmatprep.subr.mxu0 0.0
    %2615 = vmatpush1.xpose.msra.mxu0 0.0
    %2616 = vmatprep.subr.mxu0 0.0
    %2617 = vmatpush1.xpose.msra.mxu0 0.0
    %2618 = vmatprep.subr.mxu0 0.0
    %2619 = vmatpush1.xpose.msra.mxu0 0.0
    %2620 = vmatprep.subr.mxu0 0.0
    %2621 = vmatpush1.xpose.msra.mxu0 0.0
    %2622 = vmatprep.subr.mxu0 0.0
    %2623 = vmatpush1.xpose.msra.mxu0 0.0
    %2624 = vmatprep.subr.mxu0 0.0
    %2625 = vmatpush1.xpose.msra.mxu0 0.0
    %2626 = vmatprep.subr.mxu0 0.0
    %2627 = vmatpush1.xpose.msra.mxu0 0.0
    %2628 = vmatprep.subr.mxu0 0.0
    %2629 = vmatpush1.xpose.msra.mxu0 0.0
    %2630 = vmatprep.subr.mxu0 0.0
    %2631 = vmatpush1.xpose.msra.mxu0 0.0
    %2632 = vmatprep.subr.mxu0 0.0
    %2633 = vmatpush1.xpose.msra.mxu0 0.0
    %2634 = vmatprep.subr.mxu0 0.0
    %2635 = vmatpush1.xpose.msra.mxu0 0.0
    %2636 = vmatprep.mubr.f32.mxu0 0.0
    %2637 = vmatmul.mubr.f32.gmra.mrb[0].mxu0 %v2556
    %v2638 = vpop.f32.mrb[0].mxu0
    %v2639 = vadd.f32 %v165, %v2638
    %v2640 = vpop.f32.mrb[0].mxu0
    %2641 = vmatprep.mubr.f32.mxu0 0.0
    %2642 = vmatmul.mubr.f32.gmra.mrb[0].mxu0 %v2558
    %v2643 = vpop.f32.mrb[0].mxu0
    %v2644 = vadd.f32 %v166, %v2643
    %v2645 = vpop.f32.mrb[0].mxu0
    %2646 = vmatprep.mubr.f32.mxu0 0.0
    %2647 = vmatmul.mubr.f32.gmra.mrb[0].mxu0 %v2560
    %v2648 = vpop.f32.mrb[0].mxu0
    %v2649 = vadd.f32 %v167, %v2648
    %v2650 = vpop.f32.mrb[0].mxu0
    %2651 = vmatprep.mubr.f32.mxu0 0.0
    %2652 = vmatmul.mubr.f32.gmra.mrb[0].mxu0 %v2562
    %v2653 = vpop.f32.mrb[0].mxu0
    %v2654 = vadd.f32 %v168, %v2653
    %v2655 = vpop.f32.mrb[0].mxu0
    %2656 = vdwg.mxu0
    %v2657 = vsel %vm199, %v2639, -inf
    %2658 = vmax.xlane.f32.xlu0 %v2657
    %v2659 = vpop.xlane.xlu0 %2658
    %v2660 = vsel %vm199, %v2644, -inf
    %2661 = vmax.xlane.f32.xlu0 %v2660
    %v2662 = vpop.xlane.xlu0 %2661
    %v2663 = vsel %vm199, %v2649, -inf
    %2664 = vmax.xlane.f32.xlu0 %v2663
    %v2665 = vpop.xlane.xlu0 %2664
    %v2666 = vsel %vm199, %v2654, -inf
    %2667 = vmax.xlane.f32.xlu0 %v2666
    %v2668 = vpop.xlane.xlu0 %2667
    %v2669 = vsub.f32 %v2639, %v2659
    %v2670 = vsub.f32 %v2644, %v2662
    %v2671 = vsub.f32 %v2649, %v2665
    %v2672 = vsub.f32 %v2654, %v2668
    %v2673 = vmul.f32 %v2669, 1.442695
    %v2674 = vpow.pop %v2673
    %v2675 = vmul.f32 %v2670, 1.442695
    %v2676 = vpow.pop %v2675
    %v2677 = vmul.f32 %v2671, 1.442695
    %v2678 = vpow.pop %v2677
    %v2679 = vmul.f32 %v2672, 1.442695
    %v2680 = vpow.pop %v2679
    %v2681 = vsel %vm199, %v2674, 0.0
    %2682 = vadd.xlane.f32.xlu0 %v2681
    %v2683 = vpop.xlane.xlu0 %2682
    %v2684 = vsel %vm199, %v2676, 0.0
    %2685 = vadd.xlane.f32.xlu0 %v2684
    %v2686 = vpop.xlane.xlu0 %2685
    %v2687 = vsel %vm199, %v2678, 0.0
    %2688 = vadd.xlane.f32.xlu0 %v2687
    %v2689 = vpop.xlane.xlu0 %2688
    %v2690 = vsel %vm199, %v2680, 0.0
    %2691 = vadd.xlane.f32.xlu0 %v2690
    %v2692 = vpop.xlane.xlu0 %2691
    %v2693 = vrcp.pop %v2683
    %v2694 = vrcp.pop %v2686
    %v2695 = vrcp.pop %v2689
    %v2696 = vrcp.pop %v2692
    %v2697 = vmul.f32 %v2674, %v2693
    %v2698 = vmul.f32 %v2676, %v2694
    %v2699 = vmul.f32 %v2678, %v2695
    %v2700 = vmul.f32 %v2680, %v2696
    %2701 = vrot.lane.b32.xlu0 %v2256, 56
    %v2702 = vpop.permute.xlu0 %2701
    %2703 = vrot.lane.b32.xlu0 %v2261, 56
    %v2704 = vpop.permute.xlu0 %2703
    %2705 = vrot.lane.b32.xlu0 %v2266, 56
    %v2706 = vpop.permute.xlu0 %2705
    %2707 = vrot.lane.b32.xlu0 %v2271, 56
    %v2708 = vpop.permute.xlu0 %2707
    %v2714 = vsel %vm199, %v2697, 0
    %v2717 = vsel %vm199, %v2698, 0
    %v2720 = vsel %vm199, %v2699, 0
    %v2723 = vsel %vm199, %v2700, 0
    %2725 = vmatprep.subr.mxu0 0.0
    %2726 = vmatpush1.msra.mxu0 %v2702
    %2727 = vmatprep.subr.mxu0 0.0
    %2728 = vmatpush1.msra.mxu0 %v2704
    %2729 = vmatprep.subr.mxu0 0.0
    %2730 = vmatpush1.msra.mxu0 %v2706
    %2731 = vmatprep.subr.mxu0 0.0
    %2732 = vmatpush1.msra.mxu0 %v2708
    %2733 = vmatprep.subr.mxu0 0.0
    %2734 = vmatpush1.msra.mxu0 0.0
    %2735 = vmatprep.subr.mxu0 0.0
    %2736 = vmatpush1.msra.mxu0 0.0
    %2737 = vmatprep.subr.mxu0 0.0
    %2738 = vmatpush1.msra.mxu0 0.0
    %2739 = vmatprep.subr.mxu0 0.0
    %2740 = vmatpush1.msra.mxu0 0.0
    %2741 = vmatprep.subr.mxu0 0.0
    %2742 = vmatpush1.msra.mxu0 0.0
    %2743 = vmatprep.subr.mxu0 0.0
    %2744 = vmatpush1.msra.mxu0 0.0
    %2745 = vmatprep.subr.mxu0 0.0
    %2746 = vmatpush1.msra.mxu0 0.0
    %2747 = vmatprep.subr.mxu0 0.0
    %2748 = vmatpush1.msra.mxu0 0.0
    %2749 = vmatprep.subr.mxu0 0.0
    %2750 = vmatpush1.msra.mxu0 0.0
    %2751 = vmatprep.subr.mxu0 0.0
    %2752 = vmatpush1.msra.mxu0 0.0
    %2753 = vmatprep.subr.mxu0 0.0
    %2754 = vmatpush1.msra.mxu0 0.0
    %2755 = vmatprep.subr.mxu0 0.0
    %2756 = vmatpush1.msra.mxu0 0.0
    %2757 = vmatprep.subr.mxu0 0.0
    %2758 = vmatpush1.msra.mxu0 0.0
    %2759 = vmatprep.subr.mxu0 0.0
    %2760 = vmatpush1.msra.mxu0 0.0
    %2761 = vmatprep.subr.mxu0 0.0
    %2762 = vmatpush1.msra.mxu0 0.0
    %2763 = vmatprep.subr.mxu0 0.0
    %2764 = vmatpush1.msra.mxu0 0.0
    %2765 = vmatprep.subr.mxu0 0.0
    %2766 = vmatpush1.msra.mxu0 0.0
    %2767 = vmatprep.subr.mxu0 0.0
    %2768 = vmatpush1.msra.mxu0 0.0
    %2769 = vmatprep.subr.mxu0 0.0
    %2770 = vmatpush1.msra.mxu0 0.0
    %2771 = vmatprep.subr.mxu0 0.0
    %2772 = vmatpush1.msra.mxu0 0.0
    %2773 = vmatprep.subr.mxu0 0.0
    %2774 = vmatpush1.msra.mxu0 0.0
    %2775 = vmatprep.subr.mxu0 0.0
    %2776 = vmatpush1.msra.mxu0 0.0
    %2777 = vmatprep.subr.mxu0 0.0
    %2778 = vmatpush1.msra.mxu0 0.0
    %2779 = vmatprep.subr.mxu0 0.0
    %2780 = vmatpush1.msra.mxu0 0.0
    %2781 = vmatprep.subr.mxu0 0.0
    %2782 = vmatpush1.msra.mxu0 0.0
    %2783 = vmatprep.subr.mxu0 0.0
    %2784 = vmatpush1.msra.mxu0 0.0
    %2785 = vmatprep.subr.mxu0 0.0
    %2786 = vmatpush1.msra.mxu0 0.0
    %2787 = vmatprep.subr.mxu0 0.0
    %2788 = vmatpush1.msra.mxu0 0.0
    %2789 = vmatprep.mubr.f32.mxu0 0.0
    %2790 = vmatmul.mubr.f32.gmra.mrb[0].mxu0 %v2714
    %v2791 = vpop.f32.mrb[0].mxu0
    %v2792 = vadd.f32 0.0, %v2791
    %v2793 = vpop.f32.mrb[0].mxu0
    %2794 = vmatprep.mubr.f32.mxu0 0.0
    %2795 = vmatmul.mubr.f32.gmra.mrb[0].mxu0 %v2717
    %v2796 = vpop.f32.mrb[0].mxu0
    %v2797 = vadd.f32 0.0, %v2796
    %v2798 = vpop.f32.mrb[0].mxu0
    %2799 = vmatprep.mubr.f32.mxu0 0.0
    %2800 = vmatmul.mubr.f32.gmra.mrb[0].mxu0 %v2720
    %v2801 = vpop.f32.mrb[0].mxu0
    %v2802 = vadd.f32 0.0, %v2801
    %v2803 = vpop.f32.mrb[0].mxu0
    %2804 = vmatprep.mubr.f32.mxu0 0.0
    %2805 = vmatmul.mubr.f32.gmra.mrb[0].mxu0 %v2723
    %v2806 = vpop.f32.mrb[0].mxu0
    %v2807 = vadd.f32 0.0, %v2806
    %v2808 = vpop.f32.mrb[0].mxu0
    %2809 = vdwg.mxu0
    %v2811 = vsel %vm354, %v2792, 0
    %v2814 = vsel %vm354, %v2797, 0
    %v2817 = vsel %vm354, %v2802, 0
    %v2820 = vsel %vm354, %v2807, 0
    %2822 = vmatprep.subr.mxu0 0.0
    %2823 = vmatpush1.msra.mxu0 %v2106
    %2824 = vmatprep.subr.mxu0 0.0
    %2825 = vmatpush1.msra.mxu0 0.0
    %2826 = vmatprep.subr.mxu0 0.0
    %2827 = vmatpush1.msra.mxu0 0.0
    %2828 = vmatprep.subr.mxu0 0.0
    %2829 = vmatpush1.msra.mxu0 0.0
    %2830 = vmatprep.subr.mxu0 0.0
    %2831 = vmatpush1.msra.mxu0 0.0
    %2832 = vmatprep.subr.mxu0 0.0
    %2833 = vmatpush1.msra.mxu0 0.0
    %2834 = vmatprep.subr.mxu0 0.0
    %2835 = vmatpush1.msra.mxu0 0.0
    %2836 = vmatprep.subr.mxu0 0.0
    %2837 = vmatpush1.msra.mxu0 0.0
    %2838 = vmatprep.subr.mxu0 0.0
    %2839 = vmatpush1.msra.mxu0 0.0
    %2840 = vmatprep.subr.mxu0 0.0
    %2841 = vmatpush1.msra.mxu0 0.0
    %2842 = vmatprep.subr.mxu0 0.0
    %2843 = vmatpush1.msra.mxu0 0.0
    %2844 = vmatprep.subr.mxu0 0.0
    %2845 = vmatpush1.msra.mxu0 0.0
    %2846 = vmatprep.subr.mxu0 0.0
    %2847 = vmatpush1.msra.mxu0 0.0
    %2848 = vmatprep.subr.mxu0 0.0
    %2849 = vmatpush1.msra.mxu0 0.0
    %2850 = vmatprep.subr.mxu0 0.0
    %2851 = vmatpush1.msra.mxu0 0.0
    %2852 = vmatprep.subr.mxu0 0.0
    %2853 = vmatpush1.msra.mxu0 0.0
    %2854 = vmatprep.subr.mxu0 0.0
    %2855 = vmatpush1.msra.mxu0 0.0
    %2856 = vmatprep.subr.mxu0 0.0
    %2857 = vmatpush1.msra.mxu0 0.0
    %2858 = vmatprep.subr.mxu0 0.0
    %2859 = vmatpush1.msra.mxu0 0.0
    %2860 = vmatprep.subr.mxu0 0.0
    %2861 = vmatpush1.msra.mxu0 0.0
    %2862 = vmatprep.subr.mxu0 0.0
    %2863 = vmatpush1.msra.mxu0 0.0
    %2864 = vmatprep.subr.mxu0 0.0
    %2865 = vmatpush1.msra.mxu0 0.0
    %2866 = vmatprep.subr.mxu0 0.0
    %2867 = vmatpush1.msra.mxu0 0.0
    %2868 = vmatprep.subr.mxu0 0.0
    %2869 = vmatpush1.msra.mxu0 0.0
    %2870 = vmatprep.subr.mxu0 0.0
    %2871 = vmatpush1.msra.mxu0 0.0
    %2872 = vmatprep.subr.mxu0 0.0
    %2873 = vmatpush1.msra.mxu0 0.0
    %2874 = vmatprep.subr.mxu0 0.0
    %2875 = vmatpush1.msra.mxu0 0.0
    %2876 = vmatprep.subr.mxu0 0.0
    %2877 = vmatpush1.msra.mxu0 0.0
    %2878 = vmatprep.subr.mxu0 0.0
    %2879 = vmatpush1.msra.mxu0 0.0
    %2880 = vmatprep.subr.mxu0 0.0
    %2881 = vmatpush1.msra.mxu0 0.0
    %2882 = vmatprep.subr.mxu0 0.0
    %2883 = vmatpush1.msra.mxu0 0.0
    %2884 = vmatprep.subr.mxu0 0.0
    %2885 = vmatpush1.msra.mxu0 0.0
    %2886 = vmatprep.mubr.f32.mxu0 0.0
    %2887 = vmatmul.mubr.f32.gmra.mrb[0].mxu0 %v2811
    %v2888 = vpop.f32.mrb[0].mxu0
    %v2889 = vadd.f32 0.0, %v2888
    %v2890 = vpop.f32.mrb[0].mxu0
    %2891 = vmatprep.mubr.f32.mxu0 0.0
    %2892 = vmatmul.mubr.f32.gmra.mrb[0].mxu0 %v2814
    %v2893 = vpop.f32.mrb[0].mxu0
    %v2894 = vadd.f32 0.0, %v2893
    %v2895 = vpop.f32.mrb[0].mxu0
    %2896 = vmatprep.mubr.f32.mxu0 0.0
    %2897 = vmatmul.mubr.f32.gmra.mrb[0].mxu0 %v2817
    %v2898 = vpop.f32.mrb[0].mxu0
    %v2899 = vadd.f32 0.0, %v2898
    %v2900 = vpop.f32.mrb[0].mxu0
    %2901 = vmatprep.mubr.f32.mxu0 0.0
    %2902 = vmatmul.mubr.f32.gmra.mrb[0].mxu0 %v2820
    %v2903 = vpop.f32.mrb[0].mxu0
    %v2904 = vadd.f32 0.0, %v2903
    %v2905 = vpop.f32.mrb[0].mxu0
    %2906 = vdwg.mxu0
    %v2908 = vsel %vm354, %v2522, 0
    %v2911 = vsel %vm354, %v2527, 0
    %v2914 = vsel %vm354, %v2532, 0
    %v2917 = vsel %vm354, %v2537, 0
    %2919 = vmatprep.subr.mxu0 0.0
    %2920 = vmatpush1.msra.mxu0 %v2105
    %2921 = vmatprep.subr.mxu0 0.0
    %2922 = vmatpush1.msra.mxu0 0.0
    %2923 = vmatprep.subr.mxu0 0.0
    %2924 = vmatpush1.msra.mxu0 0.0
    %2925 = vmatprep.subr.mxu0 0.0
    %2926 = vmatpush1.msra.mxu0 0.0
    %2927 = vmatprep.subr.mxu0 0.0
    %2928 = vmatpush1.msra.mxu0 0.0
    %2929 = vmatprep.subr.mxu0 0.0
    %2930 = vmatpush1.msra.mxu0 0.0
    %2931 = vmatprep.subr.mxu0 0.0
    %2932 = vmatpush1.msra.mxu0 0.0
    %2933 = vmatprep.subr.mxu0 0.0
    %2934 = vmatpush1.msra.mxu0 0.0
    %2935 = vmatprep.subr.mxu0 0.0
    %2936 = vmatpush1.msra.mxu0 0.0
    %2937 = vmatprep.subr.mxu0 0.0
    %2938 = vmatpush1.msra.mxu0 0.0
    %2939 = vmatprep.subr.mxu0 0.0
    %2940 = vmatpush1.msra.mxu0 0.0
    %2941 = vmatprep.subr.mxu0 0.0
    %2942 = vmatpush1.msra.mxu0 0.0
    %2943 = vmatprep.subr.mxu0 0.0
    %2944 = vmatpush1.msra.mxu0 0.0
    %2945 = vmatprep.subr.mxu0 0.0
    %2946 = vmatpush1.msra.mxu0 0.0
    %2947 = vmatprep.subr.mxu0 0.0
    %2948 = vmatpush1.msra.mxu0 0.0
    %2949 = vmatprep.subr.mxu0 0.0
    %2950 = vmatpush1.msra.mxu0 0.0
    %2951 = vmatprep.subr.mxu0 0.0
    %2952 = vmatpush1.msra.mxu0 0.0
    %2953 = vmatprep.subr.mxu0 0.0
    %2954 = vmatpush1.msra.mxu0 0.0
    %2955 = vmatprep.subr.mxu0 0.0
    %2956 = vmatpush1.msra.mxu0 0.0
    %2957 = vmatprep.subr.mxu0 0.0
    %2958 = vmatpush1.msra.mxu0 0.0
    %2959 = vmatprep.subr.mxu0 0.0
    %2960 = vmatpush1.msra.mxu0 0.0
    %2961 = vmatprep.subr.mxu0 0.0
    %2962 = vmatpush1.msra.mxu0 0.0
    %2963 = vmatprep.subr.mxu0 0.0
    %2964 = vmatpush1.msra.mxu0 0.0
    %2965 = vmatprep.subr.mxu0 0.0
    %2966 = vmatpush1.msra.mxu0 0.0
    %2967 = vmatprep.subr.mxu0 0.0
    %2968 = vmatpush1.msra.mxu0 0.0
    %2969 = vmatprep.subr.mxu0 0.0
    %2970 = vmatpush1.msra.mxu0 0.0
    %2971 = vmatprep.subr.mxu0 0.0
    %2972 = vmatpush1.msra.mxu0 0.0
    %2973 = vmatprep.subr.mxu0 0.0
    %2974 = vmatpush1.msra.mxu0 0.0
    %2975 = vmatprep.subr.mxu0 0.0
    %2976 = vmatpush1.msra.mxu0 0.0
    %2977 = vmatprep.subr.mxu0 0.0
    %2978 = vmatpush1.msra.mxu0 0.0
    %2979 = vmatprep.subr.mxu0 0.0
    %2980 = vmatpush1.msra.mxu0 0.0
    %2981 = vmatprep.subr.mxu0 0.0
    %2982 = vmatpush1.msra.mxu0 0.0
    %2983 = vmatprep.mubr.f32.mxu0 0.0
    %2984 = vmatmul.mubr.f32.gmra.mrb[0].mxu0 %v2908
    %v2985 = vpop.f32.mrb[0].mxu0
    %v2986 = vadd.f32 %v2889, %v2985
    %v2987 = vpop.f32.mrb[0].mxu0
    %2988 = vmatprep.mubr.f32.mxu0 0.0
    %2989 = vmatmul.mubr.f32.gmra.mrb[0].mxu0 %v2911
    %v2990 = vpop.f32.mrb[0].mxu0
    %v2991 = vadd.f32 %v2894, %v2990
    %v2992 = vpop.f32.mrb[0].mxu0
    %2993 = vmatprep.mubr.f32.mxu0 0.0
    %2994 = vmatmul.mubr.f32.gmra.mrb[0].mxu0 %v2914
    %v2995 = vpop.f32.mrb[0].mxu0
    %v2996 = vadd.f32 %v2899, %v2995
    %v2997 = vpop.f32.mrb[0].mxu0
    %2998 = vmatprep.mubr.f32.mxu0 0.0
    %2999 = vmatmul.mubr.f32.gmra.mrb[0].mxu0 %v2917
    %v3000 = vpop.f32.mrb[0].mxu0
    %v3001 = vadd.f32 %v2904, %v3000
    %v3002 = vpop.f32.mrb[0].mxu0
    %3003 = vdwg.mxu0
    %3004 = vrot.lane.b32.xlu0 %v2256, 112
    %v3005 = vpop.permute.xlu0 %3004
    %3006 = vrot.lane.b32.xlu0 %v2261, 112
    %v3007 = vpop.permute.xlu0 %3006
    %3008 = vrot.lane.b32.xlu0 %v2266, 112
    %v3009 = vpop.permute.xlu0 %3008
    %3010 = vrot.lane.b32.xlu0 %v2271, 112
    %v3011 = vpop.permute.xlu0 %3010
    %3012 = vrot.lane.b32.xlu0 %v2256, 80
    %v3013 = vpop.permute.xlu0 %3012
    %3014 = vrot.lane.b32.xlu0 %v2261, 80
    %v3015 = vpop.permute.xlu0 %3014
    %3016 = vrot.lane.b32.xlu0 %v2266, 80
    %v3017 = vpop.permute.xlu0 %3016
    %3018 = vrot.lane.b32.xlu0 %v2271, 80
    %v3019 = vpop.permute.xlu0 %3018
    %v3020 = vsel %vm354, %v3005, 0
    %v3022 = vsel %vm354, %v3007, 0
    %v3024 = vsel %vm354, %v3009, 0
    %v3026 = vsel %vm354, %v3011, 0
    %v3028 = vsel %vm354, %v3013, 0
    %v3030 = vsel %vm354, %v3015, 0
    %v3032 = vsel %vm354, %v3017, 0
    %v3034 = vsel %vm354, %v3019, 0
    %3036 = vmatprep.subr.mxu0 0.0
    %3037 = vmatpush1.xpose.msra.mxu0 %v3028
    %3038 = vmatprep.subr.mxu0 0.0
    %3039 = vmatpush1.xpose.msra.mxu0 %v3030
    %3040 = vmatprep.subr.mxu0 0.0
    %3041 = vmatpush1.xpose.msra.mxu0 %v3032
    %3042 = vmatprep.subr.mxu0 0.0
    %3043 = vmatpush1.xpose.msra.mxu0 %v3034
    %3044 = vmatprep.subr.mxu0 0.0
    %3045 = vmatpush1.xpose.msra.mxu0 0.0
    %3046 = vmatprep.subr.mxu0 0.0
    %3047 = vmatpush1.xpose.msra.mxu0 0.0
    %3048 = vmatprep.subr.mxu0 0.0
    %3049 = vmatpush1.xpose.msra.mxu0 0.0
    %3050 = vmatprep.subr.mxu0 0.0
    %3051 = vmatpush1.xpose.msra.mxu0 0.0
    %3052 = vmatprep.subr.mxu0 0.0
    %3053 = vmatpush1.xpose.msra.mxu0 0.0
    %3054 = vmatprep.subr.mxu0 0.0
    %3055 = vmatpush1.xpose.msra.mxu0 0.0
    %3056 = vmatprep.subr.mxu0 0.0
    %3057 = vmatpush1.xpose.msra.mxu0 0.0
    %3058 = vmatprep.subr.mxu0 0.0
    %3059 = vmatpush1.xpose.msra.mxu0 0.0
    %3060 = vmatprep.subr.mxu0 0.0
    %3061 = vmatpush1.xpose.msra.mxu0 0.0
    %3062 = vmatprep.subr.mxu0 0.0
    %3063 = vmatpush1.xpose.msra.mxu0 0.0
    %3064 = vmatprep.subr.mxu0 0.0
    %3065 = vmatpush1.xpose.msra.mxu0 0.0
    %3066 = vmatprep.subr.mxu0 0.0
    %3067 = vmatpush1.xpose.msra.mxu0 0.0
    %3068 = vmatprep.subr.mxu0 0.0
    %3069 = vmatpush1.xpose.msra.mxu0 0.0
    %3070 = vmatprep.subr.mxu0 0.0
    %3071 = vmatpush1.xpose.msra.mxu0 0.0
    %3072 = vmatprep.subr.mxu0 0.0
    %3073 = vmatpush1.xpose.msra.mxu0 0.0
    %3074 = vmatprep.subr.mxu0 0.0
    %3075 = vmatpush1.xpose.msra.mxu0 0.0
    %3076 = vmatprep.subr.mxu0 0.0
    %3077 = vmatpush1.xpose.msra.mxu0 0.0
    %3078 = vmatprep.subr.mxu0 0.0
    %3079 = vmatpush1.xpose.msra.mxu0 0.0
    %3080 = vmatprep.subr.mxu0 0.0
    %3081 = vmatpush1.xpose.msra.mxu0 0.0
    %3082 = vmatprep.subr.mxu0 0.0
    %3083 = vmatpush1.xpose.msra.mxu0 0.0
    %3084 = vmatprep.subr.mxu0 0.0
    %3085 = vmatpush1.xpose.msra.mxu0 0.0
    %3086 = vmatprep.subr.mxu0 0.0
    %3087 = vmatpush1.xpose.msra.mxu0 0.0
    %3088 = vmatprep.subr.mxu0 0.0
    %3089 = vmatpush1.xpose.msra.mxu0 0.0
    %3090 = vmatprep.subr.mxu0 0.0
    %3091 = vmatpush1.xpose.msra.mxu0 0.0
    %3092 = vmatprep.subr.mxu0 0.0
    %3093 = vmatpush1.xpose.msra.mxu0 0.0
    %3094 = vmatprep.subr.mxu0 0.0
    %3095 = vmatpush1.xpose.msra.mxu0 0.0
    %3096 = vmatprep.subr.mxu0 0.0
    %3097 = vmatpush1.xpose.msra.mxu0 0.0
    %3098 = vmatprep.subr.mxu0 0.0
    %3099 = vmatpush1.xpose.msra.mxu0 0.0
    %3100 = vmatprep.mubr.f32.mxu0 0.0
    %3101 = vmatmul.mubr.f32.gmra.mrb[0].mxu0 %v3020
    %v3102 = vpop.f32.mrb[0].mxu0
    %v3103 = vadd.f32 %v165, %v3102
    %v3104 = vpop.f32.mrb[0].mxu0
    %3105 = vmatprep.mubr.f32.mxu0 0.0
    %3106 = vmatmul.mubr.f32.gmra.mrb[0].mxu0 %v3022
    %v3107 = vpop.f32.mrb[0].mxu0
    %v3108 = vadd.f32 %v166, %v3107
    %v3109 = vpop.f32.mrb[0].mxu0
    %3110 = vmatprep.mubr.f32.mxu0 0.0
    %3111 = vmatmul.mubr.f32.gmra.mrb[0].mxu0 %v3024
    %v3112 = vpop.f32.mrb[0].mxu0
    %v3113 = vadd.f32 %v167, %v3112
    %v3114 = vpop.f32.mrb[0].mxu0
    %3115 = vmatprep.mubr.f32.mxu0 0.0
    %3116 = vmatmul.mubr.f32.gmra.mrb[0].mxu0 %v3026
    %v3117 = vpop.f32.mrb[0].mxu0
    %v3118 = vadd.f32 %v168, %v3117
    %v3119 = vpop.f32.mrb[0].mxu0
    %3120 = vdwg.mxu0
    %v3121 = vsel %vm199, %v3103, -inf
    %3122 = vmax.xlane.f32.xlu0 %v3121
    %v3123 = vpop.xlane.xlu0 %3122
    %v3124 = vsel %vm199, %v3108, -inf
    %3125 = vmax.xlane.f32.xlu0 %v3124
    %v3126 = vpop.xlane.xlu0 %3125
    %v3127 = vsel %vm199, %v3113, -inf
    %3128 = vmax.xlane.f32.xlu0 %v3127
    %v3129 = vpop.xlane.xlu0 %3128
    %v3130 = vsel %vm199, %v3118, -inf
    %3131 = vmax.xlane.f32.xlu0 %v3130
    %v3132 = vpop.xlane.xlu0 %3131
    %v3133 = vsub.f32 %v3103, %v3123
    %v3134 = vsub.f32 %v3108, %v3126
    %v3135 = vsub.f32 %v3113, %v3129
    %v3136 = vsub.f32 %v3118, %v3132
    %v3137 = vmul.f32 %v3133, 1.442695
    %v3138 = vpow.pop %v3137
    %v3139 = vmul.f32 %v3134, 1.442695
    %v3140 = vpow.pop %v3139
    %v3141 = vmul.f32 %v3135, 1.442695
    %v3142 = vpow.pop %v3141
    %v3143 = vmul.f32 %v3136, 1.442695
    %v3144 = vpow.pop %v3143
    %v3145 = vsel %vm199, %v3138, 0.0
    %3146 = vadd.xlane.f32.xlu0 %v3145
    %v3147 = vpop.xlane.xlu0 %3146
    %v3148 = vsel %vm199, %v3140, 0.0
    %3149 = vadd.xlane.f32.xlu0 %v3148
    %v3150 = vpop.xlane.xlu0 %3149
    %v3151 = vsel %vm199, %v3142, 0.0
    %3152 = vadd.xlane.f32.xlu0 %v3151
    %v3153 = vpop.xlane.xlu0 %3152
    %v3154 = vsel %vm199, %v3144, 0.0
    %3155 = vadd.xlane.f32.xlu0 %v3154
    %v3156 = vpop.xlane.xlu0 %3155
    %v3157 = vrcp.pop %v3147
    %v3158 = vrcp.pop %v3150
    %v3159 = vrcp.pop %v3153
    %v3160 = vrcp.pop %v3156
    %v3161 = vmul.f32 %v3138, %v3157
    %v3162 = vmul.f32 %v3140, %v3158
    %v3163 = vmul.f32 %v3142, %v3159
    %v3164 = vmul.f32 %v3144, %v3160
    %3165 = vrot.lane.b32.xlu0 %v2256, 48
    %v3166 = vpop.permute.xlu0 %3165
    %3167 = vrot.lane.b32.xlu0 %v2261, 48
    %v3168 = vpop.permute.xlu0 %3167
    %3169 = vrot.lane.b32.xlu0 %v2266, 48
    %v3170 = vpop.permute.xlu0 %3169
    %3171 = vrot.lane.b32.xlu0 %v2271, 48
    %v3172 = vpop.permute.xlu0 %3171
    %v3178 = vsel %vm199, %v3161, 0
    %v3181 = vsel %vm199, %v3162, 0
    %v3184 = vsel %vm199, %v3163, 0
    %v3187 = vsel %vm199, %v3164, 0
    %3189 = vmatprep.subr.mxu0 0.0
    %3190 = vmatpush1.msra.mxu0 %v3166
    %3191 = vmatprep.subr.mxu0 0.0
    %3192 = vmatpush1.msra.mxu0 %v3168
    %3193 = vmatprep.subr.mxu0 0.0
    %3194 = vmatpush1.msra.mxu0 %v3170
    %3195 = vmatprep.subr.mxu0 0.0
    %3196 = vmatpush1.msra.mxu0 %v3172
    %3197 = vmatprep.subr.mxu0 0.0
    %3198 = vmatpush1.msra.mxu0 0.0
    %3199 = vmatprep.subr.mxu0 0.0
    %3200 = vmatpush1.msra.mxu0 0.0
    %3201 = vmatprep.subr.mxu0 0.0
    %3202 = vmatpush1.msra.mxu0 0.0
    %3203 = vmatprep.subr.mxu0 0.0
    %3204 = vmatpush1.msra.mxu0 0.0
    %3205 = vmatprep.subr.mxu0 0.0
    %3206 = vmatpush1.msra.mxu0 0.0
    %3207 = vmatprep.subr.mxu0 0.0
    %3208 = vmatpush1.msra.mxu0 0.0
    %3209 = vmatprep.subr.mxu0 0.0
    %3210 = vmatpush1.msra.mxu0 0.0
    %3211 = vmatprep.subr.mxu0 0.0
    %3212 = vmatpush1.msra.mxu0 0.0
    %3213 = vmatprep.subr.mxu0 0.0
    %3214 = vmatpush1.msra.mxu0 0.0
    %3215 = vmatprep.subr.mxu0 0.0
    %3216 = vmatpush1.msra.mxu0 0.0
    %3217 = vmatprep.subr.mxu0 0.0
    %3218 = vmatpush1.msra.mxu0 0.0
    %3219 = vmatprep.subr.mxu0 0.0
    %3220 = vmatpush1.msra.mxu0 0.0
    %3221 = vmatprep.subr.mxu0 0.0
    %3222 = vmatpush1.msra.mxu0 0.0
    %3223 = vmatprep.subr.mxu0 0.0
    %3224 = vmatpush1.msra.mxu0 0.0
    %3225 = vmatprep.subr.mxu0 0.0
    %3226 = vmatpush1.msra.mxu0 0.0
    %3227 = vmatprep.subr.mxu0 0.0
    %3228 = vmatpush1.msra.mxu0 0.0
    %3229 = vmatprep.subr.mxu0 0.0
    %3230 = vmatpush1.msra.mxu0 0.0
    %3231 = vmatprep.subr.mxu0 0.0
    %3232 = vmatpush1.msra.mxu0 0.0
    %3233 = vmatprep.subr.mxu0 0.0
    %3234 = vmatpush1.msra.mxu0 0.0
    %3235 = vmatprep.subr.mxu0 0.0
    %3236 = vmatpush1.msra.mxu0 0.0
    %3237 = vmatprep.subr.mxu0 0.0
    %3238 = vmatpush1.msra.mxu0 0.0
    %3239 = vmatprep.subr.mxu0 0.0
    %3240 = vmatpush1.msra.mxu0 0.0
    %3241 = vmatprep.subr.mxu0 0.0
    %3242 = vmatpush1.msra.mxu0 0.0
    %3243 = vmatprep.subr.mxu0 0.0
    %3244 = vmatpush1.msra.mxu0 0.0
    %3245 = vmatprep.subr.mxu0 0.0
    %3246 = vmatpush1.msra.mxu0 0.0
    %3247 = vmatprep.subr.mxu0 0.0
    %3248 = vmatpush1.msra.mxu0 0.0
    %3249 = vmatprep.subr.mxu0 0.0
    %3250 = vmatpush1.msra.mxu0 0.0
    %3251 = vmatprep.subr.mxu0 0.0
    %3252 = vmatpush1.msra.mxu0 0.0
    %3253 = vmatprep.mubr.f32.mxu0 0.0
    %3254 = vmatmul.mubr.f32.gmra.mrb[0].mxu0 %v3178
    %v3255 = vpop.f32.mrb[0].mxu0
    %v3256 = vadd.f32 0.0, %v3255
    %v3257 = vpop.f32.mrb[0].mxu0
    %3258 = vmatprep.mubr.f32.mxu0 0.0
    %3259 = vmatmul.mubr.f32.gmra.mrb[0].mxu0 %v3181
    %v3260 = vpop.f32.mrb[0].mxu0
    %v3261 = vadd.f32 0.0, %v3260
    %v3262 = vpop.f32.mrb[0].mxu0
    %3263 = vmatprep.mubr.f32.mxu0 0.0
    %3264 = vmatmul.mubr.f32.gmra.mrb[0].mxu0 %v3184
    %v3265 = vpop.f32.mrb[0].mxu0
    %v3266 = vadd.f32 0.0, %v3265
    %v3267 = vpop.f32.mrb[0].mxu0
    %3268 = vmatprep.mubr.f32.mxu0 0.0
    %3269 = vmatmul.mubr.f32.gmra.mrb[0].mxu0 %v3187
    %v3270 = vpop.f32.mrb[0].mxu0
    %v3271 = vadd.f32 0.0, %v3270
    %v3272 = vpop.f32.mrb[0].mxu0
    %3273 = vdwg.mxu0
    %v3275 = vsel %vm354, %v3256, 0
    %v3278 = vsel %vm354, %v3261, 0
    %v3281 = vsel %vm354, %v3266, 0
    %v3284 = vsel %vm354, %v3271, 0
    %3286 = vmatprep.subr.mxu0 0.0
    %3287 = vmatpush1.msra.mxu0 %v2107
    %3288 = vmatprep.subr.mxu0 0.0
    %3289 = vmatpush1.msra.mxu0 0.0
    %3290 = vmatprep.subr.mxu0 0.0
    %3291 = vmatpush1.msra.mxu0 0.0
    %3292 = vmatprep.subr.mxu0 0.0
    %3293 = vmatpush1.msra.mxu0 0.0
    %3294 = vmatprep.subr.mxu0 0.0
    %3295 = vmatpush1.msra.mxu0 0.0
    %3296 = vmatprep.subr.mxu0 0.0
    %3297 = vmatpush1.msra.mxu0 0.0
    %3298 = vmatprep.subr.mxu0 0.0
    %3299 = vmatpush1.msra.mxu0 0.0
    %3300 = vmatprep.subr.mxu0 0.0
    %3301 = vmatpush1.msra.mxu0 0.0
    %3302 = vmatprep.subr.mxu0 0.0
    %3303 = vmatpush1.msra.mxu0 0.0
    %3304 = vmatprep.subr.mxu0 0.0
    %3305 = vmatpush1.msra.mxu0 0.0
    %3306 = vmatprep.subr.mxu0 0.0
    %3307 = vmatpush1.msra.mxu0 0.0
    %3308 = vmatprep.subr.mxu0 0.0
    %3309 = vmatpush1.msra.mxu0 0.0
    %3310 = vmatprep.subr.mxu0 0.0
    %3311 = vmatpush1.msra.mxu0 0.0
    %3312 = vmatprep.subr.mxu0 0.0
    %3313 = vmatpush1.msra.mxu0 0.0
    %3314 = vmatprep.subr.mxu0 0.0
    %3315 = vmatpush1.msra.mxu0 0.0
    %3316 = vmatprep.subr.mxu0 0.0
    %3317 = vmatpush1.msra.mxu0 0.0
    %3318 = vmatprep.subr.mxu0 0.0
    %3319 = vmatpush1.msra.mxu0 0.0
    %3320 = vmatprep.subr.mxu0 0.0
    %3321 = vmatpush1.msra.mxu0 0.0
    %3322 = vmatprep.subr.mxu0 0.0
    %3323 = vmatpush1.msra.mxu0 0.0
    %3324 = vmatprep.subr.mxu0 0.0
    %3325 = vmatpush1.msra.mxu0 0.0
    %3326 = vmatprep.subr.mxu0 0.0
    %3327 = vmatpush1.msra.mxu0 0.0
    %3328 = vmatprep.subr.mxu0 0.0
    %3329 = vmatpush1.msra.mxu0 0.0
    %3330 = vmatprep.subr.mxu0 0.0
    %3331 = vmatpush1.msra.mxu0 0.0
    %3332 = vmatprep.subr.mxu0 0.0
    %3333 = vmatpush1.msra.mxu0 0.0
    %3334 = vmatprep.subr.mxu0 0.0
    %3335 = vmatpush1.msra.mxu0 0.0
    %3336 = vmatprep.subr.mxu0 0.0
    %3337 = vmatpush1.msra.mxu0 0.0
    %3338 = vmatprep.subr.mxu0 0.0
    %3339 = vmatpush1.msra.mxu0 0.0
    %3340 = vmatprep.subr.mxu0 0.0
    %3341 = vmatpush1.msra.mxu0 0.0
    %3342 = vmatprep.subr.mxu0 0.0
    %3343 = vmatpush1.msra.mxu0 0.0
    %3344 = vmatprep.subr.mxu0 0.0
    %3345 = vmatpush1.msra.mxu0 0.0
    %3346 = vmatprep.subr.mxu0 0.0
    %3347 = vmatpush1.msra.mxu0 0.0
    %3348 = vmatprep.subr.mxu0 0.0
    %3349 = vmatpush1.msra.mxu0 0.0
    %3350 = vmatprep.mubr.f32.mxu0 0.0
    %3351 = vmatmul.mubr.f32.gmra.mrb[0].mxu0 %v3275
    %v3352 = vpop.f32.mrb[0].mxu0
    %v3353 = vadd.f32 0.0, %v3352
    %v3354 = vpop.f32.mrb[0].mxu0
    %3355 = vmatprep.mubr.f32.mxu0 0.0
    %3356 = vmatmul.mubr.f32.gmra.mrb[0].mxu0 %v3278
    %v3357 = vpop.f32.mrb[0].mxu0
    %v3358 = vadd.f32 0.0, %v3357
    %v3359 = vpop.f32.mrb[0].mxu0
    %3360 = vmatprep.mubr.f32.mxu0 0.0
    %3361 = vmatmul.mubr.f32.gmra.mrb[0].mxu0 %v3281
    %v3362 = vpop.f32.mrb[0].mxu0
    %v3363 = vadd.f32 0.0, %v3362
    %v3364 = vpop.f32.mrb[0].mxu0
    %3365 = vmatprep.mubr.f32.mxu0 0.0
    %3366 = vmatmul.mubr.f32.gmra.mrb[0].mxu0 %v3284
    %v3367 = vpop.f32.mrb[0].mxu0
    %v3368 = vadd.f32 0.0, %v3367
    %v3369 = vpop.f32.mrb[0].mxu0
    %3370 = vdwg.mxu0
    %v3371 = vadd.f32 %v2986, %v3353
    %v3372 = vadd.f32 %v2991, %v3358
    %v3373 = vadd.f32 %v2996, %v3363
    %v3374 = vadd.f32 %v3001, %v3368
    %3375 = vrot.lane.b32.xlu0 %v2256, 104
    %v3376 = vpop.permute.xlu0 %3375
    %3377 = vrot.lane.b32.xlu0 %v2261, 104
    %v3378 = vpop.permute.xlu0 %3377
    %3379 = vrot.lane.b32.xlu0 %v2266, 104
    %v3380 = vpop.permute.xlu0 %3379
    %3381 = vrot.lane.b32.xlu0 %v2271, 104
    %v3382 = vpop.permute.xlu0 %3381
    %3383 = vrot.lane.b32.xlu0 %v2256, 72
    %v3384 = vpop.permute.xlu0 %3383
    %3385 = vrot.lane.b32.xlu0 %v2261, 72
    %v3386 = vpop.permute.xlu0 %3385
    %3387 = vrot.lane.b32.xlu0 %v2266, 72
    %v3388 = vpop.permute.xlu0 %3387
    %3389 = vrot.lane.b32.xlu0 %v2271, 72
    %v3390 = vpop.permute.xlu0 %3389
    %v3391 = vsel %vm354, %v3376, 0
    %v3393 = vsel %vm354, %v3378, 0
    %v3395 = vsel %vm354, %v3380, 0
    %v3397 = vsel %vm354, %v3382, 0
    %v3399 = vsel %vm354, %v3384, 0
    %v3401 = vsel %vm354, %v3386, 0
    %v3403 = vsel %vm354, %v3388, 0
    %v3405 = vsel %vm354, %v3390, 0
    %3407 = vmatprep.subr.mxu0 0.0
    %3408 = vmatpush1.xpose.msra.mxu0 %v3399
    %3409 = vmatprep.subr.mxu0 0.0
    %3410 = vmatpush1.xpose.msra.mxu0 %v3401
    %3411 = vmatprep.subr.mxu0 0.0
    %3412 = vmatpush1.xpose.msra.mxu0 %v3403
    %3413 = vmatprep.subr.mxu0 0.0
    %3414 = vmatpush1.xpose.msra.mxu0 %v3405
    %3415 = vmatprep.subr.mxu0 0.0
    %3416 = vmatpush1.xpose.msra.mxu0 0.0
    %3417 = vmatprep.subr.mxu0 0.0
    %3418 = vmatpush1.xpose.msra.mxu0 0.0
    %3419 = vmatprep.subr.mxu0 0.0
    %3420 = vmatpush1.xpose.msra.mxu0 0.0
    %3421 = vmatprep.subr.mxu0 0.0
    %3422 = vmatpush1.xpose.msra.mxu0 0.0
    %3423 = vmatprep.subr.mxu0 0.0
    %3424 = vmatpush1.xpose.msra.mxu0 0.0
    %3425 = vmatprep.subr.mxu0 0.0
    %3426 = vmatpush1.xpose.msra.mxu0 0.0
    %3427 = vmatprep.subr.mxu0 0.0
    %3428 = vmatpush1.xpose.msra.mxu0 0.0
    %3429 = vmatprep.subr.mxu0 0.0
    %3430 = vmatpush1.xpose.msra.mxu0 0.0
    %3431 = vmatprep.subr.mxu0 0.0
    %3432 = vmatpush1.xpose.msra.mxu0 0.0
    %3433 = vmatprep.subr.mxu0 0.0
    %3434 = vmatpush1.xpose.msra.mxu0 0.0
    %3435 = vmatprep.subr.mxu0 0.0
    %3436 = vmatpush1.xpose.msra.mxu0 0.0
    %3437 = vmatprep.subr.mxu0 0.0
    %3438 = vmatpush1.xpose.msra.mxu0 0.0
    %3439 = vmatprep.subr.mxu0 0.0
    %3440 = vmatpush1.xpose.msra.mxu0 0.0
    %3441 = vmatprep.subr.mxu0 0.0
    %3442 = vmatpush1.xpose.msra.mxu0 0.0
    %3443 = vmatprep.subr.mxu0 0.0
    %3444 = vmatpush1.xpose.msra.mxu0 0.0
    %3445 = vmatprep.subr.mxu0 0.0
    %3446 = vmatpush1.xpose.msra.mxu0 0.0
    %3447 = vmatprep.subr.mxu0 0.0
    %3448 = vmatpush1.xpose.msra.mxu0 0.0
    %3449 = vmatprep.subr.mxu0 0.0
    %3450 = vmatpush1.xpose.msra.mxu0 0.0
    %3451 = vmatprep.subr.mxu0 0.0
    %3452 = vmatpush1.xpose.msra.mxu0 0.0
    %3453 = vmatprep.subr.mxu0 0.0
    %3454 = vmatpush1.xpose.msra.mxu0 0.0
    %3455 = vmatprep.subr.mxu0 0.0
    %3456 = vmatpush1.xpose.msra.mxu0 0.0
    %3457 = vmatprep.subr.mxu0 0.0
    %3458 = vmatpush1.xpose.msra.mxu0 0.0
    %3459 = vmatprep.subr.mxu0 0.0
    %3460 = vmatpush1.xpose.msra.mxu0 0.0
    %3461 = vmatprep.subr.mxu0 0.0
    %3462 = vmatpush1.xpose.msra.mxu0 0.0
    %3463 = vmatprep.subr.mxu0 0.0
    %3464 = vmatpush1.xpose.msra.mxu0 0.0
    %3465 = vmatprep.subr.mxu0 0.0
    %3466 = vmatpush1.xpose.msra.mxu0 0.0
    %3467 = vmatprep.subr.mxu0 0.0
    %3468 = vmatpush1.xpose.msra.mxu0 0.0
    %3469 = vmatprep.subr.mxu0 0.0
    %3470 = vmatpush1.xpose.msra.mxu0 0.0
    %3471 = vmatprep.mubr.f32.mxu0 0.0
    %3472 = vmatmul.mubr.f32.gmra.mrb[0].mxu0 %v3391
    %v3473 = vpop.f32.mrb[0].mxu0
    %v3474 = vadd.f32 %v165, %v3473
    %v3475 = vpop.f32.mrb[0].mxu0
    %3476 = vmatprep.mubr.f32.mxu0 0.0
    %3477 = vmatmul.mubr.f32.gmra.mrb[0].mxu0 %v3393
    %v3478 = vpop.f32.mrb[0].mxu0
    %v3479 = vadd.f32 %v166, %v3478
    %v3480 = vpop.f32.mrb[0].mxu0
    %3481 = vmatprep.mubr.f32.mxu0 0.0
    %3482 = vmatmul.mubr.f32.gmra.mrb[0].mxu0 %v3395
    %v3483 = vpop.f32.mrb[0].mxu0
    %v3484 = vadd.f32 %v167, %v3483
    %v3485 = vpop.f32.mrb[0].mxu0
    %3486 = vmatprep.mubr.f32.mxu0 0.0
    %3487 = vmatmul.mubr.f32.gmra.mrb[0].mxu0 %v3397
    %v3488 = vpop.f32.mrb[0].mxu0
    %v3489 = vadd.f32 %v168, %v3488
    %v3490 = vpop.f32.mrb[0].mxu0
    %3491 = vdwg.mxu0
    %v3492 = vsel %vm199, %v3474, -inf
    %3493 = vmax.xlane.f32.xlu0 %v3492
    %v3494 = vpop.xlane.xlu0 %3493
    %v3495 = vsel %vm199, %v3479, -inf
    %3496 = vmax.xlane.f32.xlu0 %v3495
    %v3497 = vpop.xlane.xlu0 %3496
    %v3498 = vsel %vm199, %v3484, -inf
    %3499 = vmax.xlane.f32.xlu0 %v3498
    %v3500 = vpop.xlane.xlu0 %3499
    %v3501 = vsel %vm199, %v3489, -inf
    %3502 = vmax.xlane.f32.xlu0 %v3501
    %v3503 = vpop.xlane.xlu0 %3502
    %v3504 = vsub.f32 %v3474, %v3494
    %v3505 = vsub.f32 %v3479, %v3497
    %v3506 = vsub.f32 %v3484, %v3500
    %v3507 = vsub.f32 %v3489, %v3503
    %v3508 = vmul.f32 %v3504, 1.442695
    %v3509 = vpow.pop %v3508
    %v3510 = vmul.f32 %v3505, 1.442695
    %v3511 = vpow.pop %v3510
    %v3512 = vmul.f32 %v3506, 1.442695
    %v3513 = vpow.pop %v3512
    %v3514 = vmul.f32 %v3507, 1.442695
    %v3515 = vpow.pop %v3514
    %v3516 = vsel %vm199, %v3509, 0.0
    %3517 = vadd.xlane.f32.xlu0 %v3516
    %v3518 = vpop.xlane.xlu0 %3517
    %v3519 = vsel %vm199, %v3511, 0.0
    %3520 = vadd.xlane.f32.xlu0 %v3519
    %v3521 = vpop.xlane.xlu0 %3520
    %v3522 = vsel %vm199, %v3513, 0.0
    %3523 = vadd.xlane.f32.xlu0 %v3522
    %v3524 = vpop.xlane.xlu0 %3523
    %v3525 = vsel %vm199, %v3515, 0.0
    %3526 = vadd.xlane.f32.xlu0 %v3525
    %v3527 = vpop.xlane.xlu0 %3526
    %v3528 = vrcp.pop %v3518
    %v3529 = vrcp.pop %v3521
    %v3530 = vrcp.pop %v3524
    %v3531 = vrcp.pop %v3527
    %v3532 = vmul.f32 %v3509, %v3528
    %v3533 = vmul.f32 %v3511, %v3529
    %v3534 = vmul.f32 %v3513, %v3530
    %v3535 = vmul.f32 %v3515, %v3531
    %3536 = vrot.lane.b32.xlu0 %v2256, 40
    %v3537 = vpop.permute.xlu0 %3536
    %3538 = vrot.lane.b32.xlu0 %v2261, 40
    %v3539 = vpop.permute.xlu0 %3538
    %3540 = vrot.lane.b32.xlu0 %v2266, 40
    %v3541 = vpop.permute.xlu0 %3540
    %3542 = vrot.lane.b32.xlu0 %v2271, 40
    %v3543 = vpop.permute.xlu0 %3542
    %v3549 = vsel %vm199, %v3532, 0
    %v3552 = vsel %vm199, %v3533, 0
    %v3555 = vsel %vm199, %v3534, 0
    %v3558 = vsel %vm199, %v3535, 0
    %3560 = vmatprep.subr.mxu0 0.0
    %3561 = vmatpush1.msra.mxu0 %v3537
    %3562 = vmatprep.subr.mxu0 0.0
    %3563 = vmatpush1.msra.mxu0 %v3539
    %3564 = vmatprep.subr.mxu0 0.0
    %3565 = vmatpush1.msra.mxu0 %v3541
    %3566 = vmatprep.subr.mxu0 0.0
    %3567 = vmatpush1.msra.mxu0 %v3543
    %3568 = vmatprep.subr.mxu0 0.0
    %3569 = vmatpush1.msra.mxu0 0.0
    %3570 = vmatprep.subr.mxu0 0.0
    %3571 = vmatpush1.msra.mxu0 0.0
    %3572 = vmatprep.subr.mxu0 0.0
    %3573 = vmatpush1.msra.mxu0 0.0
    %3574 = vmatprep.subr.mxu0 0.0
    %3575 = vmatpush1.msra.mxu0 0.0
    %3576 = vmatprep.subr.mxu0 0.0
    %3577 = vmatpush1.msra.mxu0 0.0
    %3578 = vmatprep.subr.mxu0 0.0
    %3579 = vmatpush1.msra.mxu0 0.0
    %3580 = vmatprep.subr.mxu0 0.0
    %3581 = vmatpush1.msra.mxu0 0.0
    %3582 = vmatprep.subr.mxu0 0.0
    %3583 = vmatpush1.msra.mxu0 0.0
    %3584 = vmatprep.subr.mxu0 0.0
    %3585 = vmatpush1.msra.mxu0 0.0
    %3586 = vmatprep.subr.mxu0 0.0
    %3587 = vmatpush1.msra.mxu0 0.0
    %3588 = vmatprep.subr.mxu0 0.0
    %3589 = vmatpush1.msra.mxu0 0.0
    %3590 = vmatprep.subr.mxu0 0.0
    %3591 = vmatpush1.msra.mxu0 0.0
    %3592 = vmatprep.subr.mxu0 0.0
    %3593 = vmatpush1.msra.mxu0 0.0
    %3594 = vmatprep.subr.mxu0 0.0
    %3595 = vmatpush1.msra.mxu0 0.0
    %3596 = vmatprep.subr.mxu0 0.0
    %3597 = vmatpush1.msra.mxu0 0.0
    %3598 = vmatprep.subr.mxu0 0.0
    %3599 = vmatpush1.msra.mxu0 0.0
    %3600 = vmatprep.subr.mxu0 0.0
    %3601 = vmatpush1.msra.mxu0 0.0
    %3602 = vmatprep.subr.mxu0 0.0
    %3603 = vmatpush1.msra.mxu0 0.0
    %3604 = vmatprep.subr.mxu0 0.0
    %3605 = vmatpush1.msra.mxu0 0.0
    %3606 = vmatprep.subr.mxu0 0.0
    %3607 = vmatpush1.msra.mxu0 0.0
    %3608 = vmatprep.subr.mxu0 0.0
    %3609 = vmatpush1.msra.mxu0 0.0
    %3610 = vmatprep.subr.mxu0 0.0
    %3611 = vmatpush1.msra.mxu0 0.0
    %3612 = vmatprep.subr.mxu0 0.0
    %3613 = vmatpush1.msra.mxu0 0.0
    %3614 = vmatprep.subr.mxu0 0.0
    %3615 = vmatpush1.msra.mxu0 0.0
    %3616 = vmatprep.subr.mxu0 0.0
    %3617 = vmatpush1.msra.mxu0 0.0
    %3618 = vmatprep.subr.mxu0 0.0
    %3619 = vmatpush1.msra.mxu0 0.0
    %3620 = vmatprep.subr.mxu0 0.0
    %3621 = vmatpush1.msra.mxu0 0.0
    %3622 = vmatprep.subr.mxu0 0.0
    %3623 = vmatpush1.msra.mxu0 0.0
    %3624 = vmatprep.mubr.f32.mxu0 0.0
    %3625 = vmatmul.mubr.f32.gmra.mrb[0].mxu0 %v3549
    %v3626 = vpop.f32.mrb[0].mxu0
    %v3627 = vadd.f32 0.0, %v3626
    %v3628 = vpop.f32.mrb[0].mxu0
    %3629 = vmatprep.mubr.f32.mxu0 0.0
    %3630 = vmatmul.mubr.f32.gmra.mrb[0].mxu0 %v3552
    %v3631 = vpop.f32.mrb[0].mxu0
    %v3632 = vadd.f32 0.0, %v3631
    %v3633 = vpop.f32.mrb[0].mxu0
    %3634 = vmatprep.mubr.f32.mxu0 0.0
    %3635 = vmatmul.mubr.f32.gmra.mrb[0].mxu0 %v3555
    %v3636 = vpop.f32.mrb[0].mxu0
    %v3637 = vadd.f32 0.0, %v3636
    %v3638 = vpop.f32.mrb[0].mxu0
    %3639 = vmatprep.mubr.f32.mxu0 0.0
    %3640 = vmatmul.mubr.f32.gmra.mrb[0].mxu0 %v3558
    %v3641 = vpop.f32.mrb[0].mxu0
    %v3642 = vadd.f32 0.0, %v3641
    %v3643 = vpop.f32.mrb[0].mxu0
    %3644 = vdwg.mxu0
    %v3646 = vsel %vm354, %v3627, 0
    %v3649 = vsel %vm354, %v3632, 0
    %v3652 = vsel %vm354, %v3637, 0
    %v3655 = vsel %vm354, %v3642, 0
    %3657 = vmatprep.subr.mxu0 0.0
    %3658 = vmatpush1.msra.mxu0 %v2108
    %3659 = vmatprep.subr.mxu0 0.0
    %3660 = vmatpush1.msra.mxu0 0.0
    %3661 = vmatprep.subr.mxu0 0.0
    %3662 = vmatpush1.msra.mxu0 0.0
    %3663 = vmatprep.subr.mxu0 0.0
    %3664 = vmatpush1.msra.mxu0 0.0
    %3665 = vmatprep.subr.mxu0 0.0
    %3666 = vmatpush1.msra.mxu0 0.0
    %3667 = vmatprep.subr.mxu0 0.0
    %3668 = vmatpush1.msra.mxu0 0.0
    %3669 = vmatprep.subr.mxu0 0.0
    %3670 = vmatpush1.msra.mxu0 0.0
    %3671 = vmatprep.subr.mxu0 0.0
    %3672 = vmatpush1.msra.mxu0 0.0
    %3673 = vmatprep.subr.mxu0 0.0
    %3674 = vmatpush1.msra.mxu0 0.0
    %3675 = vmatprep.subr.mxu0 0.0
    %3676 = vmatpush1.msra.mxu0 0.0
    %3677 = vmatprep.subr.mxu0 0.0
    %3678 = vmatpush1.msra.mxu0 0.0
    %3679 = vmatprep.subr.mxu0 0.0
    %3680 = vmatpush1.msra.mxu0 0.0
    %3681 = vmatprep.subr.mxu0 0.0
    %3682 = vmatpush1.msra.mxu0 0.0
    %3683 = vmatprep.subr.mxu0 0.0
    %3684 = vmatpush1.msra.mxu0 0.0
    %3685 = vmatprep.subr.mxu0 0.0
    %3686 = vmatpush1.msra.mxu0 0.0
    %3687 = vmatprep.subr.mxu0 0.0
    %3688 = vmatpush1.msra.mxu0 0.0
    %3689 = vmatprep.subr.mxu0 0.0
    %3690 = vmatpush1.msra.mxu0 0.0
    %3691 = vmatprep.subr.mxu0 0.0
    %3692 = vmatpush1.msra.mxu0 0.0
    %3693 = vmatprep.subr.mxu0 0.0
    %3694 = vmatpush1.msra.mxu0 0.0
    %3695 = vmatprep.subr.mxu0 0.0
    %3696 = vmatpush1.msra.mxu0 0.0
    %3697 = vmatprep.subr.mxu0 0.0
    %3698 = vmatpush1.msra.mxu0 0.0
    %3699 = vmatprep.subr.mxu0 0.0
    %3700 = vmatpush1.msra.mxu0 0.0
    %3701 = vmatprep.subr.mxu0 0.0
    %3702 = vmatpush1.msra.mxu0 0.0
    %3703 = vmatprep.subr.mxu0 0.0
    %3704 = vmatpush1.msra.mxu0 0.0
    %3705 = vmatprep.subr.mxu0 0.0
    %3706 = vmatpush1.msra.mxu0 0.0
    %3707 = vmatprep.subr.mxu0 0.0
    %3708 = vmatpush1.msra.mxu0 0.0
    %3709 = vmatprep.subr.mxu0 0.0
    %3710 = vmatpush1.msra.mxu0 0.0
    %3711 = vmatprep.subr.mxu0 0.0
    %3712 = vmatpush1.msra.mxu0 0.0
    %3713 = vmatprep.subr.mxu0 0.0
    %3714 = vmatpush1.msra.mxu0 0.0
    %3715 = vmatprep.subr.mxu0 0.0
    %3716 = vmatpush1.msra.mxu0 0.0
    %3717 = vmatprep.subr.mxu0 0.0
    %3718 = vmatpush1.msra.mxu0 0.0
    %3719 = vmatprep.subr.mxu0 0.0
    %3720 = vmatpush1.msra.mxu0 0.0
    %3721 = vmatprep.mubr.f32.mxu0 0.0
    %3722 = vmatmul.mubr.f32.gmra.mrb[0].mxu0 %v3646
    %v3723 = vpop.f32.mrb[0].mxu0
    %v3724 = vadd.f32 0.0, %v3723
    %v3725 = vpop.f32.mrb[0].mxu0
    %3726 = vmatprep.mubr.f32.mxu0 0.0
    %3727 = vmatmul.mubr.f32.gmra.mrb[0].mxu0 %v3649
    %v3728 = vpop.f32.mrb[0].mxu0
    %v3729 = vadd.f32 0.0, %v3728
    %v3730 = vpop.f32.mrb[0].mxu0
    %3731 = vmatprep.mubr.f32.mxu0 0.0
    %3732 = vmatmul.mubr.f32.gmra.mrb[0].mxu0 %v3652
    %v3733 = vpop.f32.mrb[0].mxu0
    %v3734 = vadd.f32 0.0, %v3733
    %v3735 = vpop.f32.mrb[0].mxu0
    %3736 = vmatprep.mubr.f32.mxu0 0.0
    %3737 = vmatmul.mubr.f32.gmra.mrb[0].mxu0 %v3655
    %v3738 = vpop.f32.mrb[0].mxu0
    %v3739 = vadd.f32 0.0, %v3738
    %v3740 = vpop.f32.mrb[0].mxu0
    %3741 = vdwg.mxu0
    %v3742 = vadd.f32 %v3371, %v3724
    %v3743 = vadd.f32 %v3372, %v3729
    %v3744 = vadd.f32 %v3373, %v3734
    %v3745 = vadd.f32 %v3374, %v3739
    %v3746 = vadd.f32 %v2089, %v3742
    %v3747 = vadd.f32 %v2090, %v3743
    %v3748 = vadd.f32 %v2091, %v3744
    %v3749 = vadd.f32 %v2092, %v3745
    %v3751 = vlaneseq
    %v3752 = vshrl.u32 %v3751, 7
    %v3753 = vsub.s32 0, %v3752
    %v3754 = vrot.slane %v2110, %v3753
    %v3756 = vadd.f32 %v3746, %v3754
    %v3757 = vadd.f32 %v3747, %v3754
    %v3758 = vadd.f32 %v3748, %v3754
    %v3759 = vadd.f32 %v3749, %v3754
    %v3760 = vmul.f32 %v3756, %v3756
    %v3761 = vmul.f32 %v3757, %v3757
    %v3762 = vmul.f32 %v3758, %v3758
    %v3763 = vmul.f32 %v3759, %v3759
    %v3764 = vsel %vm199, %v3760, 0.0
    %3765 = vadd.xlane.f32.xlu0 %v3764
    %v3766 = vpop.xlane.xlu0 %3765
    %v3767 = vsel %vm199, %v3761, 0.0
    %3768 = vadd.xlane.f32.xlu0 %v3767
    %v3769 = vpop.xlane.xlu0 %3768
    %v3770 = vsel %vm199, %v3762, 0.0
    %3771 = vadd.xlane.f32.xlu0 %v3770
    %v3772 = vpop.xlane.xlu0 %3771
    %v3773 = vsel %vm199, %v3763, 0.0
    %3774 = vadd.xlane.f32.xlu0 %v3773
    %v3775 = vpop.xlane.xlu0 %3774
    %v3776 = vmul.f32 %v3766, %v212
    %v3777 = vmul.f32 %v3769, %v212
    %v3778 = vmul.f32 %v3772, %v212
    %v3779 = vmul.f32 %v3775, %v212
    %v3780 = vadd.f32 %v3776, 1.1920929e-07
    %v3781 = vadd.f32 %v3777, 1.1920929e-07
    %v3782 = vadd.f32 %v3778, 1.1920929e-07
    %v3783 = vadd.f32 %v3779, 1.1920929e-07
    %v3784 = vrsqrt.pop %v3780
    %v3785 = vrsqrt.pop %v3781
    %v3786 = vrsqrt.pop %v3782
    %v3787 = vrsqrt.pop %v3783
    %v3788 = vmul.f32 %v3756, %v3784
    %v3789 = vmul.f32 %v3757, %v3785
    %v3790 = vmul.f32 %v3758, %v3786
    %v3791 = vmul.f32 %v3759, %v3787
    %v3793 = vlaneseq
    %v3794 = vshrl.u32 %v3793, 7
    %v3795 = vsub.s32 0, %v3794
    %v3796 = vrot.slane %v2096, %v3795
    %v3798 = vmul.f32 %v3788, %v3796
    %v3799 = vmul.f32 %v3789, %v3796
    %v3800 = vmul.f32 %v3790, %v3796
    %v3801 = vmul.f32 %v3791, %v3796
    %v3803 = vlaneseq
    %v3804 = vshrl.u32 %v3803, 7
    %v3805 = vsub.s32 0, %v3804
    %v3806 = vrot.slane %v2117, %v3805
    %v3809 = vsel %vm199, %v3798, 0
    %v3812 = vsel %vm199, %v3799, 0
    %v3815 = vsel %vm199, %v3800, 0
    %v3818 = vsel %vm199, %v3801, 0
    %3820 = vmatprep.subr.mxu0 0.0
    %3821 = vmatpush1.msra.mxu0 %v2112
    %3822 = vmatprep.subr.mxu0 0.0
    %3823 = vmatpush1.msra.mxu0 %v2113
    %3824 = vmatprep.subr.mxu0 0.0
    %3825 = vmatpush1.msra.mxu0 %v2114
    %3826 = vmatprep.subr.mxu0 0.0
    %3827 = vmatpush1.msra.mxu0 %v2115
    %3828 = vmatprep.subr.mxu0 0.0
    %3829 = vmatpush1.msra.mxu0 0.0
    %3830 = vmatprep.subr.mxu0 0.0
    %3831 = vmatpush1.msra.mxu0 0.0
    %3832 = vmatprep.subr.mxu0 0.0
    %3833 = vmatpush1.msra.mxu0 0.0
    %3834 = vmatprep.subr.mxu0 0.0
    %3835 = vmatpush1.msra.mxu0 0.0
    %3836 = vmatprep.subr.mxu0 0.0
    %3837 = vmatpush1.msra.mxu0 0.0
    %3838 = vmatprep.subr.mxu0 0.0
    %3839 = vmatpush1.msra.mxu0 0.0
    %3840 = vmatprep.subr.mxu0 0.0
    %3841 = vmatpush1.msra.mxu0 0.0
    %3842 = vmatprep.subr.mxu0 0.0
    %3843 = vmatpush1.msra.mxu0 0.0
    %3844 = vmatprep.subr.mxu0 0.0
    %3845 = vmatpush1.msra.mxu0 0.0
    %3846 = vmatprep.subr.mxu0 0.0
    %3847 = vmatpush1.msra.mxu0 0.0
    %3848 = vmatprep.subr.mxu0 0.0
    %3849 = vmatpush1.msra.mxu0 0.0
    %3850 = vmatprep.subr.mxu0 0.0
    %3851 = vmatpush1.msra.mxu0 0.0
    %3852 = vmatprep.subr.mxu0 0.0
    %3853 = vmatpush1.msra.mxu0 0.0
    %3854 = vmatprep.subr.mxu0 0.0
    %3855 = vmatpush1.msra.mxu0 0.0
    %3856 = vmatprep.subr.mxu0 0.0
    %3857 = vmatpush1.msra.mxu0 0.0
    %3858 = vmatprep.subr.mxu0 0.0
    %3859 = vmatpush1.msra.mxu0 0.0
    %3860 = vmatprep.subr.mxu0 0.0
    %3861 = vmatpush1.msra.mxu0 0.0
    %3862 = vmatprep.subr.mxu0 0.0
    %3863 = vmatpush1.msra.mxu0 0.0
    %3864 = vmatprep.subr.mxu0 0.0
    %3865 = vmatpush1.msra.mxu0 0.0
    %3866 = vmatprep.subr.mxu0 0.0
    %3867 = vmatpush1.msra.mxu0 0.0
    %3868 = vmatprep.subr.mxu0 0.0
    %3869 = vmatpush1.msra.mxu0 0.0
    %3870 = vmatprep.subr.mxu0 0.0
    %3871 = vmatpush1.msra.mxu0 0.0
    %3872 = vmatprep.subr.mxu0 0.0
    %3873 = vmatpush1.msra.mxu0 0.0
    %3874 = vmatprep.subr.mxu0 0.0
    %3875 = vmatpush1.msra.mxu0 0.0
    %3876 = vmatprep.subr.mxu0 0.0
    %3877 = vmatpush1.msra.mxu0 0.0
    %3878 = vmatprep.subr.mxu0 0.0
    %3879 = vmatpush1.msra.mxu0 0.0
    %3880 = vmatprep.subr.mxu0 0.0
    %3881 = vmatpush1.msra.mxu0 0.0
    %3882 = vmatprep.subr.mxu0 0.0
    %3883 = vmatpush1.msra.mxu0 0.0
    %3884 = vmatprep.mubr.f32.mxu0 0.0
    %3885 = vmatmul.mubr.f32.gmra.mrb[0].mxu0 %v3809
    %v3886 = vpop.f32.mrb[0].mxu0
    %v3887 = vadd.f32 %v3806, %v3886
    %v3888 = vpop.f32.mrb[0].mxu0
    %3889 = vmatprep.mubr.f32.mxu0 0.0
    %3890 = vmatmul.mubr.f32.gmra.mrb[0].mxu0 %v3812
    %v3891 = vpop.f32.mrb[0].mxu0
    %v3892 = vadd.f32 %v3806, %v3891
    %v3893 = vpop.f32.mrb[0].mxu0
    %3894 = vmatprep.mubr.f32.mxu0 0.0
    %3895 = vmatmul.mubr.f32.gmra.mrb[0].mxu0 %v3815
    %v3896 = vpop.f32.mrb[0].mxu0
    %v3897 = vadd.f32 %v3806, %v3896
    %v3898 = vpop.f32.mrb[0].mxu0
    %3899 = vmatprep.mubr.f32.mxu0 0.0
    %3900 = vmatmul.mubr.f32.gmra.mrb[0].mxu0 %v3818
    %v3901 = vpop.f32.mrb[0].mxu0
    %v3902 = vadd.f32 %v3806, %v3901
    %v3903 = vpop.f32.mrb[0].mxu0
    %3904 = vdwg.mxu0
    %v3905 = vmax.f32 %v3887, 0.0
    %v3906 = vmax.f32 %v3892, 0.0
    %v3907 = vmax.f32 %v3897, 0.0
    %v3908 = vmax.f32 %v3902, 0.0
    %v3909 = vmul.f32 %v3905, %v3905
    %v3910 = vmul.f32 %v3906, %v3906
    %v3911 = vmul.f32 %v3907, %v3907
    %v3912 = vmul.f32 %v3908, %v3908
    %v3914 = vsel %vm67, %v3909, 0
    %v3917 = vsel %vm67, %v3910, 0
    %v3920 = vsel %vm67, %v3911, 0
    %v3923 = vsel %vm67, %v3912, 0
    %3925 = vmatprep.subr.mxu0 0.0
    %3926 = vmatpush1.msra.mxu0 %v2119
    %3927 = vmatprep.subr.mxu0 0.0
    %3928 = vmatpush1.msra.mxu0 %v2120
    %3929 = vmatprep.subr.mxu0 0.0
    %3930 = vmatpush1.msra.mxu0 %v2121
    %3931 = vmatprep.subr.mxu0 0.0
    %3932 = vmatpush1.msra.mxu0 %v2122
    %3933 = vmatprep.subr.mxu0 0.0
    %3934 = vmatpush1.msra.mxu0 %v2123
    %3935 = vmatprep.subr.mxu0 0.0
    %3936 = vmatpush1.msra.mxu0 %v2124
    %3937 = vmatprep.subr.mxu0 0.0
    %3938 = vmatpush1.msra.mxu0 %v2125
    %3939 = vmatprep.subr.mxu0 0.0
    %3940 = vmatpush1.msra.mxu0 %v2126
    %3941 = vmatprep.subr.mxu0 0.0
    %3942 = vmatpush1.msra.mxu0 0.0
    %3943 = vmatprep.subr.mxu0 0.0
    %3944 = vmatpush1.msra.mxu0 0.0
    %3945 = vmatprep.subr.mxu0 0.0
    %3946 = vmatpush1.msra.mxu0 0.0
    %3947 = vmatprep.subr.mxu0 0.0
    %3948 = vmatpush1.msra.mxu0 0.0
    %3949 = vmatprep.subr.mxu0 0.0
    %3950 = vmatpush1.msra.mxu0 0.0
    %3951 = vmatprep.subr.mxu0 0.0
    %3952 = vmatpush1.msra.mxu0 0.0
    %3953 = vmatprep.subr.mxu0 0.0
    %3954 = vmatpush1.msra.mxu0 0.0
    %3955 = vmatprep.subr.mxu0 0.0
    %3956 = vmatpush1.msra.mxu0 0.0
    %3957 = vmatprep.subr.mxu0 0.0
    %3958 = vmatpush1.msra.mxu0 0.0
    %3959 = vmatprep.subr.mxu0 0.0
    %3960 = vmatpush1.msra.mxu0 0.0
    %3961 = vmatprep.subr.mxu0 0.0
    %3962 = vmatpush1.msra.mxu0 0.0
    %3963 = vmatprep.subr.mxu0 0.0
    %3964 = vmatpush1.msra.mxu0 0.0
    %3965 = vmatprep.subr.mxu0 0.0
    %3966 = vmatpush1.msra.mxu0 0.0
    %3967 = vmatprep.subr.mxu0 0.0
    %3968 = vmatpush1.msra.mxu0 0.0
    %3969 = vmatprep.subr.mxu0 0.0
    %3970 = vmatpush1.msra.mxu0 0.0
    %3971 = vmatprep.subr.mxu0 0.0
    %3972 = vmatpush1.msra.mxu0 0.0
    %3973 = vmatprep.subr.mxu0 0.0
    %3974 = vmatpush1.msra.mxu0 0.0
    %3975 = vmatprep.subr.mxu0 0.0
    %3976 = vmatpush1.msra.mxu0 0.0
    %3977 = vmatprep.subr.mxu0 0.0
    %3978 = vmatpush1.msra.mxu0 0.0
    %3979 = vmatprep.subr.mxu0 0.0
    %3980 = vmatpush1.msra.mxu0 0.0
    %3981 = vmatprep.subr.mxu0 0.0
    %3982 = vmatpush1.msra.mxu0 0.0
    %3983 = vmatprep.subr.mxu0 0.0
    %3984 = vmatpush1.msra.mxu0 0.0
    %3985 = vmatprep.subr.mxu0 0.0
    %3986 = vmatpush1.msra.mxu0 0.0
    %3987 = vmatprep.subr.mxu0 0.0
    %3988 = vmatpush1.msra.mxu0 0.0
    %3989 = vmatprep.mubr.f32.mxu0 0.0
    %3990 = vmatmul.mubr.f32.gmra.mrb[0].mxu0 %v3914
    %v3991 = vpop.f32.mrb[0].mxu0
    %v3992 = vadd.f32 0.0, %v3991
    %v3993 = vpop.f32.mrb[0].mxu0
    %3994 = vmatprep.mubr.f32.mxu0 0.0
    %3995 = vmatmul.mubr.f32.gmra.mrb[0].mxu0 %v3917
    %v3996 = vpop.f32.mrb[0].mxu0
    %v3997 = vadd.f32 0.0, %v3996
    %v3998 = vpop.f32.mrb[0].mxu0
    %3999 = vmatprep.mubr.f32.mxu0 0.0
    %4000 = vmatmul.mubr.f32.gmra.mrb[0].mxu0 %v3920
    %v4001 = vpop.f32.mrb[0].mxu0
    %v4002 = vadd.f32 0.0, %v4001
    %v4003 = vpop.f32.mrb[0].mxu0
    %4004 = vmatprep.mubr.f32.mxu0 0.0
    %4005 = vmatmul.mubr.f32.gmra.mrb[0].mxu0 %v3923
    %v4006 = vpop.f32.mrb[0].mxu0
    %v4007 = vadd.f32 0.0, %v4006
    %v4008 = vpop.f32.mrb[0].mxu0
    %4009 = vdwg.mxu0
    %v4010 = vadd.f32 %v3756, %v3992
    %v4011 = vadd.f32 %v3757, %v3997
    %v4012 = vadd.f32 %v3758, %v4002
    %v4013 = vadd.f32 %v3759, %v4007
    %v4015 = vlaneseq
    %v4016 = vshrl.u32 %v4015, 7
    %v4017 = vsub.s32 0, %v4016
    %v4018 = vrot.slane %v2128, %v4017
    %v4020 = vadd.f32 %v4010, %v4018
    %v4021 = vadd.f32 %v4011, %v4018
    %v4022 = vadd.f32 %v4012, %v4018
    %v4023 = vadd.f32 %v4013, %v4018
    %v4024 = vld [vmem:[%s14] sm:$0x1]
    %v4025 = vmul.f32 %v4020, %v4020
    %v4026 = vmul.f32 %v4021, %v4021
    %v4027 = vmul.f32 %v4022, %v4022
    %v4028 = vmul.f32 %v4023, %v4023
    %v4029 = vsel %vm199, %v4025, 0.0
    %4030 = vadd.xlane.f32.xlu0 %v4029
    %v4031 = vpop.xlane.xlu0 %4030
    %v4032 = vsel %vm199, %v4026, 0.0
    %4033 = vadd.xlane.f32.xlu0 %v4032
    %v4034 = vpop.xlane.xlu0 %4033
    %v4035 = vsel %vm199, %v4027, 0.0
    %4036 = vadd.xlane.f32.xlu0 %v4035
    %v4037 = vpop.xlane.xlu0 %4036
    %v4038 = vsel %vm199, %v4028, 0.0
    %4039 = vadd.xlane.f32.xlu0 %v4038
    %v4040 = vpop.xlane.xlu0 %4039
    %v4041 = vmul.f32 %v4031, %v212
    %v4042 = vmul.f32 %v4034, %v212
    %v4043 = vmul.f32 %v4037, %v212
    %v4044 = vmul.f32 %v4040, %v212
    %v4045 = vadd.f32 %v4041, 1.1920929e-07
    %v4046 = vadd.f32 %v4042, 1.1920929e-07
    %v4047 = vadd.f32 %v4043, 1.1920929e-07
    %v4048 = vadd.f32 %v4044, 1.1920929e-07
    %v4049 = vrsqrt.pop %v4045
    %v4050 = vrsqrt.pop %v4046
    %v4051 = vrsqrt.pop %v4047
    %v4052 = vrsqrt.pop %v4048
    %v4053 = vmul.f32 %v4020, %v4049
    %v4054 = vmul.f32 %v4021, %v4050
    %v4055 = vmul.f32 %v4022, %v4051
    %v4056 = vmul.f32 %v4023, %v4052
    %v4058 = vlaneseq
    %v4059 = vshrl.u32 %v4058, 7
    %v4060 = vsub.s32 0, %v4059
    %v4061 = vrot.slane %v4024, %v4060
    %v4063 = vmul.f32 %v4053, %v4061
    %v4064 = vmul.f32 %v4054, %v4061
    %v4065 = vmul.f32 %v4055, %v4061
    %v4066 = vmul.f32 %v4056, %v4061
    %4067 = vst.msk [vmem:[#allocation2] sm:$0xff] %vm199, %v4063
    %4068 = vst.msk [vmem:[#allocation2 + $0x8] sm:$0xff] %vm199, %v4064
    %4069 = vst.msk [vmem:[#allocation2 + $0x10] sm:$0xff] %vm199, %v4065
    %4070 = vst.msk [vmem:[#allocation2 + $0x18] sm:$0xff] %vm199, %v4066
    // Predicated region
    $region62: #{vit_forward.1} parent=1 // pred_check
      _
    $region63: #{vit_forward.1} parent=1 // pred_check_branch
      %4072 = sbr.rel (0) target = $region65
    $region64: #{vit_forward.1} parent=1 // pred_region
      %s4074 = ssub.s32 512, 512
      %4075 = vsyncadd [#allocation3], %s4074
      %s4076 = sshll.u32 [#allocation2], 4
      %s4077 = int_to_ptr.vmem [resolvable:$true] %s4076
      %4082 = dma.vmem_to_hbm [thread:$0]  %s4077, 512, %s15, [#allocation3], 128, 128, 8
    $region65: #{vit_forward.1} parent=1 // pred_fallthru
      _
    // Predicated region
    $region66: #{vit_forward.1} parent=1 // pred_check
      _
    $region67: #{vit_forward.1} parent=1 // pred_check_branch
      %4084 = sbr.rel (0) target = $region69
    $region68: #{vit_forward.1} parent=1 // pred_region
      %4085 = dma.done [#allocation3], 512
    $region69: #{vit_forward.1} parent=1 // pred_fallthru
      _
    %4086 = vsyncpa [#allocation3], 1

</llo_original>
